<compile_context>
chip_gen: v6e
topology: v6e:2x2x1
jax: 0.10.0
libtpu: 0.0.40
codegen_flags: <defaults>
</compile_context>

<pallas_src>
import functools

import jax
import jax.numpy as jnp
from jax import lax
from jax.experimental import pallas as pl
from jax.experimental.pallas import tpu as pltpu

ALPHA = 0.25      # focal alpha; gamma == 2.0 is applied as an exact square below
LANE = 128
SUB = 8           # sublanes per full f32 vreg


def _smooth_l1(diff):
    d = jnp.abs(diff)
    return jnp.where(d <= 1.0 / 9.0, 0.5 * 9.0 * d * d, d - 0.5 / 9.0)


def _total(ref):  # (S, LANE) scratch -> (1, 1)
    return jnp.sum(jnp.sum(ref[...], axis=1, keepdims=True), axis=0, keepdims=True)


def _union_loss_kernel(ann_ref, anchor_ref, act_ref, sub_ref, obj_ref, out_ref,
                       acc_cls, acc_pos, acc_cnt, acc_sub, acc_obj, acc_diff,
                       *, N, K, C):
    j = pl.program_id(0)          # batch element ("parallel")
    t = pl.program_id(1)          # A-tile (reduction axis, last in grid, "arbitrary")
    f32 = jnp.float32

    # ---- anchor-derived quantities: computed once per tile, reused by all three losses ----
    a_y1 = anchor_ref[0]          # (S, LANE)
    a_x1 = anchor_ref[1]
    a_y2 = anchor_ref[2]
    a_x2 = anchor_ref[3]
    anchor_w = a_x2 - a_x1
    anchor_h = a_y2 - a_y1
    anchor_cx = a_x1 + 0.5 * anchor_w
    anchor_cy = a_y1 + 0.5 * anchor_h
    anchor_area = anchor_w * anchor_h
    inv_aw = 1.0 / anchor_w
    inv_ah = 1.0 / anchor_h
    log_aw = jnp.log(anchor_w)
    log_ah = jnp.log(anchor_h)

    zero = jnp.zeros_like(anchor_w)

    # ---- unrolled pass over the N annotations (scalars read from SMEM, broadcast to lanes) ----
    # Running first-occurrence argmax of the union score + per-class foreground accumulation.
    base = j * (N * K)
    best = zero - 1.0             # running max of the union score (scores are >= 0)
    any_u = zero                  # running max of Union_IoU (positive-anchor indicator)
    sel = [zero] * 8              # argmax-selected [sx1, sy1, sx2, sy2, ox1, oy1, ox2, oy2]
    sel_lab = [zero] * C          # argmax-selected action labels
    fore = [zero] * C             # sum_n Union_IoU_n * label_n   (clipped to [0,1] later)

    for n in range(N):
        b = base + n * K
        sx1 = ann_ref[b + 0]; sy1 = ann_ref[b + 1]; sx2 = ann_ref[b + 2]; sy2 = ann_ref[b + 3]
        ox1 = ann_ref[b + 4]; oy1 = ann_ref[b + 5]; ox2 = ann_ref[b + 6]; oy2 = ann_ref[b + 7]
        ux1 = ann_ref[b + 8]; uy1 = ann_ref[b + 9]; ux2 = ann_ref[b + 10]; uy2 = ann_ref[b + 11]
        valid = jnp.where(sx1 >= 0.0, 1.0, 0.0)     # "bbox_annotation[:, 0] >= 0" filter (scalar)

        # IoU(anchor, union box)
        iw = jnp.maximum(jnp.minimum(a_x2, ux2) - jnp.maximum(a_x1, ux1), 0.0)
        ih = jnp.maximum(jnp.minimum(a_y2, uy2) - jnp.maximum(a_y1, uy1), 0.0)
        inter = iw * ih
        area_u = (ux2 - ux1) * (uy2 - uy1)
        iou = inter / jnp.maximum(anchor_area + area_u - inter, 1e-8)

        # IoA(anchor, box).  torch's `IoA[isnan(IoA)] = 1` is dead code there as well
        # (the denominator is clamped to >= 1e-8 before the division), so it is omitted.
        def ioa(bx1, by1, bx2, by2):
            iw_ = jnp.maximum(jnp.minimum(a_x2, bx2) - jnp.maximum(a_x1, bx1), 0.0)
            ih_ = jnp.maximum(jnp.minimum(a_y2, by2) - jnp.maximum(a_y1, by1), 0.0)
            return iw_ * ih_ / jnp.maximum((bx2 - bx1) * (by2 - by1), 1e-8)

        ioa_s = ioa(sx1, sy1, sx2, sy2)
        ioa_o = ioa(ox1, oy1, ox2, oy2)

        u = jnp.where((iou > 0.25) & (ioa_s > 0.25) & (ioa_o > 0.25), valid, 0.0)
        score = 0.5 * (iou + jnp.sqrt(ioa_s * ioa_o)) * u

        better = score > best     # strict '>' keeps the first occurrence (torch argmax)
        best = jnp.where(better, score, best)
        any_u = jnp.maximum(any_u, u)
        box_vals = (sx1, sy1, sx2, sy2, ox1, oy1, ox2, oy2)
        sel = [jnp.where(better, v, s) for v, s in zip(box_vals, sel)]
        for c in range(C):
            lab = ann_ref[b + 13 + c]
            sel_lab[c] = jnp.where(better, lab, sel_lab[c])
            fore[c] = fore[c] + u * lab

    positive = any_u > 0.0        # (S, LANE)
    positive_reg = best >= 0.1    # (S, LANE)

    # ---- focal classification loss (single log per element) ----
    cls_sum = zero
    for c in range(C):
        t_c = 2.0 * sel_lab[c] - jnp.clip(fore[c], 0.0, 1.0)      # in {1, 0, -1}
        p = jnp.clip(act_ref[0, c], 0.0001, 1.0 - 0.0001)
        is_one = t_c == 1.0
        q = jnp.where(is_one, p, 1.0 - p)
        alpha_f = jnp.where(is_one, ALPHA, 1.0 - ALPHA)
        loss_c = alpha_f * (1.0 - q) * (1.0 - q) * (-jnp.log(q))   # focal_weight * bce
        cls_sum = cls_sum + jnp.where(t_c != -1.0, loss_c, 0.0)
    cls_sum = jnp.where(positive, cls_sum, 0.0)   # only positive anchors contribute

    # ---- regression losses (shared sub-expressions hoisted across the three losses) ----
    sx1_a, sy1_a, sx2_a, sy2_a, ox1_a, oy1_a, ox2_a, oy2_a = sel
    gws = sx2_a - sx1_a
    ghs = sy2_a - sy1_a
    gwo = ox2_a - ox1_a
    gho = oy2_a - oy1_a
    scx = sx1_a + 0.5 * gws       # centers use the un-clamped widths (as in torch)
    scy = sy1_a + 0.5 * ghs
    ocx = ox1_a + 0.5 * gwo
    ocy = oy1_a + 0.5 * gho
    log_gws = jnp.log(jnp.maximum(gws, 1.0))
    log_ghs = jnp.log(jnp.maximum(ghs, 1.0))
    log_gwo = jnp.log(jnp.maximum(gwo, 1.0))
    log_gho = jnp.log(jnp.maximum(gho, 1.0))

    s_dy = sub_ref[0, 0]; s_dx = sub_ref[0, 1]; s_dh = sub_ref[0, 2]; s_dw = sub_ref[0, 3]
    o_dy = obj_ref[0, 0]; o_dx = obj_ref[0, 1]; o_dh = obj_ref[0, 2]; o_dw = obj_ref[0, 3]

    sub_pa = (_smooth_l1((scy - anchor_cy) * inv_ah - s_dy) +
              _smooth_l1((scx - anchor_cx) * inv_aw - s_dx) +
              _smooth_l1((log_ghs - log_ah) - s_dh) +
              _smooth_l1((log_gws - log_aw) - s_dw))
    obj_pa = (_smooth_l1((ocy - anchor_cy) * inv_ah - o_dy) +
              _smooth_l1((ocx - anchor_cx) * inv_aw - o_dx) +
              _smooth_l1((log_gho - log_ah) - o_dh) +
              _smooth_l1((log_gwo - log_aw) - o_dw))
    dif_pa = (_smooth_l1((ocy - scy) * inv_ah - (o_dy - s_dy)) +
              _smooth_l1((ocx - scx) * inv_aw - (o_dx - s_dx)) +
              _smooth_l1((log_gho - log_ghs) - (o_dh - s_dh)) +
              _smooth_l1((log_gwo - log_gws) - (o_dw - s_dw)))

    # ---- accumulate per-anchor partial sums across A-tiles (zero at tile 0) ----
    @pl.when(t == 0)
    def _init():
        acc_cls[...] = jnp.zeros_like(acc_cls)
        acc_pos[...] = jnp.zeros_like(acc_pos)
        acc_cnt[...] = jnp.zeros_like(acc_cnt)
        acc_sub[...] = jnp.zeros_like(acc_sub)
        acc_obj[...] = jnp.zeros_like(acc_obj)
        acc_diff[...] = jnp.zeros_like(acc_diff)

    acc_cls[...] = acc_cls[...] + cls_sum
    acc_pos[...] = acc_pos[...] + positive.astype(f32)
    acc_cnt[...] = acc_cnt[...] + positive_reg.astype(f32)
    acc_sub[...] = acc_sub[...] + jnp.where(positive_reg, sub_pa, 0.0)
    acc_obj[...] = acc_obj[...] + jnp.where(positive_reg, obj_pa, 0.0)
    acc_diff[...] = acc_diff[...] + jnp.where(positive_reg, dif_pa, 0.0)

    # ---- finalize this batch element at the last A-tile ----
    @pl.when(t == pl.num_programs(1) - 1)
    def _finalize():
        num_pos = _total(acc_pos)
        cnt = _total(acc_cnt)
        act_loss = _total(acc_cls) / jnp.maximum(num_pos, 1.0)
        has_reg = cnt > 0.0
        denom = 4.0 * jnp.maximum(cnt, 1.0)
        sub_loss = jnp.where(has_reg, _total(acc_sub) / denom, 0.0)
        obj_loss = jnp.where(has_reg, _total(acc_obj) / denom, 0.0)
        dif_loss = jnp.where(has_reg, _total(acc_diff) / denom, 0.0)
        cols = lax.broadcasted_iota(jnp.int32, (1, 4), 1)
        vals = jnp.where(cols == 0, act_loss,
                jnp.where(cols == 1, sub_loss,
                 jnp.where(cols == 2, obj_loss, dif_loss)))
        out_ref[0] = vals


def union_loss_forward(act_classifications, sub_regressions, obj_regressions,
                       anchors, union_annotations):
    f32 = jnp.float32
    B, A, C = act_classifications.shape
    N, K = union_annotations.shape[1], union_annotations.shape[2]

    # --- choose the anchor tile: lane-dense (and sublane-dense once A > 1024) ---
    if A <= SUB * LANE:
        A_pad = ((A + LANE - 1) // LANE) * LANE      # single A-tile
        TA = A_pad
    else:
        # TODO(synk): tile size is generation-dependent (v7x has half of v6e's VMEM);
        #             1024 anchors/tile is conservative and fits v5e/v6e/v7x defaults.
        TA = SUB * LANE
        A_pad = ((A + TA - 1) // TA) * TA
    S = TA // LANE
    T = A_pad // TA
    S_total = A_pad // LANE
    pad = A_pad - A

    # --- wrapper-side layout plumbing: anchor axis A -> (sublane, lane) = (S_total, 128) ---
    anc = anchors[0].astype(f32)                     # (A, 4), [y1, x1, y2, x2]
    if pad:
        # pad with far-away degenerate anchors: they can never become positive
        anc = jnp.concatenate([anc, jnp.full((pad, 4), 1e8, f32)], axis=0)
    anc4 = anc.T.reshape(4, S_total, LANE)

    def lane_major(x, feat):                         # (B, A, feat) -> (B, feat, S_total, LANE)
        x = x.astype(f32)
        if pad:
            x = jnp.concatenate([x, jnp.zeros((B, pad, feat), f32)], axis=1)
        return jnp.swapaxes(x, 1, 2).reshape(B, feat, S_total, LANE)

    act4 = lane_major(act_classifications, C)
    sub4 = lane_major(sub_regressions, 4)
    obj4 = lane_major(obj_regressions, 4)
    ann_flat = union_annotations.astype(f32).reshape(B * N * K)   # scalar table -> SMEM

    kernel = functools.partial(_union_loss_kernel, N=N, K=K, C=C)

    out = pl.pallas_call(
        kernel,
        out_shape=jax.ShapeDtypeStruct((B, 1, 4), f32),
        grid=(B, T),
        in_specs=[
            pl.BlockSpec(memory_space=pltpu.MemorySpace.SMEM),           # annotations (flat)
            pl.BlockSpec((4, S, LANE), lambda j, t: (0, t, 0)),          # anchors (shared)
            pl.BlockSpec((1, C, S, LANE), lambda j, t: (j, 0, t, 0)),    # act classifications
            pl.BlockSpec((1, 4, S, LANE), lambda j, t: (j, 0, t, 0)),    # sub regressions
            pl.BlockSpec((1, 4, S, LANE), lambda j, t: (j, 0, t, 0)),    # obj regressions
        ],
        out_specs=pl.BlockSpec((1, 1, 4), lambda j, t: (j, 0, 0)),
        scratch_shapes=[pltpu.VMEM((S, LANE), f32) for _ in range(6)],
        compiler_params=pltpu.CompilerParams(
            dimension_semantics=("parallel", "arbitrary")),
    )(ann_flat, anc4, act4, sub4, obj4)

    per = out[:, 0, :]                               # (B, 4)
    return (jnp.mean(per[:, 0], keepdims=True),
            jnp.mean(per[:, 1], keepdims=True),
            jnp.mean(per[:, 2], keepdims=True),
            jnp.mean(per[:, 3], keepdims=True))


if __name__ == "__main__":
    key = jax.random.PRNGKey(0)
    B, A, C, N = 2, 128, 8, 8
    K = 13 + C
    ks = jax.random.split(key, 10)

    # Anchors [y1, x1, y2, x2]
    yx = jax.random.uniform(ks[0], (A, 2), minval=0.0, maxval=48.0)
    hw = jax.random.uniform(ks[1], (A, 2), minval=8.0, maxval=16.0)
    anchor = jnp.concatenate([yx, yx + hw], axis=1).astype(jnp.float32)
    anchors = anchor[None]                                   # (1, A, 4)

    act_classifications = jax.random.uniform(ks[2], (B, A, C), minval=0.05, maxval=0.95)
    sub_regressions = 0.1 * jax.random.normal(ks[3], (B, A, 4))
    obj_regressions = 0.1 * jax.random.normal(ks[4], (B, A, 4))

    # Random annotations; boxes in [x1, y1, x2, y2]
    sxy = jax.random.uniform(ks[5], (B, N, 2), minval=0.0, maxval=40.0)
    swh = jax.random.uniform(ks[6], (B, N, 2), minval=6.0, maxval=20.0)
    sub_boxes = jnp.concatenate([sxy, sxy + swh], axis=-1)
    oxy = jax.random.uniform(ks[7], (B, N, 2), minval=0.0, maxval=40.0)
    owh = jax.random.uniform(ks[8], (B, N, 2), minval=6.0, maxval=20.0)
    obj_boxes = jnp.concatenate([oxy, oxy + owh], axis=-1)
    union_boxes = jnp.concatenate([jnp.minimum(sub_boxes[..., :2], obj_boxes[..., :2]),
                                   jnp.maximum(sub_boxes[..., 2:], obj_boxes[..., 2:])], axis=-1)
    cls_col = jnp.ones((B, N, 1), jnp.float32)
    labels = (jax.random.uniform(ks[9], (B, N, C)) > 0.7).astype(jnp.float32)
    union_annotations = jnp.concatenate(
        [sub_boxes, obj_boxes, union_boxes, cls_col, labels], axis=-1)

    # Craft one annotation per image that exactly matches an anchor (guaranteed positives),
    # and mark the last annotation of each image as invalid (col 0 < 0).
    for b in range(B):
        ab = anchor[5 + 7 * b]
        ay1, ax1, ay2, ax2 = ab[0], ab[1], ab[2], ab[3]
        xm = 0.5 * (ax1 + ax2)
        sub_b = jnp.stack([ax1, ay1, xm, ay2])
        obj_b = jnp.stack([xm, ay1, ax2, ay2])
        uni_b = jnp.stack([ax1, ay1, ax2, ay2])
        lab_b = jnp.zeros((C,), jnp.float32).at[(b + 1) % C].set(1.0)
        row = jnp.concatenate([sub_b, obj_b, uni_b, jnp.array([1.0], jnp.float32), lab_b])
        union_annotations = union_annotations.at[b, 0].set(row)
        union_annotations = union_annotations.at[b, N - 1, 0].set(-1.0)

    outs = union_loss_forward(act_classifications, sub_regressions, obj_regressions,
                              anchors, union_annotations)
    outs = jax.block_until_ready(outs)
    print("KERNEL_OK")
</pallas_src>

<mosaic_0001>
module attributes {stable_mosaic.version = 11 : i64} {
  func.func @_union_loss_kernel(%arg0: i32, %arg1: i32, %arg2: memref<336xf32, #tpu.memory_space<smem>>, %arg3: memref<4x1x128xf32, #tpu.memory_space<vmem>>, %arg4: memref<1x8x1x128xf32, #tpu.memory_space<vmem>>, %arg5: memref<1x4x1x128xf32, #tpu.memory_space<vmem>>, %arg6: memref<1x4x1x128xf32, #tpu.memory_space<vmem>>, %arg7: memref<1x1x4xf32, #tpu.memory_space<vmem>>, %arg8: memref<1x128xf32, #tpu.memory_space<vmem>>, %arg9: memref<1x128xf32, #tpu.memory_space<vmem>>, %arg10: memref<1x128xf32, #tpu.memory_space<vmem>>, %arg11: memref<1x128xf32, #tpu.memory_space<vmem>>, %arg12: memref<1x128xf32, #tpu.memory_space<vmem>>, %arg13: memref<1x128xf32, #tpu.memory_space<vmem>>) attributes {dimension_semantics = [#tpu.dimension_semantics<parallel>, #tpu.dimension_semantics<arbitrary>], iteration_bounds = array<i64: 2, 1>, scalar_prefetch = 0 : i64, scratch_operands = 6 : i64, tpu.core_type = #tpu.core_type<tc>, window_params = [{transform_indices = @transform_0, window_bounds = array<i64: 336>}, {transform_indices = @transform_1, window_bounds = array<i64: 4, 1, 128>}, {transform_indices = @transform_2, window_bounds = array<i64: 1, 8, 1, 128>}, {transform_indices = @transform_3, window_bounds = array<i64: 1, 4, 1, 128>}, {transform_indices = @transform_4, window_bounds = array<i64: 1, 4, 1, 128>}, {transform_indices = @transform_5, window_bounds = array<i64: 1, 1, 4>}]} {
    %c0 = arith.constant 0 : index
    %c0_0 = arith.constant 0 : index
    %c0_1 = arith.constant 0 : index
    %0 = vector.load %arg3[%c0, %c0_0, %c0_1] : memref<4x1x128xf32, #tpu.memory_space<vmem>>, vector<1x1x128xf32>
    %1 = vector.shape_cast %0 : vector<1x1x128xf32> to vector<1x128xf32>
    %c1 = arith.constant 1 : index
    %c0_2 = arith.constant 0 : index
    %c0_3 = arith.constant 0 : index
    %2 = vector.load %arg3[%c1, %c0_2, %c0_3] : memref<4x1x128xf32, #tpu.memory_space<vmem>>, vector<1x1x128xf32>
    %3 = vector.shape_cast %2 : vector<1x1x128xf32> to vector<1x128xf32>
    %c2 = arith.constant 2 : index
    %c0_4 = arith.constant 0 : index
    %c0_5 = arith.constant 0 : index
    %4 = vector.load %arg3[%c2, %c0_4, %c0_5] : memref<4x1x128xf32, #tpu.memory_space<vmem>>, vector<1x1x128xf32>
    %5 = vector.shape_cast %4 : vector<1x1x128xf32> to vector<1x128xf32>
    %c3 = arith.constant 3 : index
    %c0_6 = arith.constant 0 : index
    %c0_7 = arith.constant 0 : index
    %6 = vector.load %arg3[%c3, %c0_6, %c0_7] : memref<4x1x128xf32, #tpu.memory_space<vmem>>, vector<1x1x128xf32>
    %7 = vector.shape_cast %6 : vector<1x1x128xf32> to vector<1x128xf32>
    %8 = arith.subf %7, %3 : vector<1x128xf32>
    %9 = arith.subf %5, %1 : vector<1x128xf32>
    %cst = arith.constant 5.000000e-01 : f32
    %10 = vector.broadcast %cst : f32 to vector<1x128xf32>
    %11 = arith.mulf %10, %8 : vector<1x128xf32>
    %12 = arith.addf %3, %11 : vector<1x128xf32>
    %cst_8 = arith.constant 5.000000e-01 : f32
    %13 = vector.broadcast %cst_8 : f32 to vector<1x128xf32>
    %14 = arith.mulf %13, %9 : vector<1x128xf32>
    %15 = arith.addf %1, %14 : vector<1x128xf32>
    %16 = arith.mulf %8, %9 : vector<1x128xf32>
    %cst_9 = arith.constant 1.000000e+00 : f32
    %17 = vector.broadcast %cst_9 : f32 to vector<1x128xf32>
    %18 = arith.divf %17, %8 : vector<1x128xf32>
    %cst_10 = arith.constant 1.000000e+00 : f32
    %19 = vector.broadcast %cst_10 : f32 to vector<1x128xf32>
    %20 = arith.divf %19, %9 : vector<1x128xf32>
    %21 = math.log %8 : vector<1x128xf32>
    %22 = math.log %9 : vector<1x128xf32>
    %cst_11 = arith.constant 0.000000e+00 : f32
    %23 = vector.broadcast %cst_11 : f32 to vector<1x128xf32>
    %c168_i32 = arith.constant 168 : i32
    %24 = arith.muli %arg0, %c168_i32 : i32
    %cst_12 = arith.constant 1.000000e+00 : f32
    %25 = vector.broadcast %cst_12 : f32 to vector<1x128xf32>
    %26 = arith.subf %23, %25 : vector<1x128xf32>
    %c0_i32 = arith.constant 0 : i32
    %27 = arith.addi %24, %c0_i32 : i32
    %c0_i32_13 = arith.constant 0 : i32
    %28 = arith.addi %27, %c0_i32_13 : i32
    %29 = arith.index_cast %28 : i32 to index
    %30 = memref.load %arg2[%29] : memref<336xf32, #tpu.memory_space<smem>>
    %c1_i32 = arith.constant 1 : i32
    %31 = arith.addi %27, %c1_i32 : i32
    %32 = arith.index_cast %31 : i32 to index
    %33 = memref.load %arg2[%32] : memref<336xf32, #tpu.memory_space<smem>>
    %c2_i32 = arith.constant 2 : i32
    %34 = arith.addi %27, %c2_i32 : i32
    %35 = arith.index_cast %34 : i32 to index
    %36 = memref.load %arg2[%35] : memref<336xf32, #tpu.memory_space<smem>>
    %c3_i32 = arith.constant 3 : i32
    %37 = arith.addi %27, %c3_i32 : i32
    %38 = arith.index_cast %37 : i32 to index
    %39 = memref.load %arg2[%38] : memref<336xf32, #tpu.memory_space<smem>>
    %c4_i32 = arith.constant 4 : i32
    %40 = arith.addi %27, %c4_i32 : i32
    %41 = arith.index_cast %40 : i32 to index
    %42 = memref.load %arg2[%41] : memref<336xf32, #tpu.memory_space<smem>>
    %c5_i32 = arith.constant 5 : i32
    %43 = arith.addi %27, %c5_i32 : i32
    %44 = arith.index_cast %43 : i32 to index
    %45 = memref.load %arg2[%44] : memref<336xf32, #tpu.memory_space<smem>>
    %c6_i32 = arith.constant 6 : i32
    %46 = arith.addi %27, %c6_i32 : i32
    %47 = arith.index_cast %46 : i32 to index
    %48 = memref.load %arg2[%47] : memref<336xf32, #tpu.memory_space<smem>>
    %c7_i32 = arith.constant 7 : i32
    %49 = arith.addi %27, %c7_i32 : i32
    %50 = arith.index_cast %49 : i32 to index
    %51 = memref.load %arg2[%50] : memref<336xf32, #tpu.memory_space<smem>>
    %c8_i32 = arith.constant 8 : i32
    %52 = arith.addi %27, %c8_i32 : i32
    %53 = arith.index_cast %52 : i32 to index
    %54 = memref.load %arg2[%53] : memref<336xf32, #tpu.memory_space<smem>>
    %c9_i32 = arith.constant 9 : i32
    %55 = arith.addi %27, %c9_i32 : i32
    %56 = arith.index_cast %55 : i32 to index
    %57 = memref.load %arg2[%56] : memref<336xf32, #tpu.memory_space<smem>>
    %c10_i32 = arith.constant 10 : i32
    %58 = arith.addi %27, %c10_i32 : i32
    %59 = arith.index_cast %58 : i32 to index
    %60 = memref.load %arg2[%59] : memref<336xf32, #tpu.memory_space<smem>>
    %c11_i32 = arith.constant 11 : i32
    %61 = arith.addi %27, %c11_i32 : i32
    %62 = arith.index_cast %61 : i32 to index
    %63 = memref.load %arg2[%62] : memref<336xf32, #tpu.memory_space<smem>>
    %cst_14 = arith.constant 0.000000e+00 : f32
    %64 = arith.cmpf oge, %30, %cst_14 : f32
    %cst_15 = arith.constant 1.000000e+00 : f32
    %cst_16 = arith.constant 0.000000e+00 : f32
    %65 = arith.select %64, %cst_15, %cst_16 : f32
    %66 = vector.broadcast %60 : f32 to vector<1x128xf32>
    %67 = arith.minimumf %7, %66 : vector<1x128xf32>
    %68 = vector.broadcast %54 : f32 to vector<1x128xf32>
    %69 = arith.maximumf %3, %68 : vector<1x128xf32>
    %70 = arith.subf %67, %69 : vector<1x128xf32>
    %cst_17 = arith.constant 0.000000e+00 : f32
    %71 = vector.broadcast %cst_17 : f32 to vector<1x128xf32>
    %72 = arith.maximumf %70, %71 : vector<1x128xf32>
    %73 = vector.broadcast %63 : f32 to vector<1x128xf32>
    %74 = arith.minimumf %5, %73 : vector<1x128xf32>
    %75 = vector.broadcast %57 : f32 to vector<1x128xf32>
    %76 = arith.maximumf %1, %75 : vector<1x128xf32>
    %77 = arith.subf %74, %76 : vector<1x128xf32>
    %cst_18 = arith.constant 0.000000e+00 : f32
    %78 = vector.broadcast %cst_18 : f32 to vector<1x128xf32>
    %79 = arith.maximumf %77, %78 : vector<1x128xf32>
    %80 = arith.mulf %72, %79 : vector<1x128xf32>
    %81 = arith.subf %60, %54 : f32
    %82 = arith.subf %63, %57 : f32
    %83 = arith.mulf %81, %82 : f32
    %84 = vector.broadcast %83 : f32 to vector<1x128xf32>
    %85 = arith.addf %16, %84 : vector<1x128xf32>
    %86 = arith.subf %85, %80 : vector<1x128xf32>
    %cst_19 = arith.constant 9.99999993E-9 : f32
    %87 = vector.broadcast %cst_19 : f32 to vector<1x128xf32>
    %88 = arith.maximumf %86, %87 : vector<1x128xf32>
    %89 = arith.divf %80, %88 : vector<1x128xf32>
    %90 = vector.broadcast %36 : f32 to vector<1x128xf32>
    %91 = arith.minimumf %7, %90 : vector<1x128xf32>
    %92 = vector.broadcast %30 : f32 to vector<1x128xf32>
    %93 = arith.maximumf %3, %92 : vector<1x128xf32>
    %94 = arith.subf %91, %93 : vector<1x128xf32>
    %cst_20 = arith.constant 0.000000e+00 : f32
    %95 = vector.broadcast %cst_20 : f32 to vector<1x128xf32>
    %96 = arith.maximumf %94, %95 : vector<1x128xf32>
    %97 = vector.broadcast %39 : f32 to vector<1x128xf32>
    %98 = arith.minimumf %5, %97 : vector<1x128xf32>
    %99 = vector.broadcast %33 : f32 to vector<1x128xf32>
    %100 = arith.maximumf %1, %99 : vector<1x128xf32>
    %101 = arith.subf %98, %100 : vector<1x128xf32>
    %cst_21 = arith.constant 0.000000e+00 : f32
    %102 = vector.broadcast %cst_21 : f32 to vector<1x128xf32>
    %103 = arith.maximumf %101, %102 : vector<1x128xf32>
    %104 = arith.mulf %96, %103 : vector<1x128xf32>
    %105 = arith.subf %36, %30 : f32
    %106 = arith.subf %39, %33 : f32
    %107 = arith.mulf %105, %106 : f32
    %cst_22 = arith.constant 9.99999993E-9 : f32
    %108 = arith.maximumf %107, %cst_22 : f32
    %109 = vector.broadcast %108 : f32 to vector<1x128xf32>
    %110 = arith.divf %104, %109 : vector<1x128xf32>
    %111 = vector.broadcast %48 : f32 to vector<1x128xf32>
    %112 = arith.minimumf %7, %111 : vector<1x128xf32>
    %113 = vector.broadcast %42 : f32 to vector<1x128xf32>
    %114 = arith.maximumf %3, %113 : vector<1x128xf32>
    %115 = arith.subf %112, %114 : vector<1x128xf32>
    %cst_23 = arith.constant 0.000000e+00 : f32
    %116 = vector.broadcast %cst_23 : f32 to vector<1x128xf32>
    %117 = arith.maximumf %115, %116 : vector<1x128xf32>
    %118 = vector.broadcast %51 : f32 to vector<1x128xf32>
    %119 = arith.minimumf %5, %118 : vector<1x128xf32>
    %120 = vector.broadcast %45 : f32 to vector<1x128xf32>
    %121 = arith.maximumf %1, %120 : vector<1x128xf32>
    %122 = arith.subf %119, %121 : vector<1x128xf32>
    %cst_24 = arith.constant 0.000000e+00 : f32
    %123 = vector.broadcast %cst_24 : f32 to vector<1x128xf32>
    %124 = arith.maximumf %122, %123 : vector<1x128xf32>
    %125 = arith.mulf %117, %124 : vector<1x128xf32>
    %126 = arith.subf %48, %42 : f32
    %127 = arith.subf %51, %45 : f32
    %128 = arith.mulf %126, %127 : f32
    %cst_25 = arith.constant 9.99999993E-9 : f32
    %129 = arith.maximumf %128, %cst_25 : f32
    %130 = vector.broadcast %129 : f32 to vector<1x128xf32>
    %131 = arith.divf %125, %130 : vector<1x128xf32>
    %cst_26 = arith.constant 2.500000e-01 : f32
    %132 = vector.broadcast %cst_26 : f32 to vector<1x128xf32>
    %133 = arith.cmpf ogt, %89, %132 : vector<1x128xf32>
    %cst_27 = arith.constant 2.500000e-01 : f32
    %134 = vector.broadcast %cst_27 : f32 to vector<1x128xf32>
    %135 = arith.cmpf ogt, %110, %134 : vector<1x128xf32>
    %136 = arith.andi %133, %135 : vector<1x128xi1>
    %cst_28 = arith.constant 2.500000e-01 : f32
    %137 = vector.broadcast %cst_28 : f32 to vector<1x128xf32>
    %138 = arith.cmpf ogt, %131, %137 : vector<1x128xf32>
    %139 = arith.andi %136, %138 : vector<1x128xi1>
    %cst_29 = arith.constant 0.000000e+00 : f32
    %140 = vector.broadcast %65 : f32 to vector<1x128xf32>
    %141 = vector.broadcast %cst_29 : f32 to vector<1x128xf32>
    %142 = arith.select %139, %140, %141 : vector<1x128xi1>, vector<1x128xf32>
    %143 = arith.mulf %110, %131 : vector<1x128xf32>
    %144 = math.sqrt %143 : vector<1x128xf32>
    %145 = arith.addf %89, %144 : vector<1x128xf32>
    %cst_30 = arith.constant 5.000000e-01 : f32
    %146 = vector.broadcast %cst_30 : f32 to vector<1x128xf32>
    %147 = arith.mulf %146, %145 : vector<1x128xf32>
    %148 = arith.mulf %147, %142 : vector<1x128xf32>
    %149 = arith.cmpf ogt, %148, %26 : vector<1x128xf32>
    %150 = arith.select %149, %148, %26 : vector<1x128xi1>, vector<1x128xf32>
    %151 = arith.maximumf %23, %142 : vector<1x128xf32>
    %152 = vector.broadcast %30 : f32 to vector<1x128xf32>
    %153 = arith.select %149, %152, %23 : vector<1x128xi1>, vector<1x128xf32>
    %154 = vector.broadcast %33 : f32 to vector<1x128xf32>
    %155 = arith.select %149, %154, %23 : vector<1x128xi1>, vector<1x128xf32>
    %156 = vector.broadcast %36 : f32 to vector<1x128xf32>
    %157 = arith.select %149, %156, %23 : vector<1x128xi1>, vector<1x128xf32>
    %158 = vector.broadcast %39 : f32 to vector<1x128xf32>
    %159 = arith.select %149, %158, %23 : vector<1x128xi1>, vector<1x128xf32>
    %160 = vector.broadcast %42 : f32 to vector<1x128xf32>
    %161 = arith.select %149, %160, %23 : vector<1x128xi1>, vector<1x128xf32>
    %162 = vector.broadcast %45 : f32 to vector<1x128xf32>
    %163 = arith.select %149, %162, %23 : vector<1x128xi1>, vector<1x128xf32>
    %164 = vector.broadcast %48 : f32 to vector<1x128xf32>
    %165 = arith.select %149, %164, %23 : vector<1x128xi1>, vector<1x128xf32>
    %166 = vector.broadcast %51 : f32 to vector<1x128xf32>
    %167 = arith.select %149, %166, %23 : vector<1x128xi1>, vector<1x128xf32>
    %c13_i32 = arith.constant 13 : i32
    %168 = arith.addi %27, %c13_i32 : i32
    %c0_i32_31 = arith.constant 0 : i32
    %169 = arith.addi %168, %c0_i32_31 : i32
    %170 = arith.index_cast %169 : i32 to index
    %171 = memref.load %arg2[%170] : memref<336xf32, #tpu.memory_space<smem>>
    %172 = vector.broadcast %171 : f32 to vector<1x128xf32>
    %173 = arith.select %149, %172, %23 : vector<1x128xi1>, vector<1x128xf32>
    %174 = vector.broadcast %171 : f32 to vector<1x128xf32>
    %175 = arith.mulf %142, %174 : vector<1x128xf32>
    %176 = arith.addf %23, %175 : vector<1x128xf32>
    %c13_i32_32 = arith.constant 13 : i32
    %177 = arith.addi %27, %c13_i32_32 : i32
    %c1_i32_33 = arith.constant 1 : i32
    %178 = arith.addi %177, %c1_i32_33 : i32
    %179 = arith.index_cast %178 : i32 to index
    %180 = memref.load %arg2[%179] : memref<336xf32, #tpu.memory_space<smem>>
    %181 = vector.broadcast %180 : f32 to vector<1x128xf32>
    %182 = arith.select %149, %181, %23 : vector<1x128xi1>, vector<1x128xf32>
    %183 = vector.broadcast %180 : f32 to vector<1x128xf32>
    %184 = arith.mulf %142, %183 : vector<1x128xf32>
    %185 = arith.addf %23, %184 : vector<1x128xf32>
    %c13_i32_34 = arith.constant 13 : i32
    %186 = arith.addi %27, %c13_i32_34 : i32
    %c2_i32_35 = arith.constant 2 : i32
    %187 = arith.addi %186, %c2_i32_35 : i32
    %188 = arith.index_cast %187 : i32 to index
    %189 = memref.load %arg2[%188] : memref<336xf32, #tpu.memory_space<smem>>
    %190 = vector.broadcast %189 : f32 to vector<1x128xf32>
    %191 = arith.select %149, %190, %23 : vector<1x128xi1>, vector<1x128xf32>
    %192 = vector.broadcast %189 : f32 to vector<1x128xf32>
    %193 = arith.mulf %142, %192 : vector<1x128xf32>
    %194 = arith.addf %23, %193 : vector<1x128xf32>
    %c13_i32_36 = arith.constant 13 : i32
    %195 = arith.addi %27, %c13_i32_36 : i32
    %c3_i32_37 = arith.constant 3 : i32
    %196 = arith.addi %195, %c3_i32_37 : i32
    %197 = arith.index_cast %196 : i32 to index
    %198 = memref.load %arg2[%197] : memref<336xf32, #tpu.memory_space<smem>>
    %199 = vector.broadcast %198 : f32 to vector<1x128xf32>
    %200 = arith.select %149, %199, %23 : vector<1x128xi1>, vector<1x128xf32>
    %201 = vector.broadcast %198 : f32 to vector<1x128xf32>
    %202 = arith.mulf %142, %201 : vector<1x128xf32>
    %203 = arith.addf %23, %202 : vector<1x128xf32>
    %c13_i32_38 = arith.constant 13 : i32
    %204 = arith.addi %27, %c13_i32_38 : i32
    %c4_i32_39 = arith.constant 4 : i32
    %205 = arith.addi %204, %c4_i32_39 : i32
    %206 = arith.index_cast %205 : i32 to index
    %207 = memref.load %arg2[%206] : memref<336xf32, #tpu.memory_space<smem>>
    %208 = vector.broadcast %207 : f32 to vector<1x128xf32>
    %209 = arith.select %149, %208, %23 : vector<1x128xi1>, vector<1x128xf32>
    %210 = vector.broadcast %207 : f32 to vector<1x128xf32>
    %211 = arith.mulf %142, %210 : vector<1x128xf32>
    %212 = arith.addf %23, %211 : vector<1x128xf32>
    %c13_i32_40 = arith.constant 13 : i32
    %213 = arith.addi %27, %c13_i32_40 : i32
    %c5_i32_41 = arith.constant 5 : i32
    %214 = arith.addi %213, %c5_i32_41 : i32
    %215 = arith.index_cast %214 : i32 to index
    %216 = memref.load %arg2[%215] : memref<336xf32, #tpu.memory_space<smem>>
    %217 = vector.broadcast %216 : f32 to vector<1x128xf32>
    %218 = arith.select %149, %217, %23 : vector<1x128xi1>, vector<1x128xf32>
    %219 = vector.broadcast %216 : f32 to vector<1x128xf32>
    %220 = arith.mulf %142, %219 : vector<1x128xf32>
    %221 = arith.addf %23, %220 : vector<1x128xf32>
    %c13_i32_42 = arith.constant 13 : i32
    %222 = arith.addi %27, %c13_i32_42 : i32
    %c6_i32_43 = arith.constant 6 : i32
    %223 = arith.addi %222, %c6_i32_43 : i32
    %224 = arith.index_cast %223 : i32 to index
    %225 = memref.load %arg2[%224] : memref<336xf32, #tpu.memory_space<smem>>
    %226 = vector.broadcast %225 : f32 to vector<1x128xf32>
    %227 = arith.select %149, %226, %23 : vector<1x128xi1>, vector<1x128xf32>
    %228 = vector.broadcast %225 : f32 to vector<1x128xf32>
    %229 = arith.mulf %142, %228 : vector<1x128xf32>
    %230 = arith.addf %23, %229 : vector<1x128xf32>
    %c13_i32_44 = arith.constant 13 : i32
    %231 = arith.addi %27, %c13_i32_44 : i32
    %c7_i32_45 = arith.constant 7 : i32
    %232 = arith.addi %231, %c7_i32_45 : i32
    %233 = arith.index_cast %232 : i32 to index
    %234 = memref.load %arg2[%233] : memref<336xf32, #tpu.memory_space<smem>>
    %235 = vector.broadcast %234 : f32 to vector<1x128xf32>
    %236 = arith.select %149, %235, %23 : vector<1x128xi1>, vector<1x128xf32>
    %237 = vector.broadcast %234 : f32 to vector<1x128xf32>
    %238 = arith.mulf %142, %237 : vector<1x128xf32>
    %239 = arith.addf %23, %238 : vector<1x128xf32>
    %c21_i32 = arith.constant 21 : i32
    %240 = arith.addi %24, %c21_i32 : i32
    %c0_i32_46 = arith.constant 0 : i32
    %241 = arith.addi %240, %c0_i32_46 : i32
    %242 = arith.index_cast %241 : i32 to index
    %243 = memref.load %arg2[%242] : memref<336xf32, #tpu.memory_space<smem>>
    %c1_i32_47 = arith.constant 1 : i32
    %244 = arith.addi %240, %c1_i32_47 : i32
    %245 = arith.index_cast %244 : i32 to index
    %246 = memref.load %arg2[%245] : memref<336xf32, #tpu.memory_space<smem>>
    %c2_i32_48 = arith.constant 2 : i32
    %247 = arith.addi %240, %c2_i32_48 : i32
    %248 = arith.index_cast %247 : i32 to index
    %249 = memref.load %arg2[%248] : memref<336xf32, #tpu.memory_space<smem>>
    %c3_i32_49 = arith.constant 3 : i32
    %250 = arith.addi %240, %c3_i32_49 : i32
    %251 = arith.index_cast %250 : i32 to index
    %252 = memref.load %arg2[%251] : memref<336xf32, #tpu.memory_space<smem>>
    %c4_i32_50 = arith.constant 4 : i32
    %253 = arith.addi %240, %c4_i32_50 : i32
    %254 = arith.index_cast %253 : i32 to index
    %255 = memref.load %arg2[%254] : memref<336xf32, #tpu.memory_space<smem>>
    %c5_i32_51 = arith.constant 5 : i32
    %256 = arith.addi %240, %c5_i32_51 : i32
    %257 = arith.index_cast %256 : i32 to index
    %258 = memref.load %arg2[%257] : memref<336xf32, #tpu.memory_space<smem>>
    %c6_i32_52 = arith.constant 6 : i32
    %259 = arith.addi %240, %c6_i32_52 : i32
    %260 = arith.index_cast %259 : i32 to index
    %261 = memref.load %arg2[%260] : memref<336xf32, #tpu.memory_space<smem>>
    %c7_i32_53 = arith.constant 7 : i32
    %262 = arith.addi %240, %c7_i32_53 : i32
    %263 = arith.index_cast %262 : i32 to index
    %264 = memref.load %arg2[%263] : memref<336xf32, #tpu.memory_space<smem>>
    %c8_i32_54 = arith.constant 8 : i32
    %265 = arith.addi %240, %c8_i32_54 : i32
    %266 = arith.index_cast %265 : i32 to index
    %267 = memref.load %arg2[%266] : memref<336xf32, #tpu.memory_space<smem>>
    %c9_i32_55 = arith.constant 9 : i32
    %268 = arith.addi %240, %c9_i32_55 : i32
    %269 = arith.index_cast %268 : i32 to index
    %270 = memref.load %arg2[%269] : memref<336xf32, #tpu.memory_space<smem>>
    %c10_i32_56 = arith.constant 10 : i32
    %271 = arith.addi %240, %c10_i32_56 : i32
    %272 = arith.index_cast %271 : i32 to index
    %273 = memref.load %arg2[%272] : memref<336xf32, #tpu.memory_space<smem>>
    %c11_i32_57 = arith.constant 11 : i32
    %274 = arith.addi %240, %c11_i32_57 : i32
    %275 = arith.index_cast %274 : i32 to index
    %276 = memref.load %arg2[%275] : memref<336xf32, #tpu.memory_space<smem>>
    %cst_58 = arith.constant 0.000000e+00 : f32
    %277 = arith.cmpf oge, %243, %cst_58 : f32
    %cst_59 = arith.constant 1.000000e+00 : f32
    %cst_60 = arith.constant 0.000000e+00 : f32
    %278 = arith.select %277, %cst_59, %cst_60 : f32
    %279 = vector.broadcast %273 : f32 to vector<1x128xf32>
    %280 = arith.minimumf %7, %279 : vector<1x128xf32>
    %281 = vector.broadcast %267 : f32 to vector<1x128xf32>
    %282 = arith.maximumf %3, %281 : vector<1x128xf32>
    %283 = arith.subf %280, %282 : vector<1x128xf32>
    %cst_61 = arith.constant 0.000000e+00 : f32
    %284 = vector.broadcast %cst_61 : f32 to vector<1x128xf32>
    %285 = arith.maximumf %283, %284 : vector<1x128xf32>
    %286 = vector.broadcast %276 : f32 to vector<1x128xf32>
    %287 = arith.minimumf %5, %286 : vector<1x128xf32>
    %288 = vector.broadcast %270 : f32 to vector<1x128xf32>
    %289 = arith.maximumf %1, %288 : vector<1x128xf32>
    %290 = arith.subf %287, %289 : vector<1x128xf32>
    %cst_62 = arith.constant 0.000000e+00 : f32
    %291 = vector.broadcast %cst_62 : f32 to vector<1x128xf32>
    %292 = arith.maximumf %290, %291 : vector<1x128xf32>
    %293 = arith.mulf %285, %292 : vector<1x128xf32>
    %294 = arith.subf %273, %267 : f32
    %295 = arith.subf %276, %270 : f32
    %296 = arith.mulf %294, %295 : f32
    %297 = vector.broadcast %296 : f32 to vector<1x128xf32>
    %298 = arith.addf %16, %297 : vector<1x128xf32>
    %299 = arith.subf %298, %293 : vector<1x128xf32>
    %cst_63 = arith.constant 9.99999993E-9 : f32
    %300 = vector.broadcast %cst_63 : f32 to vector<1x128xf32>
    %301 = arith.maximumf %299, %300 : vector<1x128xf32>
    %302 = arith.divf %293, %301 : vector<1x128xf32>
    %303 = vector.broadcast %249 : f32 to vector<1x128xf32>
    %304 = arith.minimumf %7, %303 : vector<1x128xf32>
    %305 = vector.broadcast %243 : f32 to vector<1x128xf32>
    %306 = arith.maximumf %3, %305 : vector<1x128xf32>
    %307 = arith.subf %304, %306 : vector<1x128xf32>
    %cst_64 = arith.constant 0.000000e+00 : f32
    %308 = vector.broadcast %cst_64 : f32 to vector<1x128xf32>
    %309 = arith.maximumf %307, %308 : vector<1x128xf32>
    %310 = vector.broadcast %252 : f32 to vector<1x128xf32>
    %311 = arith.minimumf %5, %310 : vector<1x128xf32>
    %312 = vector.broadcast %246 : f32 to vector<1x128xf32>
    %313 = arith.maximumf %1, %312 : vector<1x128xf32>
    %314 = arith.subf %311, %313 : vector<1x128xf32>
    %cst_65 = arith.constant 0.000000e+00 : f32
    %315 = vector.broadcast %cst_65 : f32 to vector<1x128xf32>
    %316 = arith.maximumf %314, %315 : vector<1x128xf32>
    %317 = arith.mulf %309, %316 : vector<1x128xf32>
    %318 = arith.subf %249, %243 : f32
    %319 = arith.subf %252, %246 : f32
    %320 = arith.mulf %318, %319 : f32
    %cst_66 = arith.constant 9.99999993E-9 : f32
    %321 = arith.maximumf %320, %cst_66 : f32
    %322 = vector.broadcast %321 : f32 to vector<1x128xf32>
    %323 = arith.divf %317, %322 : vector<1x128xf32>
    %324 = vector.broadcast %261 : f32 to vector<1x128xf32>
    %325 = arith.minimumf %7, %324 : vector<1x128xf32>
    %326 = vector.broadcast %255 : f32 to vector<1x128xf32>
    %327 = arith.maximumf %3, %326 : vector<1x128xf32>
    %328 = arith.subf %325, %327 : vector<1x128xf32>
    %cst_67 = arith.constant 0.000000e+00 : f32
    %329 = vector.broadcast %cst_67 : f32 to vector<1x128xf32>
    %330 = arith.maximumf %328, %329 : vector<1x128xf32>
    %331 = vector.broadcast %264 : f32 to vector<1x128xf32>
    %332 = arith.minimumf %5, %331 : vector<1x128xf32>
    %333 = vector.broadcast %258 : f32 to vector<1x128xf32>
    %334 = arith.maximumf %1, %333 : vector<1x128xf32>
    %335 = arith.subf %332, %334 : vector<1x128xf32>
    %cst_68 = arith.constant 0.000000e+00 : f32
    %336 = vector.broadcast %cst_68 : f32 to vector<1x128xf32>
    %337 = arith.maximumf %335, %336 : vector<1x128xf32>
    %338 = arith.mulf %330, %337 : vector<1x128xf32>
    %339 = arith.subf %261, %255 : f32
    %340 = arith.subf %264, %258 : f32
    %341 = arith.mulf %339, %340 : f32
    %cst_69 = arith.constant 9.99999993E-9 : f32
    %342 = arith.maximumf %341, %cst_69 : f32
    %343 = vector.broadcast %342 : f32 to vector<1x128xf32>
    %344 = arith.divf %338, %343 : vector<1x128xf32>
    %cst_70 = arith.constant 2.500000e-01 : f32
    %345 = vector.broadcast %cst_70 : f32 to vector<1x128xf32>
    %346 = arith.cmpf ogt, %302, %345 : vector<1x128xf32>
    %cst_71 = arith.constant 2.500000e-01 : f32
    %347 = vector.broadcast %cst_71 : f32 to vector<1x128xf32>
    %348 = arith.cmpf ogt, %323, %347 : vector<1x128xf32>
    %349 = arith.andi %346, %348 : vector<1x128xi1>
    %cst_72 = arith.constant 2.500000e-01 : f32
    %350 = vector.broadcast %cst_72 : f32 to vector<1x128xf32>
    %351 = arith.cmpf ogt, %344, %350 : vector<1x128xf32>
    %352 = arith.andi %349, %351 : vector<1x128xi1>
    %cst_73 = arith.constant 0.000000e+00 : f32
    %353 = vector.broadcast %278 : f32 to vector<1x128xf32>
    %354 = vector.broadcast %cst_73 : f32 to vector<1x128xf32>
    %355 = arith.select %352, %353, %354 : vector<1x128xi1>, vector<1x128xf32>
    %356 = arith.mulf %323, %344 : vector<1x128xf32>
    %357 = math.sqrt %356 : vector<1x128xf32>
    %358 = arith.addf %302, %357 : vector<1x128xf32>
    %cst_74 = arith.constant 5.000000e-01 : f32
    %359 = vector.broadcast %cst_74 : f32 to vector<1x128xf32>
    %360 = arith.mulf %359, %358 : vector<1x128xf32>
    %361 = arith.mulf %360, %355 : vector<1x128xf32>
    %362 = arith.cmpf ogt, %361, %150 : vector<1x128xf32>
    %363 = arith.select %362, %361, %150 : vector<1x128xi1>, vector<1x128xf32>
    %364 = arith.maximumf %151, %355 : vector<1x128xf32>
    %365 = vector.broadcast %243 : f32 to vector<1x128xf32>
    %366 = arith.select %362, %365, %153 : vector<1x128xi1>, vector<1x128xf32>
    %367 = vector.broadcast %246 : f32 to vector<1x128xf32>
    %368 = arith.select %362, %367, %155 : vector<1x128xi1>, vector<1x128xf32>
    %369 = vector.broadcast %249 : f32 to vector<1x128xf32>
    %370 = arith.select %362, %369, %157 : vector<1x128xi1>, vector<1x128xf32>
    %371 = vector.broadcast %252 : f32 to vector<1x128xf32>
    %372 = arith.select %362, %371, %159 : vector<1x128xi1>, vector<1x128xf32>
    %373 = vector.broadcast %255 : f32 to vector<1x128xf32>
    %374 = arith.select %362, %373, %161 : vector<1x128xi1>, vector<1x128xf32>
    %375 = vector.broadcast %258 : f32 to vector<1x128xf32>
    %376 = arith.select %362, %375, %163 : vector<1x128xi1>, vector<1x128xf32>
    %377 = vector.broadcast %261 : f32 to vector<1x128xf32>
    %378 = arith.select %362, %377, %165 : vector<1x128xi1>, vector<1x128xf32>
    %379 = vector.broadcast %264 : f32 to vector<1x128xf32>
    %380 = arith.select %362, %379, %167 : vector<1x128xi1>, vector<1x128xf32>
    %c13_i32_75 = arith.constant 13 : i32
    %381 = arith.addi %240, %c13_i32_75 : i32
    %c0_i32_76 = arith.constant 0 : i32
    %382 = arith.addi %381, %c0_i32_76 : i32
    %383 = arith.index_cast %382 : i32 to index
    %384 = memref.load %arg2[%383] : memref<336xf32, #tpu.memory_space<smem>>
    %385 = vector.broadcast %384 : f32 to vector<1x128xf32>
    %386 = arith.select %362, %385, %173 : vector<1x128xi1>, vector<1x128xf32>
    %387 = vector.broadcast %384 : f32 to vector<1x128xf32>
    %388 = arith.mulf %355, %387 : vector<1x128xf32>
    %389 = arith.addf %176, %388 : vector<1x128xf32>
    %c13_i32_77 = arith.constant 13 : i32
    %390 = arith.addi %240, %c13_i32_77 : i32
    %c1_i32_78 = arith.constant 1 : i32
    %391 = arith.addi %390, %c1_i32_78 : i32
    %392 = arith.index_cast %391 : i32 to index
    %393 = memref.load %arg2[%392] : memref<336xf32, #tpu.memory_space<smem>>
    %394 = vector.broadcast %393 : f32 to vector<1x128xf32>
    %395 = arith.select %362, %394, %182 : vector<1x128xi1>, vector<1x128xf32>
    %396 = vector.broadcast %393 : f32 to vector<1x128xf32>
    %397 = arith.mulf %355, %396 : vector<1x128xf32>
    %398 = arith.addf %185, %397 : vector<1x128xf32>
    %c13_i32_79 = arith.constant 13 : i32
    %399 = arith.addi %240, %c13_i32_79 : i32
    %c2_i32_80 = arith.constant 2 : i32
    %400 = arith.addi %399, %c2_i32_80 : i32
    %401 = arith.index_cast %400 : i32 to index
    %402 = memref.load %arg2[%401] : memref<336xf32, #tpu.memory_space<smem>>
    %403 = vector.broadcast %402 : f32 to vector<1x128xf32>
    %404 = arith.select %362, %403, %191 : vector<1x128xi1>, vector<1x128xf32>
    %405 = vector.broadcast %402 : f32 to vector<1x128xf32>
    %406 = arith.mulf %355, %405 : vector<1x128xf32>
    %407 = arith.addf %194, %406 : vector<1x128xf32>
    %c13_i32_81 = arith.constant 13 : i32
    %408 = arith.addi %240, %c13_i32_81 : i32
    %c3_i32_82 = arith.constant 3 : i32
    %409 = arith.addi %408, %c3_i32_82 : i32
    %410 = arith.index_cast %409 : i32 to index
    %411 = memref.load %arg2[%410] : memref<336xf32, #tpu.memory_space<smem>>
    %412 = vector.broadcast %411 : f32 to vector<1x128xf32>
    %413 = arith.select %362, %412, %200 : vector<1x128xi1>, vector<1x128xf32>
    %414 = vector.broadcast %411 : f32 to vector<1x128xf32>
    %415 = arith.mulf %355, %414 : vector<1x128xf32>
    %416 = arith.addf %203, %415 : vector<1x128xf32>
    %c13_i32_83 = arith.constant 13 : i32
    %417 = arith.addi %240, %c13_i32_83 : i32
    %c4_i32_84 = arith.constant 4 : i32
    %418 = arith.addi %417, %c4_i32_84 : i32
    %419 = arith.index_cast %418 : i32 to index
    %420 = memref.load %arg2[%419] : memref<336xf32, #tpu.memory_space<smem>>
    %421 = vector.broadcast %420 : f32 to vector<1x128xf32>
    %422 = arith.select %362, %421, %209 : vector<1x128xi1>, vector<1x128xf32>
    %423 = vector.broadcast %420 : f32 to vector<1x128xf32>
    %424 = arith.mulf %355, %423 : vector<1x128xf32>
    %425 = arith.addf %212, %424 : vector<1x128xf32>
    %c13_i32_85 = arith.constant 13 : i32
    %426 = arith.addi %240, %c13_i32_85 : i32
    %c5_i32_86 = arith.constant 5 : i32
    %427 = arith.addi %426, %c5_i32_86 : i32
    %428 = arith.index_cast %427 : i32 to index
    %429 = memref.load %arg2[%428] : memref<336xf32, #tpu.memory_space<smem>>
    %430 = vector.broadcast %429 : f32 to vector<1x128xf32>
    %431 = arith.select %362, %430, %218 : vector<1x128xi1>, vector<1x128xf32>
    %432 = vector.broadcast %429 : f32 to vector<1x128xf32>
    %433 = arith.mulf %355, %432 : vector<1x128xf32>
    %434 = arith.addf %221, %433 : vector<1x128xf32>
    %c13_i32_87 = arith.constant 13 : i32
    %435 = arith.addi %240, %c13_i32_87 : i32
    %c6_i32_88 = arith.constant 6 : i32
    %436 = arith.addi %435, %c6_i32_88 : i32
    %437 = arith.index_cast %436 : i32 to index
    %438 = memref.load %arg2[%437] : memref<336xf32, #tpu.memory_space<smem>>
    %439 = vector.broadcast %438 : f32 to vector<1x128xf32>
    %440 = arith.select %362, %439, %227 : vector<1x128xi1>, vector<1x128xf32>
    %441 = vector.broadcast %438 : f32 to vector<1x128xf32>
    %442 = arith.mulf %355, %441 : vector<1x128xf32>
    %443 = arith.addf %230, %442 : vector<1x128xf32>
    %c13_i32_89 = arith.constant 13 : i32
    %444 = arith.addi %240, %c13_i32_89 : i32
    %c7_i32_90 = arith.constant 7 : i32
    %445 = arith.addi %444, %c7_i32_90 : i32
    %446 = arith.index_cast %445 : i32 to index
    %447 = memref.load %arg2[%446] : memref<336xf32, #tpu.memory_space<smem>>
    %448 = vector.broadcast %447 : f32 to vector<1x128xf32>
    %449 = arith.select %362, %448, %236 : vector<1x128xi1>, vector<1x128xf32>
    %450 = vector.broadcast %447 : f32 to vector<1x128xf32>
    %451 = arith.mulf %355, %450 : vector<1x128xf32>
    %452 = arith.addf %239, %451 : vector<1x128xf32>
    %c42_i32 = arith.constant 42 : i32
    %453 = arith.addi %24, %c42_i32 : i32
    %c0_i32_91 = arith.constant 0 : i32
    %454 = arith.addi %453, %c0_i32_91 : i32
    %455 = arith.index_cast %454 : i32 to index
    %456 = memref.load %arg2[%455] : memref<336xf32, #tpu.memory_space<smem>>
    %c1_i32_92 = arith.constant 1 : i32
    %457 = arith.addi %453, %c1_i32_92 : i32
    %458 = arith.index_cast %457 : i32 to index
    %459 = memref.load %arg2[%458] : memref<336xf32, #tpu.memory_space<smem>>
    %c2_i32_93 = arith.constant 2 : i32
    %460 = arith.addi %453, %c2_i32_93 : i32
    %461 = arith.index_cast %460 : i32 to index
    %462 = memref.load %arg2[%461] : memref<336xf32, #tpu.memory_space<smem>>
    %c3_i32_94 = arith.constant 3 : i32
    %463 = arith.addi %453, %c3_i32_94 : i32
    %464 = arith.index_cast %463 : i32 to index
    %465 = memref.load %arg2[%464] : memref<336xf32, #tpu.memory_space<smem>>
    %c4_i32_95 = arith.constant 4 : i32
    %466 = arith.addi %453, %c4_i32_95 : i32
    %467 = arith.index_cast %466 : i32 to index
    %468 = memref.load %arg2[%467] : memref<336xf32, #tpu.memory_space<smem>>
    %c5_i32_96 = arith.constant 5 : i32
    %469 = arith.addi %453, %c5_i32_96 : i32
    %470 = arith.index_cast %469 : i32 to index
    %471 = memref.load %arg2[%470] : memref<336xf32, #tpu.memory_space<smem>>
    %c6_i32_97 = arith.constant 6 : i32
    %472 = arith.addi %453, %c6_i32_97 : i32
    %473 = arith.index_cast %472 : i32 to index
    %474 = memref.load %arg2[%473] : memref<336xf32, #tpu.memory_space<smem>>
    %c7_i32_98 = arith.constant 7 : i32
    %475 = arith.addi %453, %c7_i32_98 : i32
    %476 = arith.index_cast %475 : i32 to index
    %477 = memref.load %arg2[%476] : memref<336xf32, #tpu.memory_space<smem>>
    %c8_i32_99 = arith.constant 8 : i32
    %478 = arith.addi %453, %c8_i32_99 : i32
    %479 = arith.index_cast %478 : i32 to index
    %480 = memref.load %arg2[%479] : memref<336xf32, #tpu.memory_space<smem>>
    %c9_i32_100 = arith.constant 9 : i32
    %481 = arith.addi %453, %c9_i32_100 : i32
    %482 = arith.index_cast %481 : i32 to index
    %483 = memref.load %arg2[%482] : memref<336xf32, #tpu.memory_space<smem>>
    %c10_i32_101 = arith.constant 10 : i32
    %484 = arith.addi %453, %c10_i32_101 : i32
    %485 = arith.index_cast %484 : i32 to index
    %486 = memref.load %arg2[%485] : memref<336xf32, #tpu.memory_space<smem>>
    %c11_i32_102 = arith.constant 11 : i32
    %487 = arith.addi %453, %c11_i32_102 : i32
    %488 = arith.index_cast %487 : i32 to index
    %489 = memref.load %arg2[%488] : memref<336xf32, #tpu.memory_space<smem>>
    %cst_103 = arith.constant 0.000000e+00 : f32
    %490 = arith.cmpf oge, %456, %cst_103 : f32
    %cst_104 = arith.constant 1.000000e+00 : f32
    %cst_105 = arith.constant 0.000000e+00 : f32
    %491 = arith.select %490, %cst_104, %cst_105 : f32
    %492 = vector.broadcast %486 : f32 to vector<1x128xf32>
    %493 = arith.minimumf %7, %492 : vector<1x128xf32>
    %494 = vector.broadcast %480 : f32 to vector<1x128xf32>
    %495 = arith.maximumf %3, %494 : vector<1x128xf32>
    %496 = arith.subf %493, %495 : vector<1x128xf32>
    %cst_106 = arith.constant 0.000000e+00 : f32
    %497 = vector.broadcast %cst_106 : f32 to vector<1x128xf32>
    %498 = arith.maximumf %496, %497 : vector<1x128xf32>
    %499 = vector.broadcast %489 : f32 to vector<1x128xf32>
    %500 = arith.minimumf %5, %499 : vector<1x128xf32>
    %501 = vector.broadcast %483 : f32 to vector<1x128xf32>
    %502 = arith.maximumf %1, %501 : vector<1x128xf32>
    %503 = arith.subf %500, %502 : vector<1x128xf32>
    %cst_107 = arith.constant 0.000000e+00 : f32
    %504 = vector.broadcast %cst_107 : f32 to vector<1x128xf32>
    %505 = arith.maximumf %503, %504 : vector<1x128xf32>
    %506 = arith.mulf %498, %505 : vector<1x128xf32>
    %507 = arith.subf %486, %480 : f32
    %508 = arith.subf %489, %483 : f32
    %509 = arith.mulf %507, %508 : f32
    %510 = vector.broadcast %509 : f32 to vector<1x128xf32>
    %511 = arith.addf %16, %510 : vector<1x128xf32>
    %512 = arith.subf %511, %506 : vector<1x128xf32>
    %cst_108 = arith.constant 9.99999993E-9 : f32
    %513 = vector.broadcast %cst_108 : f32 to vector<1x128xf32>
    %514 = arith.maximumf %512, %513 : vector<1x128xf32>
    %515 = arith.divf %506, %514 : vector<1x128xf32>
    %516 = vector.broadcast %462 : f32 to vector<1x128xf32>
    %517 = arith.minimumf %7, %516 : vector<1x128xf32>
    %518 = vector.broadcast %456 : f32 to vector<1x128xf32>
    %519 = arith.maximumf %3, %518 : vector<1x128xf32>
    %520 = arith.subf %517, %519 : vector<1x128xf32>
    %cst_109 = arith.constant 0.000000e+00 : f32
    %521 = vector.broadcast %cst_109 : f32 to vector<1x128xf32>
    %522 = arith.maximumf %520, %521 : vector<1x128xf32>
    %523 = vector.broadcast %465 : f32 to vector<1x128xf32>
    %524 = arith.minimumf %5, %523 : vector<1x128xf32>
    %525 = vector.broadcast %459 : f32 to vector<1x128xf32>
    %526 = arith.maximumf %1, %525 : vector<1x128xf32>
    %527 = arith.subf %524, %526 : vector<1x128xf32>
    %cst_110 = arith.constant 0.000000e+00 : f32
    %528 = vector.broadcast %cst_110 : f32 to vector<1x128xf32>
    %529 = arith.maximumf %527, %528 : vector<1x128xf32>
    %530 = arith.mulf %522, %529 : vector<1x128xf32>
    %531 = arith.subf %462, %456 : f32
    %532 = arith.subf %465, %459 : f32
    %533 = arith.mulf %531, %532 : f32
    %cst_111 = arith.constant 9.99999993E-9 : f32
    %534 = arith.maximumf %533, %cst_111 : f32
    %535 = vector.broadcast %534 : f32 to vector<1x128xf32>
    %536 = arith.divf %530, %535 : vector<1x128xf32>
    %537 = vector.broadcast %474 : f32 to vector<1x128xf32>
    %538 = arith.minimumf %7, %537 : vector<1x128xf32>
    %539 = vector.broadcast %468 : f32 to vector<1x128xf32>
    %540 = arith.maximumf %3, %539 : vector<1x128xf32>
    %541 = arith.subf %538, %540 : vector<1x128xf32>
    %cst_112 = arith.constant 0.000000e+00 : f32
    %542 = vector.broadcast %cst_112 : f32 to vector<1x128xf32>
    %543 = arith.maximumf %541, %542 : vector<1x128xf32>
    %544 = vector.broadcast %477 : f32 to vector<1x128xf32>
    %545 = arith.minimumf %5, %544 : vector<1x128xf32>
    %546 = vector.broadcast %471 : f32 to vector<1x128xf32>
    %547 = arith.maximumf %1, %546 : vector<1x128xf32>
    %548 = arith.subf %545, %547 : vector<1x128xf32>
    %cst_113 = arith.constant 0.000000e+00 : f32
    %549 = vector.broadcast %cst_113 : f32 to vector<1x128xf32>
    %550 = arith.maximumf %548, %549 : vector<1x128xf32>
    %551 = arith.mulf %543, %550 : vector<1x128xf32>
    %552 = arith.subf %474, %468 : f32
    %553 = arith.subf %477, %471 : f32
    %554 = arith.mulf %552, %553 : f32
    %cst_114 = arith.constant 9.99999993E-9 : f32
    %555 = arith.maximumf %554, %cst_114 : f32
    %556 = vector.broadcast %555 : f32 to vector<1x128xf32>
    %557 = arith.divf %551, %556 : vector<1x128xf32>
    %cst_115 = arith.constant 2.500000e-01 : f32
    %558 = vector.broadcast %cst_115 : f32 to vector<1x128xf32>
    %559 = arith.cmpf ogt, %515, %558 : vector<1x128xf32>
    %cst_116 = arith.constant 2.500000e-01 : f32
    %560 = vector.broadcast %cst_116 : f32 to vector<1x128xf32>
    %561 = arith.cmpf ogt, %536, %560 : vector<1x128xf32>
    %562 = arith.andi %559, %561 : vector<1x128xi1>
    %cst_117 = arith.constant 2.500000e-01 : f32
    %563 = vector.broadcast %cst_117 : f32 to vector<1x128xf32>
    %564 = arith.cmpf ogt, %557, %563 : vector<1x128xf32>
    %565 = arith.andi %562, %564 : vector<1x128xi1>
    %cst_118 = arith.constant 0.000000e+00 : f32
    %566 = vector.broadcast %491 : f32 to vector<1x128xf32>
    %567 = vector.broadcast %cst_118 : f32 to vector<1x128xf32>
    %568 = arith.select %565, %566, %567 : vector<1x128xi1>, vector<1x128xf32>
    %569 = arith.mulf %536, %557 : vector<1x128xf32>
    %570 = math.sqrt %569 : vector<1x128xf32>
    %571 = arith.addf %515, %570 : vector<1x128xf32>
    %cst_119 = arith.constant 5.000000e-01 : f32
    %572 = vector.broadcast %cst_119 : f32 to vector<1x128xf32>
    %573 = arith.mulf %572, %571 : vector<1x128xf32>
    %574 = arith.mulf %573, %568 : vector<1x128xf32>
    %575 = arith.cmpf ogt, %574, %363 : vector<1x128xf32>
    %576 = arith.select %575, %574, %363 : vector<1x128xi1>, vector<1x128xf32>
    %577 = arith.maximumf %364, %568 : vector<1x128xf32>
    %578 = vector.broadcast %456 : f32 to vector<1x128xf32>
    %579 = arith.select %575, %578, %366 : vector<1x128xi1>, vector<1x128xf32>
    %580 = vector.broadcast %459 : f32 to vector<1x128xf32>
    %581 = arith.select %575, %580, %368 : vector<1x128xi1>, vector<1x128xf32>
    %582 = vector.broadcast %462 : f32 to vector<1x128xf32>
    %583 = arith.select %575, %582, %370 : vector<1x128xi1>, vector<1x128xf32>
    %584 = vector.broadcast %465 : f32 to vector<1x128xf32>
    %585 = arith.select %575, %584, %372 : vector<1x128xi1>, vector<1x128xf32>
    %586 = vector.broadcast %468 : f32 to vector<1x128xf32>
    %587 = arith.select %575, %586, %374 : vector<1x128xi1>, vector<1x128xf32>
    %588 = vector.broadcast %471 : f32 to vector<1x128xf32>
    %589 = arith.select %575, %588, %376 : vector<1x128xi1>, vector<1x128xf32>
    %590 = vector.broadcast %474 : f32 to vector<1x128xf32>
    %591 = arith.select %575, %590, %378 : vector<1x128xi1>, vector<1x128xf32>
    %592 = vector.broadcast %477 : f32 to vector<1x128xf32>
    %593 = arith.select %575, %592, %380 : vector<1x128xi1>, vector<1x128xf32>
    %c13_i32_120 = arith.constant 13 : i32
    %594 = arith.addi %453, %c13_i32_120 : i32
    %c0_i32_121 = arith.constant 0 : i32
    %595 = arith.addi %594, %c0_i32_121 : i32
    %596 = arith.index_cast %595 : i32 to index
    %597 = memref.load %arg2[%596] : memref<336xf32, #tpu.memory_space<smem>>
    %598 = vector.broadcast %597 : f32 to vector<1x128xf32>
    %599 = arith.select %575, %598, %386 : vector<1x128xi1>, vector<1x128xf32>
    %600 = vector.broadcast %597 : f32 to vector<1x128xf32>
    %601 = arith.mulf %568, %600 : vector<1x128xf32>
    %602 = arith.addf %389, %601 : vector<1x128xf32>
    %c13_i32_122 = arith.constant 13 : i32
    %603 = arith.addi %453, %c13_i32_122 : i32
    %c1_i32_123 = arith.constant 1 : i32
    %604 = arith.addi %603, %c1_i32_123 : i32
    %605 = arith.index_cast %604 : i32 to index
    %606 = memref.load %arg2[%605] : memref<336xf32, #tpu.memory_space<smem>>
    %607 = vector.broadcast %606 : f32 to vector<1x128xf32>
    %608 = arith.select %575, %607, %395 : vector<1x128xi1>, vector<1x128xf32>
    %609 = vector.broadcast %606 : f32 to vector<1x128xf32>
    %610 = arith.mulf %568, %609 : vector<1x128xf32>
    %611 = arith.addf %398, %610 : vector<1x128xf32>
    %c13_i32_124 = arith.constant 13 : i32
    %612 = arith.addi %453, %c13_i32_124 : i32
    %c2_i32_125 = arith.constant 2 : i32
    %613 = arith.addi %612, %c2_i32_125 : i32
    %614 = arith.index_cast %613 : i32 to index
    %615 = memref.load %arg2[%614] : memref<336xf32, #tpu.memory_space<smem>>
    %616 = vector.broadcast %615 : f32 to vector<1x128xf32>
    %617 = arith.select %575, %616, %404 : vector<1x128xi1>, vector<1x128xf32>
    %618 = vector.broadcast %615 : f32 to vector<1x128xf32>
    %619 = arith.mulf %568, %618 : vector<1x128xf32>
    %620 = arith.addf %407, %619 : vector<1x128xf32>
    %c13_i32_126 = arith.constant 13 : i32
    %621 = arith.addi %453, %c13_i32_126 : i32
    %c3_i32_127 = arith.constant 3 : i32
    %622 = arith.addi %621, %c3_i32_127 : i32
    %623 = arith.index_cast %622 : i32 to index
    %624 = memref.load %arg2[%623] : memref<336xf32, #tpu.memory_space<smem>>
    %625 = vector.broadcast %624 : f32 to vector<1x128xf32>
    %626 = arith.select %575, %625, %413 : vector<1x128xi1>, vector<1x128xf32>
    %627 = vector.broadcast %624 : f32 to vector<1x128xf32>
    %628 = arith.mulf %568, %627 : vector<1x128xf32>
    %629 = arith.addf %416, %628 : vector<1x128xf32>
    %c13_i32_128 = arith.constant 13 : i32
    %630 = arith.addi %453, %c13_i32_128 : i32
    %c4_i32_129 = arith.constant 4 : i32
    %631 = arith.addi %630, %c4_i32_129 : i32
    %632 = arith.index_cast %631 : i32 to index
    %633 = memref.load %arg2[%632] : memref<336xf32, #tpu.memory_space<smem>>
    %634 = vector.broadcast %633 : f32 to vector<1x128xf32>
    %635 = arith.select %575, %634, %422 : vector<1x128xi1>, vector<1x128xf32>
    %636 = vector.broadcast %633 : f32 to vector<1x128xf32>
    %637 = arith.mulf %568, %636 : vector<1x128xf32>
    %638 = arith.addf %425, %637 : vector<1x128xf32>
    %c13_i32_130 = arith.constant 13 : i32
    %639 = arith.addi %453, %c13_i32_130 : i32
    %c5_i32_131 = arith.constant 5 : i32
    %640 = arith.addi %639, %c5_i32_131 : i32
    %641 = arith.index_cast %640 : i32 to index
    %642 = memref.load %arg2[%641] : memref<336xf32, #tpu.memory_space<smem>>
    %643 = vector.broadcast %642 : f32 to vector<1x128xf32>
    %644 = arith.select %575, %643, %431 : vector<1x128xi1>, vector<1x128xf32>
    %645 = vector.broadcast %642 : f32 to vector<1x128xf32>
    %646 = arith.mulf %568, %645 : vector<1x128xf32>
    %647 = arith.addf %434, %646 : vector<1x128xf32>
    %c13_i32_132 = arith.constant 13 : i32
    %648 = arith.addi %453, %c13_i32_132 : i32
    %c6_i32_133 = arith.constant 6 : i32
    %649 = arith.addi %648, %c6_i32_133 : i32
    %650 = arith.index_cast %649 : i32 to index
    %651 = memref.load %arg2[%650] : memref<336xf32, #tpu.memory_space<smem>>
    %652 = vector.broadcast %651 : f32 to vector<1x128xf32>
    %653 = arith.select %575, %652, %440 : vector<1x128xi1>, vector<1x128xf32>
    %654 = vector.broadcast %651 : f32 to vector<1x128xf32>
    %655 = arith.mulf %568, %654 : vector<1x128xf32>
    %656 = arith.addf %443, %655 : vector<1x128xf32>
    %c13_i32_134 = arith.constant 13 : i32
    %657 = arith.addi %453, %c13_i32_134 : i32
    %c7_i32_135 = arith.constant 7 : i32
    %658 = arith.addi %657, %c7_i32_135 : i32
    %659 = arith.index_cast %658 : i32 to index
    %660 = memref.load %arg2[%659] : memref<336xf32, #tpu.memory_space<smem>>
    %661 = vector.broadcast %660 : f32 to vector<1x128xf32>
    %662 = arith.select %575, %661, %449 : vector<1x128xi1>, vector<1x128xf32>
    %663 = vector.broadcast %660 : f32 to vector<1x128xf32>
    %664 = arith.mulf %568, %663 : vector<1x128xf32>
    %665 = arith.addf %452, %664 : vector<1x128xf32>
    %c63_i32 = arith.constant 63 : i32
    %666 = arith.addi %24, %c63_i32 : i32
    %c0_i32_136 = arith.constant 0 : i32
    %667 = arith.addi %666, %c0_i32_136 : i32
    %668 = arith.index_cast %667 : i32 to index
    %669 = memref.load %arg2[%668] : memref<336xf32, #tpu.memory_space<smem>>
    %c1_i32_137 = arith.constant 1 : i32
    %670 = arith.addi %666, %c1_i32_137 : i32
    %671 = arith.index_cast %670 : i32 to index
    %672 = memref.load %arg2[%671] : memref<336xf32, #tpu.memory_space<smem>>
    %c2_i32_138 = arith.constant 2 : i32
    %673 = arith.addi %666, %c2_i32_138 : i32
    %674 = arith.index_cast %673 : i32 to index
    %675 = memref.load %arg2[%674] : memref<336xf32, #tpu.memory_space<smem>>
    %c3_i32_139 = arith.constant 3 : i32
    %676 = arith.addi %666, %c3_i32_139 : i32
    %677 = arith.index_cast %676 : i32 to index
    %678 = memref.load %arg2[%677] : memref<336xf32, #tpu.memory_space<smem>>
    %c4_i32_140 = arith.constant 4 : i32
    %679 = arith.addi %666, %c4_i32_140 : i32
    %680 = arith.index_cast %679 : i32 to index
    %681 = memref.load %arg2[%680] : memref<336xf32, #tpu.memory_space<smem>>
    %c5_i32_141 = arith.constant 5 : i32
    %682 = arith.addi %666, %c5_i32_141 : i32
    %683 = arith.index_cast %682 : i32 to index
    %684 = memref.load %arg2[%683] : memref<336xf32, #tpu.memory_space<smem>>
    %c6_i32_142 = arith.constant 6 : i32
    %685 = arith.addi %666, %c6_i32_142 : i32
    %686 = arith.index_cast %685 : i32 to index
    %687 = memref.load %arg2[%686] : memref<336xf32, #tpu.memory_space<smem>>
    %c7_i32_143 = arith.constant 7 : i32
    %688 = arith.addi %666, %c7_i32_143 : i32
    %689 = arith.index_cast %688 : i32 to index
    %690 = memref.load %arg2[%689] : memref<336xf32, #tpu.memory_space<smem>>
    %c8_i32_144 = arith.constant 8 : i32
    %691 = arith.addi %666, %c8_i32_144 : i32
    %692 = arith.index_cast %691 : i32 to index
    %693 = memref.load %arg2[%692] : memref<336xf32, #tpu.memory_space<smem>>
    %c9_i32_145 = arith.constant 9 : i32
    %694 = arith.addi %666, %c9_i32_145 : i32
    %695 = arith.index_cast %694 : i32 to index
    %696 = memref.load %arg2[%695] : memref<336xf32, #tpu.memory_space<smem>>
    %c10_i32_146 = arith.constant 10 : i32
    %697 = arith.addi %666, %c10_i32_146 : i32
    %698 = arith.index_cast %697 : i32 to index
    %699 = memref.load %arg2[%698] : memref<336xf32, #tpu.memory_space<smem>>
    %c11_i32_147 = arith.constant 11 : i32
    %700 = arith.addi %666, %c11_i32_147 : i32
    %701 = arith.index_cast %700 : i32 to index
    %702 = memref.load %arg2[%701] : memref<336xf32, #tpu.memory_space<smem>>
    %cst_148 = arith.constant 0.000000e+00 : f32
    %703 = arith.cmpf oge, %669, %cst_148 : f32
    %cst_149 = arith.constant 1.000000e+00 : f32
    %cst_150 = arith.constant 0.000000e+00 : f32
    %704 = arith.select %703, %cst_149, %cst_150 : f32
    %705 = vector.broadcast %699 : f32 to vector<1x128xf32>
    %706 = arith.minimumf %7, %705 : vector<1x128xf32>
    %707 = vector.broadcast %693 : f32 to vector<1x128xf32>
    %708 = arith.maximumf %3, %707 : vector<1x128xf32>
    %709 = arith.subf %706, %708 : vector<1x128xf32>
    %cst_151 = arith.constant 0.000000e+00 : f32
    %710 = vector.broadcast %cst_151 : f32 to vector<1x128xf32>
    %711 = arith.maximumf %709, %710 : vector<1x128xf32>
    %712 = vector.broadcast %702 : f32 to vector<1x128xf32>
    %713 = arith.minimumf %5, %712 : vector<1x128xf32>
    %714 = vector.broadcast %696 : f32 to vector<1x128xf32>
    %715 = arith.maximumf %1, %714 : vector<1x128xf32>
    %716 = arith.subf %713, %715 : vector<1x128xf32>
    %cst_152 = arith.constant 0.000000e+00 : f32
    %717 = vector.broadcast %cst_152 : f32 to vector<1x128xf32>
    %718 = arith.maximumf %716, %717 : vector<1x128xf32>
    %719 = arith.mulf %711, %718 : vector<1x128xf32>
    %720 = arith.subf %699, %693 : f32
    %721 = arith.subf %702, %696 : f32
    %722 = arith.mulf %720, %721 : f32
    %723 = vector.broadcast %722 : f32 to vector<1x128xf32>
    %724 = arith.addf %16, %723 : vector<1x128xf32>
    %725 = arith.subf %724, %719 : vector<1x128xf32>
    %cst_153 = arith.constant 9.99999993E-9 : f32
    %726 = vector.broadcast %cst_153 : f32 to vector<1x128xf32>
    %727 = arith.maximumf %725, %726 : vector<1x128xf32>
    %728 = arith.divf %719, %727 : vector<1x128xf32>
    %729 = vector.broadcast %675 : f32 to vector<1x128xf32>
    %730 = arith.minimumf %7, %729 : vector<1x128xf32>
    %731 = vector.broadcast %669 : f32 to vector<1x128xf32>
    %732 = arith.maximumf %3, %731 : vector<1x128xf32>
    %733 = arith.subf %730, %732 : vector<1x128xf32>
    %cst_154 = arith.constant 0.000000e+00 : f32
    %734 = vector.broadcast %cst_154 : f32 to vector<1x128xf32>
    %735 = arith.maximumf %733, %734 : vector<1x128xf32>
    %736 = vector.broadcast %678 : f32 to vector<1x128xf32>
    %737 = arith.minimumf %5, %736 : vector<1x128xf32>
    %738 = vector.broadcast %672 : f32 to vector<1x128xf32>
    %739 = arith.maximumf %1, %738 : vector<1x128xf32>
    %740 = arith.subf %737, %739 : vector<1x128xf32>
    %cst_155 = arith.constant 0.000000e+00 : f32
    %741 = vector.broadcast %cst_155 : f32 to vector<1x128xf32>
    %742 = arith.maximumf %740, %741 : vector<1x128xf32>
    %743 = arith.mulf %735, %742 : vector<1x128xf32>
    %744 = arith.subf %675, %669 : f32
    %745 = arith.subf %678, %672 : f32
    %746 = arith.mulf %744, %745 : f32
    %cst_156 = arith.constant 9.99999993E-9 : f32
    %747 = arith.maximumf %746, %cst_156 : f32
    %748 = vector.broadcast %747 : f32 to vector<1x128xf32>
    %749 = arith.divf %743, %748 : vector<1x128xf32>
    %750 = vector.broadcast %687 : f32 to vector<1x128xf32>
    %751 = arith.minimumf %7, %750 : vector<1x128xf32>
    %752 = vector.broadcast %681 : f32 to vector<1x128xf32>
    %753 = arith.maximumf %3, %752 : vector<1x128xf32>
    %754 = arith.subf %751, %753 : vector<1x128xf32>
    %cst_157 = arith.constant 0.000000e+00 : f32
    %755 = vector.broadcast %cst_157 : f32 to vector<1x128xf32>
    %756 = arith.maximumf %754, %755 : vector<1x128xf32>
    %757 = vector.broadcast %690 : f32 to vector<1x128xf32>
    %758 = arith.minimumf %5, %757 : vector<1x128xf32>
    %759 = vector.broadcast %684 : f32 to vector<1x128xf32>
    %760 = arith.maximumf %1, %759 : vector<1x128xf32>
    %761 = arith.subf %758, %760 : vector<1x128xf32>
    %cst_158 = arith.constant 0.000000e+00 : f32
    %762 = vector.broadcast %cst_158 : f32 to vector<1x128xf32>
    %763 = arith.maximumf %761, %762 : vector<1x128xf32>
    %764 = arith.mulf %756, %763 : vector<1x128xf32>
    %765 = arith.subf %687, %681 : f32
    %766 = arith.subf %690, %684 : f32
    %767 = arith.mulf %765, %766 : f32
    %cst_159 = arith.constant 9.99999993E-9 : f32
    %768 = arith.maximumf %767, %cst_159 : f32
    %769 = vector.broadcast %768 : f32 to vector<1x128xf32>
    %770 = arith.divf %764, %769 : vector<1x128xf32>
    %cst_160 = arith.constant 2.500000e-01 : f32
    %771 = vector.broadcast %cst_160 : f32 to vector<1x128xf32>
    %772 = arith.cmpf ogt, %728, %771 : vector<1x128xf32>
    %cst_161 = arith.constant 2.500000e-01 : f32
    %773 = vector.broadcast %cst_161 : f32 to vector<1x128xf32>
    %774 = arith.cmpf ogt, %749, %773 : vector<1x128xf32>
    %775 = arith.andi %772, %774 : vector<1x128xi1>
    %cst_162 = arith.constant 2.500000e-01 : f32
    %776 = vector.broadcast %cst_162 : f32 to vector<1x128xf32>
    %777 = arith.cmpf ogt, %770, %776 : vector<1x128xf32>
    %778 = arith.andi %775, %777 : vector<1x128xi1>
    %cst_163 = arith.constant 0.000000e+00 : f32
    %779 = vector.broadcast %704 : f32 to vector<1x128xf32>
    %780 = vector.broadcast %cst_163 : f32 to vector<1x128xf32>
    %781 = arith.select %778, %779, %780 : vector<1x128xi1>, vector<1x128xf32>
    %782 = arith.mulf %749, %770 : vector<1x128xf32>
    %783 = math.sqrt %782 : vector<1x128xf32>
    %784 = arith.addf %728, %783 : vector<1x128xf32>
    %cst_164 = arith.constant 5.000000e-01 : f32
    %785 = vector.broadcast %cst_164 : f32 to vector<1x128xf32>
    %786 = arith.mulf %785, %784 : vector<1x128xf32>
    %787 = arith.mulf %786, %781 : vector<1x128xf32>
    %788 = arith.cmpf ogt, %787, %576 : vector<1x128xf32>
    %789 = arith.select %788, %787, %576 : vector<1x128xi1>, vector<1x128xf32>
    %790 = arith.maximumf %577, %781 : vector<1x128xf32>
    %791 = vector.broadcast %669 : f32 to vector<1x128xf32>
    %792 = arith.select %788, %791, %579 : vector<1x128xi1>, vector<1x128xf32>
    %793 = vector.broadcast %672 : f32 to vector<1x128xf32>
    %794 = arith.select %788, %793, %581 : vector<1x128xi1>, vector<1x128xf32>
    %795 = vector.broadcast %675 : f32 to vector<1x128xf32>
    %796 = arith.select %788, %795, %583 : vector<1x128xi1>, vector<1x128xf32>
    %797 = vector.broadcast %678 : f32 to vector<1x128xf32>
    %798 = arith.select %788, %797, %585 : vector<1x128xi1>, vector<1x128xf32>
    %799 = vector.broadcast %681 : f32 to vector<1x128xf32>
    %800 = arith.select %788, %799, %587 : vector<1x128xi1>, vector<1x128xf32>
    %801 = vector.broadcast %684 : f32 to vector<1x128xf32>
    %802 = arith.select %788, %801, %589 : vector<1x128xi1>, vector<1x128xf32>
    %803 = vector.broadcast %687 : f32 to vector<1x128xf32>
    %804 = arith.select %788, %803, %591 : vector<1x128xi1>, vector<1x128xf32>
    %805 = vector.broadcast %690 : f32 to vector<1x128xf32>
    %806 = arith.select %788, %805, %593 : vector<1x128xi1>, vector<1x128xf32>
    %c13_i32_165 = arith.constant 13 : i32
    %807 = arith.addi %666, %c13_i32_165 : i32
    %c0_i32_166 = arith.constant 0 : i32
    %808 = arith.addi %807, %c0_i32_166 : i32
    %809 = arith.index_cast %808 : i32 to index
    %810 = memref.load %arg2[%809] : memref<336xf32, #tpu.memory_space<smem>>
    %811 = vector.broadcast %810 : f32 to vector<1x128xf32>
    %812 = arith.select %788, %811, %599 : vector<1x128xi1>, vector<1x128xf32>
    %813 = vector.broadcast %810 : f32 to vector<1x128xf32>
    %814 = arith.mulf %781, %813 : vector<1x128xf32>
    %815 = arith.addf %602, %814 : vector<1x128xf32>
    %c13_i32_167 = arith.constant 13 : i32
    %816 = arith.addi %666, %c13_i32_167 : i32
    %c1_i32_168 = arith.constant 1 : i32
    %817 = arith.addi %816, %c1_i32_168 : i32
    %818 = arith.index_cast %817 : i32 to index
    %819 = memref.load %arg2[%818] : memref<336xf32, #tpu.memory_space<smem>>
    %820 = vector.broadcast %819 : f32 to vector<1x128xf32>
    %821 = arith.select %788, %820, %608 : vector<1x128xi1>, vector<1x128xf32>
    %822 = vector.broadcast %819 : f32 to vector<1x128xf32>
    %823 = arith.mulf %781, %822 : vector<1x128xf32>
    %824 = arith.addf %611, %823 : vector<1x128xf32>
    %c13_i32_169 = arith.constant 13 : i32
    %825 = arith.addi %666, %c13_i32_169 : i32
    %c2_i32_170 = arith.constant 2 : i32
    %826 = arith.addi %825, %c2_i32_170 : i32
    %827 = arith.index_cast %826 : i32 to index
    %828 = memref.load %arg2[%827] : memref<336xf32, #tpu.memory_space<smem>>
    %829 = vector.broadcast %828 : f32 to vector<1x128xf32>
    %830 = arith.select %788, %829, %617 : vector<1x128xi1>, vector<1x128xf32>
    %831 = vector.broadcast %828 : f32 to vector<1x128xf32>
    %832 = arith.mulf %781, %831 : vector<1x128xf32>
    %833 = arith.addf %620, %832 : vector<1x128xf32>
    %c13_i32_171 = arith.constant 13 : i32
    %834 = arith.addi %666, %c13_i32_171 : i32
    %c3_i32_172 = arith.constant 3 : i32
    %835 = arith.addi %834, %c3_i32_172 : i32
    %836 = arith.index_cast %835 : i32 to index
    %837 = memref.load %arg2[%836] : memref<336xf32, #tpu.memory_space<smem>>
    %838 = vector.broadcast %837 : f32 to vector<1x128xf32>
    %839 = arith.select %788, %838, %626 : vector<1x128xi1>, vector<1x128xf32>
    %840 = vector.broadcast %837 : f32 to vector<1x128xf32>
    %841 = arith.mulf %781, %840 : vector<1x128xf32>
    %842 = arith.addf %629, %841 : vector<1x128xf32>
    %c13_i32_173 = arith.constant 13 : i32
    %843 = arith.addi %666, %c13_i32_173 : i32
    %c4_i32_174 = arith.constant 4 : i32
    %844 = arith.addi %843, %c4_i32_174 : i32
    %845 = arith.index_cast %844 : i32 to index
    %846 = memref.load %arg2[%845] : memref<336xf32, #tpu.memory_space<smem>>
    %847 = vector.broadcast %846 : f32 to vector<1x128xf32>
    %848 = arith.select %788, %847, %635 : vector<1x128xi1>, vector<1x128xf32>
    %849 = vector.broadcast %846 : f32 to vector<1x128xf32>
    %850 = arith.mulf %781, %849 : vector<1x128xf32>
    %851 = arith.addf %638, %850 : vector<1x128xf32>
    %c13_i32_175 = arith.constant 13 : i32
    %852 = arith.addi %666, %c13_i32_175 : i32
    %c5_i32_176 = arith.constant 5 : i32
    %853 = arith.addi %852, %c5_i32_176 : i32
    %854 = arith.index_cast %853 : i32 to index
    %855 = memref.load %arg2[%854] : memref<336xf32, #tpu.memory_space<smem>>
    %856 = vector.broadcast %855 : f32 to vector<1x128xf32>
    %857 = arith.select %788, %856, %644 : vector<1x128xi1>, vector<1x128xf32>
    %858 = vector.broadcast %855 : f32 to vector<1x128xf32>
    %859 = arith.mulf %781, %858 : vector<1x128xf32>
    %860 = arith.addf %647, %859 : vector<1x128xf32>
    %c13_i32_177 = arith.constant 13 : i32
    %861 = arith.addi %666, %c13_i32_177 : i32
    %c6_i32_178 = arith.constant 6 : i32
    %862 = arith.addi %861, %c6_i32_178 : i32
    %863 = arith.index_cast %862 : i32 to index
    %864 = memref.load %arg2[%863] : memref<336xf32, #tpu.memory_space<smem>>
    %865 = vector.broadcast %864 : f32 to vector<1x128xf32>
    %866 = arith.select %788, %865, %653 : vector<1x128xi1>, vector<1x128xf32>
    %867 = vector.broadcast %864 : f32 to vector<1x128xf32>
    %868 = arith.mulf %781, %867 : vector<1x128xf32>
    %869 = arith.addf %656, %868 : vector<1x128xf32>
    %c13_i32_179 = arith.constant 13 : i32
    %870 = arith.addi %666, %c13_i32_179 : i32
    %c7_i32_180 = arith.constant 7 : i32
    %871 = arith.addi %870, %c7_i32_180 : i32
    %872 = arith.index_cast %871 : i32 to index
    %873 = memref.load %arg2[%872] : memref<336xf32, #tpu.memory_space<smem>>
    %874 = vector.broadcast %873 : f32 to vector<1x128xf32>
    %875 = arith.select %788, %874, %662 : vector<1x128xi1>, vector<1x128xf32>
    %876 = vector.broadcast %873 : f32 to vector<1x128xf32>
    %877 = arith.mulf %781, %876 : vector<1x128xf32>
    %878 = arith.addf %665, %877 : vector<1x128xf32>
    %c84_i32 = arith.constant 84 : i32
    %879 = arith.addi %24, %c84_i32 : i32
    %c0_i32_181 = arith.constant 0 : i32
    %880 = arith.addi %879, %c0_i32_181 : i32
    %881 = arith.index_cast %880 : i32 to index
    %882 = memref.load %arg2[%881] : memref<336xf32, #tpu.memory_space<smem>>
    %c1_i32_182 = arith.constant 1 : i32
    %883 = arith.addi %879, %c1_i32_182 : i32
    %884 = arith.index_cast %883 : i32 to index
    %885 = memref.load %arg2[%884] : memref<336xf32, #tpu.memory_space<smem>>
    %c2_i32_183 = arith.constant 2 : i32
    %886 = arith.addi %879, %c2_i32_183 : i32
    %887 = arith.index_cast %886 : i32 to index
    %888 = memref.load %arg2[%887] : memref<336xf32, #tpu.memory_space<smem>>
    %c3_i32_184 = arith.constant 3 : i32
    %889 = arith.addi %879, %c3_i32_184 : i32
    %890 = arith.index_cast %889 : i32 to index
    %891 = memref.load %arg2[%890] : memref<336xf32, #tpu.memory_space<smem>>
    %c4_i32_185 = arith.constant 4 : i32
    %892 = arith.addi %879, %c4_i32_185 : i32
    %893 = arith.index_cast %892 : i32 to index
    %894 = memref.load %arg2[%893] : memref<336xf32, #tpu.memory_space<smem>>
    %c5_i32_186 = arith.constant 5 : i32
    %895 = arith.addi %879, %c5_i32_186 : i32
    %896 = arith.index_cast %895 : i32 to index
    %897 = memref.load %arg2[%896] : memref<336xf32, #tpu.memory_space<smem>>
    %c6_i32_187 = arith.constant 6 : i32
    %898 = arith.addi %879, %c6_i32_187 : i32
    %899 = arith.index_cast %898 : i32 to index
    %900 = memref.load %arg2[%899] : memref<336xf32, #tpu.memory_space<smem>>
    %c7_i32_188 = arith.constant 7 : i32
    %901 = arith.addi %879, %c7_i32_188 : i32
    %902 = arith.index_cast %901 : i32 to index
    %903 = memref.load %arg2[%902] : memref<336xf32, #tpu.memory_space<smem>>
    %c8_i32_189 = arith.constant 8 : i32
    %904 = arith.addi %879, %c8_i32_189 : i32
    %905 = arith.index_cast %904 : i32 to index
    %906 = memref.load %arg2[%905] : memref<336xf32, #tpu.memory_space<smem>>
    %c9_i32_190 = arith.constant 9 : i32
    %907 = arith.addi %879, %c9_i32_190 : i32
    %908 = arith.index_cast %907 : i32 to index
    %909 = memref.load %arg2[%908] : memref<336xf32, #tpu.memory_space<smem>>
    %c10_i32_191 = arith.constant 10 : i32
    %910 = arith.addi %879, %c10_i32_191 : i32
    %911 = arith.index_cast %910 : i32 to index
    %912 = memref.load %arg2[%911] : memref<336xf32, #tpu.memory_space<smem>>
    %c11_i32_192 = arith.constant 11 : i32
    %913 = arith.addi %879, %c11_i32_192 : i32
    %914 = arith.index_cast %913 : i32 to index
    %915 = memref.load %arg2[%914] : memref<336xf32, #tpu.memory_space<smem>>
    %cst_193 = arith.constant 0.000000e+00 : f32
    %916 = arith.cmpf oge, %882, %cst_193 : f32
    %cst_194 = arith.constant 1.000000e+00 : f32
    %cst_195 = arith.constant 0.000000e+00 : f32
    %917 = arith.select %916, %cst_194, %cst_195 : f32
    %918 = vector.broadcast %912 : f32 to vector<1x128xf32>
    %919 = arith.minimumf %7, %918 : vector<1x128xf32>
    %920 = vector.broadcast %906 : f32 to vector<1x128xf32>
    %921 = arith.maximumf %3, %920 : vector<1x128xf32>
    %922 = arith.subf %919, %921 : vector<1x128xf32>
    %cst_196 = arith.constant 0.000000e+00 : f32
    %923 = vector.broadcast %cst_196 : f32 to vector<1x128xf32>
    %924 = arith.maximumf %922, %923 : vector<1x128xf32>
    %925 = vector.broadcast %915 : f32 to vector<1x128xf32>
    %926 = arith.minimumf %5, %925 : vector<1x128xf32>
    %927 = vector.broadcast %909 : f32 to vector<1x128xf32>
    %928 = arith.maximumf %1, %927 : vector<1x128xf32>
    %929 = arith.subf %926, %928 : vector<1x128xf32>
    %cst_197 = arith.constant 0.000000e+00 : f32
    %930 = vector.broadcast %cst_197 : f32 to vector<1x128xf32>
    %931 = arith.maximumf %929, %930 : vector<1x128xf32>
    %932 = arith.mulf %924, %931 : vector<1x128xf32>
    %933 = arith.subf %912, %906 : f32
    %934 = arith.subf %915, %909 : f32
    %935 = arith.mulf %933, %934 : f32
    %936 = vector.broadcast %935 : f32 to vector<1x128xf32>
    %937 = arith.addf %16, %936 : vector<1x128xf32>
    %938 = arith.subf %937, %932 : vector<1x128xf32>
    %cst_198 = arith.constant 9.99999993E-9 : f32
    %939 = vector.broadcast %cst_198 : f32 to vector<1x128xf32>
    %940 = arith.maximumf %938, %939 : vector<1x128xf32>
    %941 = arith.divf %932, %940 : vector<1x128xf32>
    %942 = vector.broadcast %888 : f32 to vector<1x128xf32>
    %943 = arith.minimumf %7, %942 : vector<1x128xf32>
    %944 = vector.broadcast %882 : f32 to vector<1x128xf32>
    %945 = arith.maximumf %3, %944 : vector<1x128xf32>
    %946 = arith.subf %943, %945 : vector<1x128xf32>
    %cst_199 = arith.constant 0.000000e+00 : f32
    %947 = vector.broadcast %cst_199 : f32 to vector<1x128xf32>
    %948 = arith.maximumf %946, %947 : vector<1x128xf32>
    %949 = vector.broadcast %891 : f32 to vector<1x128xf32>
    %950 = arith.minimumf %5, %949 : vector<1x128xf32>
    %951 = vector.broadcast %885 : f32 to vector<1x128xf32>
    %952 = arith.maximumf %1, %951 : vector<1x128xf32>
    %953 = arith.subf %950, %952 : vector<1x128xf32>
    %cst_200 = arith.constant 0.000000e+00 : f32
    %954 = vector.broadcast %cst_200 : f32 to vector<1x128xf32>
    %955 = arith.maximumf %953, %954 : vector<1x128xf32>
    %956 = arith.mulf %948, %955 : vector<1x128xf32>
    %957 = arith.subf %888, %882 : f32
    %958 = arith.subf %891, %885 : f32
    %959 = arith.mulf %957, %958 : f32
    %cst_201 = arith.constant 9.99999993E-9 : f32
    %960 = arith.maximumf %959, %cst_201 : f32
    %961 = vector.broadcast %960 : f32 to vector<1x128xf32>
    %962 = arith.divf %956, %961 : vector<1x128xf32>
    %963 = vector.broadcast %900 : f32 to vector<1x128xf32>
    %964 = arith.minimumf %7, %963 : vector<1x128xf32>
    %965 = vector.broadcast %894 : f32 to vector<1x128xf32>
    %966 = arith.maximumf %3, %965 : vector<1x128xf32>
    %967 = arith.subf %964, %966 : vector<1x128xf32>
    %cst_202 = arith.constant 0.000000e+00 : f32
    %968 = vector.broadcast %cst_202 : f32 to vector<1x128xf32>
    %969 = arith.maximumf %967, %968 : vector<1x128xf32>
    %970 = vector.broadcast %903 : f32 to vector<1x128xf32>
    %971 = arith.minimumf %5, %970 : vector<1x128xf32>
    %972 = vector.broadcast %897 : f32 to vector<1x128xf32>
    %973 = arith.maximumf %1, %972 : vector<1x128xf32>
    %974 = arith.subf %971, %973 : vector<1x128xf32>
    %cst_203 = arith.constant 0.000000e+00 : f32
    %975 = vector.broadcast %cst_203 : f32 to vector<1x128xf32>
    %976 = arith.maximumf %974, %975 : vector<1x128xf32>
    %977 = arith.mulf %969, %976 : vector<1x128xf32>
    %978 = arith.subf %900, %894 : f32
    %979 = arith.subf %903, %897 : f32
    %980 = arith.mulf %978, %979 : f32
    %cst_204 = arith.constant 9.99999993E-9 : f32
    %981 = arith.maximumf %980, %cst_204 : f32
    %982 = vector.broadcast %981 : f32 to vector<1x128xf32>
    %983 = arith.divf %977, %982 : vector<1x128xf32>
    %cst_205 = arith.constant 2.500000e-01 : f32
    %984 = vector.broadcast %cst_205 : f32 to vector<1x128xf32>
    %985 = arith.cmpf ogt, %941, %984 : vector<1x128xf32>
    %cst_206 = arith.constant 2.500000e-01 : f32
    %986 = vector.broadcast %cst_206 : f32 to vector<1x128xf32>
    %987 = arith.cmpf ogt, %962, %986 : vector<1x128xf32>
    %988 = arith.andi %985, %987 : vector<1x128xi1>
    %cst_207 = arith.constant 2.500000e-01 : f32
    %989 = vector.broadcast %cst_207 : f32 to vector<1x128xf32>
    %990 = arith.cmpf ogt, %983, %989 : vector<1x128xf32>
    %991 = arith.andi %988, %990 : vector<1x128xi1>
    %cst_208 = arith.constant 0.000000e+00 : f32
    %992 = vector.broadcast %917 : f32 to vector<1x128xf32>
    %993 = vector.broadcast %cst_208 : f32 to vector<1x128xf32>
    %994 = arith.select %991, %992, %993 : vector<1x128xi1>, vector<1x128xf32>
    %995 = arith.mulf %962, %983 : vector<1x128xf32>
    %996 = math.sqrt %995 : vector<1x128xf32>
    %997 = arith.addf %941, %996 : vector<1x128xf32>
    %cst_209 = arith.constant 5.000000e-01 : f32
    %998 = vector.broadcast %cst_209 : f32 to vector<1x128xf32>
    %999 = arith.mulf %998, %997 : vector<1x128xf32>
    %1000 = arith.mulf %999, %994 : vector<1x128xf32>
    %1001 = arith.cmpf ogt, %1000, %789 : vector<1x128xf32>
    %1002 = arith.select %1001, %1000, %789 : vector<1x128xi1>, vector<1x128xf32>
    %1003 = arith.maximumf %790, %994 : vector<1x128xf32>
    %1004 = vector.broadcast %882 : f32 to vector<1x128xf32>
    %1005 = arith.select %1001, %1004, %792 : vector<1x128xi1>, vector<1x128xf32>
    %1006 = vector.broadcast %885 : f32 to vector<1x128xf32>
    %1007 = arith.select %1001, %1006, %794 : vector<1x128xi1>, vector<1x128xf32>
    %1008 = vector.broadcast %888 : f32 to vector<1x128xf32>
    %1009 = arith.select %1001, %1008, %796 : vector<1x128xi1>, vector<1x128xf32>
    %1010 = vector.broadcast %891 : f32 to vector<1x128xf32>
    %1011 = arith.select %1001, %1010, %798 : vector<1x128xi1>, vector<1x128xf32>
    %1012 = vector.broadcast %894 : f32 to vector<1x128xf32>
    %1013 = arith.select %1001, %1012, %800 : vector<1x128xi1>, vector<1x128xf32>
    %1014 = vector.broadcast %897 : f32 to vector<1x128xf32>
    %1015 = arith.select %1001, %1014, %802 : vector<1x128xi1>, vector<1x128xf32>
    %1016 = vector.broadcast %900 : f32 to vector<1x128xf32>
    %1017 = arith.select %1001, %1016, %804 : vector<1x128xi1>, vector<1x128xf32>
    %1018 = vector.broadcast %903 : f32 to vector<1x128xf32>
    %1019 = arith.select %1001, %1018, %806 : vector<1x128xi1>, vector<1x128xf32>
    %c13_i32_210 = arith.constant 13 : i32
    %1020 = arith.addi %879, %c13_i32_210 : i32
    %c0_i32_211 = arith.constant 0 : i32
    %1021 = arith.addi %1020, %c0_i32_211 : i32
    %1022 = arith.index_cast %1021 : i32 to index
    %1023 = memref.load %arg2[%1022] : memref<336xf32, #tpu.memory_space<smem>>
    %1024 = vector.broadcast %1023 : f32 to vector<1x128xf32>
    %1025 = arith.select %1001, %1024, %812 : vector<1x128xi1>, vector<1x128xf32>
    %1026 = vector.broadcast %1023 : f32 to vector<1x128xf32>
    %1027 = arith.mulf %994, %1026 : vector<1x128xf32>
    %1028 = arith.addf %815, %1027 : vector<1x128xf32>
    %c13_i32_212 = arith.constant 13 : i32
    %1029 = arith.addi %879, %c13_i32_212 : i32
    %c1_i32_213 = arith.constant 1 : i32
    %1030 = arith.addi %1029, %c1_i32_213 : i32
    %1031 = arith.index_cast %1030 : i32 to index
    %1032 = memref.load %arg2[%1031] : memref<336xf32, #tpu.memory_space<smem>>
    %1033 = vector.broadcast %1032 : f32 to vector<1x128xf32>
    %1034 = arith.select %1001, %1033, %821 : vector<1x128xi1>, vector<1x128xf32>
    %1035 = vector.broadcast %1032 : f32 to vector<1x128xf32>
    %1036 = arith.mulf %994, %1035 : vector<1x128xf32>
    %1037 = arith.addf %824, %1036 : vector<1x128xf32>
    %c13_i32_214 = arith.constant 13 : i32
    %1038 = arith.addi %879, %c13_i32_214 : i32
    %c2_i32_215 = arith.constant 2 : i32
    %1039 = arith.addi %1038, %c2_i32_215 : i32
    %1040 = arith.index_cast %1039 : i32 to index
    %1041 = memref.load %arg2[%1040] : memref<336xf32, #tpu.memory_space<smem>>
    %1042 = vector.broadcast %1041 : f32 to vector<1x128xf32>
    %1043 = arith.select %1001, %1042, %830 : vector<1x128xi1>, vector<1x128xf32>
    %1044 = vector.broadcast %1041 : f32 to vector<1x128xf32>
    %1045 = arith.mulf %994, %1044 : vector<1x128xf32>
    %1046 = arith.addf %833, %1045 : vector<1x128xf32>
    %c13_i32_216 = arith.constant 13 : i32
    %1047 = arith.addi %879, %c13_i32_216 : i32
    %c3_i32_217 = arith.constant 3 : i32
    %1048 = arith.addi %1047, %c3_i32_217 : i32
    %1049 = arith.index_cast %1048 : i32 to index
    %1050 = memref.load %arg2[%1049] : memref<336xf32, #tpu.memory_space<smem>>
    %1051 = vector.broadcast %1050 : f32 to vector<1x128xf32>
    %1052 = arith.select %1001, %1051, %839 : vector<1x128xi1>, vector<1x128xf32>
    %1053 = vector.broadcast %1050 : f32 to vector<1x128xf32>
    %1054 = arith.mulf %994, %1053 : vector<1x128xf32>
    %1055 = arith.addf %842, %1054 : vector<1x128xf32>
    %c13_i32_218 = arith.constant 13 : i32
    %1056 = arith.addi %879, %c13_i32_218 : i32
    %c4_i32_219 = arith.constant 4 : i32
    %1057 = arith.addi %1056, %c4_i32_219 : i32
    %1058 = arith.index_cast %1057 : i32 to index
    %1059 = memref.load %arg2[%1058] : memref<336xf32, #tpu.memory_space<smem>>
    %1060 = vector.broadcast %1059 : f32 to vector<1x128xf32>
    %1061 = arith.select %1001, %1060, %848 : vector<1x128xi1>, vector<1x128xf32>
    %1062 = vector.broadcast %1059 : f32 to vector<1x128xf32>
    %1063 = arith.mulf %994, %1062 : vector<1x128xf32>
    %1064 = arith.addf %851, %1063 : vector<1x128xf32>
    %c13_i32_220 = arith.constant 13 : i32
    %1065 = arith.addi %879, %c13_i32_220 : i32
    %c5_i32_221 = arith.constant 5 : i32
    %1066 = arith.addi %1065, %c5_i32_221 : i32
    %1067 = arith.index_cast %1066 : i32 to index
    %1068 = memref.load %arg2[%1067] : memref<336xf32, #tpu.memory_space<smem>>
    %1069 = vector.broadcast %1068 : f32 to vector<1x128xf32>
    %1070 = arith.select %1001, %1069, %857 : vector<1x128xi1>, vector<1x128xf32>
    %1071 = vector.broadcast %1068 : f32 to vector<1x128xf32>
    %1072 = arith.mulf %994, %1071 : vector<1x128xf32>
    %1073 = arith.addf %860, %1072 : vector<1x128xf32>
    %c13_i32_222 = arith.constant 13 : i32
    %1074 = arith.addi %879, %c13_i32_222 : i32
    %c6_i32_223 = arith.constant 6 : i32
    %1075 = arith.addi %1074, %c6_i32_223 : i32
    %1076 = arith.index_cast %1075 : i32 to index
    %1077 = memref.load %arg2[%1076] : memref<336xf32, #tpu.memory_space<smem>>
    %1078 = vector.broadcast %1077 : f32 to vector<1x128xf32>
    %1079 = arith.select %1001, %1078, %866 : vector<1x128xi1>, vector<1x128xf32>
    %1080 = vector.broadcast %1077 : f32 to vector<1x128xf32>
    %1081 = arith.mulf %994, %1080 : vector<1x128xf32>
    %1082 = arith.addf %869, %1081 : vector<1x128xf32>
    %c13_i32_224 = arith.constant 13 : i32
    %1083 = arith.addi %879, %c13_i32_224 : i32
    %c7_i32_225 = arith.constant 7 : i32
    %1084 = arith.addi %1083, %c7_i32_225 : i32
    %1085 = arith.index_cast %1084 : i32 to index
    %1086 = memref.load %arg2[%1085] : memref<336xf32, #tpu.memory_space<smem>>
    %1087 = vector.broadcast %1086 : f32 to vector<1x128xf32>
    %1088 = arith.select %1001, %1087, %875 : vector<1x128xi1>, vector<1x128xf32>
    %1089 = vector.broadcast %1086 : f32 to vector<1x128xf32>
    %1090 = arith.mulf %994, %1089 : vector<1x128xf32>
    %1091 = arith.addf %878, %1090 : vector<1x128xf32>
    %c105_i32 = arith.constant 105 : i32
    %1092 = arith.addi %24, %c105_i32 : i32
    %c0_i32_226 = arith.constant 0 : i32
    %1093 = arith.addi %1092, %c0_i32_226 : i32
    %1094 = arith.index_cast %1093 : i32 to index
    %1095 = memref.load %arg2[%1094] : memref<336xf32, #tpu.memory_space<smem>>
    %c1_i32_227 = arith.constant 1 : i32
    %1096 = arith.addi %1092, %c1_i32_227 : i32
    %1097 = arith.index_cast %1096 : i32 to index
    %1098 = memref.load %arg2[%1097] : memref<336xf32, #tpu.memory_space<smem>>
    %c2_i32_228 = arith.constant 2 : i32
    %1099 = arith.addi %1092, %c2_i32_228 : i32
    %1100 = arith.index_cast %1099 : i32 to index
    %1101 = memref.load %arg2[%1100] : memref<336xf32, #tpu.memory_space<smem>>
    %c3_i32_229 = arith.constant 3 : i32
    %1102 = arith.addi %1092, %c3_i32_229 : i32
    %1103 = arith.index_cast %1102 : i32 to index
    %1104 = memref.load %arg2[%1103] : memref<336xf32, #tpu.memory_space<smem>>
    %c4_i32_230 = arith.constant 4 : i32
    %1105 = arith.addi %1092, %c4_i32_230 : i32
    %1106 = arith.index_cast %1105 : i32 to index
    %1107 = memref.load %arg2[%1106] : memref<336xf32, #tpu.memory_space<smem>>
    %c5_i32_231 = arith.constant 5 : i32
    %1108 = arith.addi %1092, %c5_i32_231 : i32
    %1109 = arith.index_cast %1108 : i32 to index
    %1110 = memref.load %arg2[%1109] : memref<336xf32, #tpu.memory_space<smem>>
    %c6_i32_232 = arith.constant 6 : i32
    %1111 = arith.addi %1092, %c6_i32_232 : i32
    %1112 = arith.index_cast %1111 : i32 to index
    %1113 = memref.load %arg2[%1112] : memref<336xf32, #tpu.memory_space<smem>>
    %c7_i32_233 = arith.constant 7 : i32
    %1114 = arith.addi %1092, %c7_i32_233 : i32
    %1115 = arith.index_cast %1114 : i32 to index
    %1116 = memref.load %arg2[%1115] : memref<336xf32, #tpu.memory_space<smem>>
    %c8_i32_234 = arith.constant 8 : i32
    %1117 = arith.addi %1092, %c8_i32_234 : i32
    %1118 = arith.index_cast %1117 : i32 to index
    %1119 = memref.load %arg2[%1118] : memref<336xf32, #tpu.memory_space<smem>>
    %c9_i32_235 = arith.constant 9 : i32
    %1120 = arith.addi %1092, %c9_i32_235 : i32
    %1121 = arith.index_cast %1120 : i32 to index
    %1122 = memref.load %arg2[%1121] : memref<336xf32, #tpu.memory_space<smem>>
    %c10_i32_236 = arith.constant 10 : i32
    %1123 = arith.addi %1092, %c10_i32_236 : i32
    %1124 = arith.index_cast %1123 : i32 to index
    %1125 = memref.load %arg2[%1124] : memref<336xf32, #tpu.memory_space<smem>>
    %c11_i32_237 = arith.constant 11 : i32
    %1126 = arith.addi %1092, %c11_i32_237 : i32
    %1127 = arith.index_cast %1126 : i32 to index
    %1128 = memref.load %arg2[%1127] : memref<336xf32, #tpu.memory_space<smem>>
    %cst_238 = arith.constant 0.000000e+00 : f32
    %1129 = arith.cmpf oge, %1095, %cst_238 : f32
    %cst_239 = arith.constant 1.000000e+00 : f32
    %cst_240 = arith.constant 0.000000e+00 : f32
    %1130 = arith.select %1129, %cst_239, %cst_240 : f32
    %1131 = vector.broadcast %1125 : f32 to vector<1x128xf32>
    %1132 = arith.minimumf %7, %1131 : vector<1x128xf32>
    %1133 = vector.broadcast %1119 : f32 to vector<1x128xf32>
    %1134 = arith.maximumf %3, %1133 : vector<1x128xf32>
    %1135 = arith.subf %1132, %1134 : vector<1x128xf32>
    %cst_241 = arith.constant 0.000000e+00 : f32
    %1136 = vector.broadcast %cst_241 : f32 to vector<1x128xf32>
    %1137 = arith.maximumf %1135, %1136 : vector<1x128xf32>
    %1138 = vector.broadcast %1128 : f32 to vector<1x128xf32>
    %1139 = arith.minimumf %5, %1138 : vector<1x128xf32>
    %1140 = vector.broadcast %1122 : f32 to vector<1x128xf32>
    %1141 = arith.maximumf %1, %1140 : vector<1x128xf32>
    %1142 = arith.subf %1139, %1141 : vector<1x128xf32>
    %cst_242 = arith.constant 0.000000e+00 : f32
    %1143 = vector.broadcast %cst_242 : f32 to vector<1x128xf32>
    %1144 = arith.maximumf %1142, %1143 : vector<1x128xf32>
    %1145 = arith.mulf %1137, %1144 : vector<1x128xf32>
    %1146 = arith.subf %1125, %1119 : f32
    %1147 = arith.subf %1128, %1122 : f32
    %1148 = arith.mulf %1146, %1147 : f32
    %1149 = vector.broadcast %1148 : f32 to vector<1x128xf32>
    %1150 = arith.addf %16, %1149 : vector<1x128xf32>
    %1151 = arith.subf %1150, %1145 : vector<1x128xf32>
    %cst_243 = arith.constant 9.99999993E-9 : f32
    %1152 = vector.broadcast %cst_243 : f32 to vector<1x128xf32>
    %1153 = arith.maximumf %1151, %1152 : vector<1x128xf32>
    %1154 = arith.divf %1145, %1153 : vector<1x128xf32>
    %1155 = vector.broadcast %1101 : f32 to vector<1x128xf32>
    %1156 = arith.minimumf %7, %1155 : vector<1x128xf32>
    %1157 = vector.broadcast %1095 : f32 to vector<1x128xf32>
    %1158 = arith.maximumf %3, %1157 : vector<1x128xf32>
    %1159 = arith.subf %1156, %1158 : vector<1x128xf32>
    %cst_244 = arith.constant 0.000000e+00 : f32
    %1160 = vector.broadcast %cst_244 : f32 to vector<1x128xf32>
    %1161 = arith.maximumf %1159, %1160 : vector<1x128xf32>
    %1162 = vector.broadcast %1104 : f32 to vector<1x128xf32>
    %1163 = arith.minimumf %5, %1162 : vector<1x128xf32>
    %1164 = vector.broadcast %1098 : f32 to vector<1x128xf32>
    %1165 = arith.maximumf %1, %1164 : vector<1x128xf32>
    %1166 = arith.subf %1163, %1165 : vector<1x128xf32>
    %cst_245 = arith.constant 0.000000e+00 : f32
    %1167 = vector.broadcast %cst_245 : f32 to vector<1x128xf32>
    %1168 = arith.maximumf %1166, %1167 : vector<1x128xf32>
    %1169 = arith.mulf %1161, %1168 : vector<1x128xf32>
    %1170 = arith.subf %1101, %1095 : f32
    %1171 = arith.subf %1104, %1098 : f32
    %1172 = arith.mulf %1170, %1171 : f32
    %cst_246 = arith.constant 9.99999993E-9 : f32
    %1173 = arith.maximumf %1172, %cst_246 : f32
    %1174 = vector.broadcast %1173 : f32 to vector<1x128xf32>
    %1175 = arith.divf %1169, %1174 : vector<1x128xf32>
    %1176 = vector.broadcast %1113 : f32 to vector<1x128xf32>
    %1177 = arith.minimumf %7, %1176 : vector<1x128xf32>
    %1178 = vector.broadcast %1107 : f32 to vector<1x128xf32>
    %1179 = arith.maximumf %3, %1178 : vector<1x128xf32>
    %1180 = arith.subf %1177, %1179 : vector<1x128xf32>
    %cst_247 = arith.constant 0.000000e+00 : f32
    %1181 = vector.broadcast %cst_247 : f32 to vector<1x128xf32>
    %1182 = arith.maximumf %1180, %1181 : vector<1x128xf32>
    %1183 = vector.broadcast %1116 : f32 to vector<1x128xf32>
    %1184 = arith.minimumf %5, %1183 : vector<1x128xf32>
    %1185 = vector.broadcast %1110 : f32 to vector<1x128xf32>
    %1186 = arith.maximumf %1, %1185 : vector<1x128xf32>
    %1187 = arith.subf %1184, %1186 : vector<1x128xf32>
    %cst_248 = arith.constant 0.000000e+00 : f32
    %1188 = vector.broadcast %cst_248 : f32 to vector<1x128xf32>
    %1189 = arith.maximumf %1187, %1188 : vector<1x128xf32>
    %1190 = arith.mulf %1182, %1189 : vector<1x128xf32>
    %1191 = arith.subf %1113, %1107 : f32
    %1192 = arith.subf %1116, %1110 : f32
    %1193 = arith.mulf %1191, %1192 : f32
    %cst_249 = arith.constant 9.99999993E-9 : f32
    %1194 = arith.maximumf %1193, %cst_249 : f32
    %1195 = vector.broadcast %1194 : f32 to vector<1x128xf32>
    %1196 = arith.divf %1190, %1195 : vector<1x128xf32>
    %cst_250 = arith.constant 2.500000e-01 : f32
    %1197 = vector.broadcast %cst_250 : f32 to vector<1x128xf32>
    %1198 = arith.cmpf ogt, %1154, %1197 : vector<1x128xf32>
    %cst_251 = arith.constant 2.500000e-01 : f32
    %1199 = vector.broadcast %cst_251 : f32 to vector<1x128xf32>
    %1200 = arith.cmpf ogt, %1175, %1199 : vector<1x128xf32>
    %1201 = arith.andi %1198, %1200 : vector<1x128xi1>
    %cst_252 = arith.constant 2.500000e-01 : f32
    %1202 = vector.broadcast %cst_252 : f32 to vector<1x128xf32>
    %1203 = arith.cmpf ogt, %1196, %1202 : vector<1x128xf32>
    %1204 = arith.andi %1201, %1203 : vector<1x128xi1>
    %cst_253 = arith.constant 0.000000e+00 : f32
    %1205 = vector.broadcast %1130 : f32 to vector<1x128xf32>
    %1206 = vector.broadcast %cst_253 : f32 to vector<1x128xf32>
    %1207 = arith.select %1204, %1205, %1206 : vector<1x128xi1>, vector<1x128xf32>
    %1208 = arith.mulf %1175, %1196 : vector<1x128xf32>
    %1209 = math.sqrt %1208 : vector<1x128xf32>
    %1210 = arith.addf %1154, %1209 : vector<1x128xf32>
    %cst_254 = arith.constant 5.000000e-01 : f32
    %1211 = vector.broadcast %cst_254 : f32 to vector<1x128xf32>
    %1212 = arith.mulf %1211, %1210 : vector<1x128xf32>
    %1213 = arith.mulf %1212, %1207 : vector<1x128xf32>
    %1214 = arith.cmpf ogt, %1213, %1002 : vector<1x128xf32>
    %1215 = arith.select %1214, %1213, %1002 : vector<1x128xi1>, vector<1x128xf32>
    %1216 = arith.maximumf %1003, %1207 : vector<1x128xf32>
    %1217 = vector.broadcast %1095 : f32 to vector<1x128xf32>
    %1218 = arith.select %1214, %1217, %1005 : vector<1x128xi1>, vector<1x128xf32>
    %1219 = vector.broadcast %1098 : f32 to vector<1x128xf32>
    %1220 = arith.select %1214, %1219, %1007 : vector<1x128xi1>, vector<1x128xf32>
    %1221 = vector.broadcast %1101 : f32 to vector<1x128xf32>
    %1222 = arith.select %1214, %1221, %1009 : vector<1x128xi1>, vector<1x128xf32>
    %1223 = vector.broadcast %1104 : f32 to vector<1x128xf32>
    %1224 = arith.select %1214, %1223, %1011 : vector<1x128xi1>, vector<1x128xf32>
    %1225 = vector.broadcast %1107 : f32 to vector<1x128xf32>
    %1226 = arith.select %1214, %1225, %1013 : vector<1x128xi1>, vector<1x128xf32>
    %1227 = vector.broadcast %1110 : f32 to vector<1x128xf32>
    %1228 = arith.select %1214, %1227, %1015 : vector<1x128xi1>, vector<1x128xf32>
    %1229 = vector.broadcast %1113 : f32 to vector<1x128xf32>
    %1230 = arith.select %1214, %1229, %1017 : vector<1x128xi1>, vector<1x128xf32>
    %1231 = vector.broadcast %1116 : f32 to vector<1x128xf32>
    %1232 = arith.select %1214, %1231, %1019 : vector<1x128xi1>, vector<1x128xf32>
    %c13_i32_255 = arith.constant 13 : i32
    %1233 = arith.addi %1092, %c13_i32_255 : i32
    %c0_i32_256 = arith.constant 0 : i32
    %1234 = arith.addi %1233, %c0_i32_256 : i32
    %1235 = arith.index_cast %1234 : i32 to index
    %1236 = memref.load %arg2[%1235] : memref<336xf32, #tpu.memory_space<smem>>
    %1237 = vector.broadcast %1236 : f32 to vector<1x128xf32>
    %1238 = arith.select %1214, %1237, %1025 : vector<1x128xi1>, vector<1x128xf32>
    %1239 = vector.broadcast %1236 : f32 to vector<1x128xf32>
    %1240 = arith.mulf %1207, %1239 : vector<1x128xf32>
    %1241 = arith.addf %1028, %1240 : vector<1x128xf32>
    %c13_i32_257 = arith.constant 13 : i32
    %1242 = arith.addi %1092, %c13_i32_257 : i32
    %c1_i32_258 = arith.constant 1 : i32
    %1243 = arith.addi %1242, %c1_i32_258 : i32
    %1244 = arith.index_cast %1243 : i32 to index
    %1245 = memref.load %arg2[%1244] : memref<336xf32, #tpu.memory_space<smem>>
    %1246 = vector.broadcast %1245 : f32 to vector<1x128xf32>
    %1247 = arith.select %1214, %1246, %1034 : vector<1x128xi1>, vector<1x128xf32>
    %1248 = vector.broadcast %1245 : f32 to vector<1x128xf32>
    %1249 = arith.mulf %1207, %1248 : vector<1x128xf32>
    %1250 = arith.addf %1037, %1249 : vector<1x128xf32>
    %c13_i32_259 = arith.constant 13 : i32
    %1251 = arith.addi %1092, %c13_i32_259 : i32
    %c2_i32_260 = arith.constant 2 : i32
    %1252 = arith.addi %1251, %c2_i32_260 : i32
    %1253 = arith.index_cast %1252 : i32 to index
    %1254 = memref.load %arg2[%1253] : memref<336xf32, #tpu.memory_space<smem>>
    %1255 = vector.broadcast %1254 : f32 to vector<1x128xf32>
    %1256 = arith.select %1214, %1255, %1043 : vector<1x128xi1>, vector<1x128xf32>
    %1257 = vector.broadcast %1254 : f32 to vector<1x128xf32>
    %1258 = arith.mulf %1207, %1257 : vector<1x128xf32>
    %1259 = arith.addf %1046, %1258 : vector<1x128xf32>
    %c13_i32_261 = arith.constant 13 : i32
    %1260 = arith.addi %1092, %c13_i32_261 : i32
    %c3_i32_262 = arith.constant 3 : i32
    %1261 = arith.addi %1260, %c3_i32_262 : i32
    %1262 = arith.index_cast %1261 : i32 to index
    %1263 = memref.load %arg2[%1262] : memref<336xf32, #tpu.memory_space<smem>>
    %1264 = vector.broadcast %1263 : f32 to vector<1x128xf32>
    %1265 = arith.select %1214, %1264, %1052 : vector<1x128xi1>, vector<1x128xf32>
    %1266 = vector.broadcast %1263 : f32 to vector<1x128xf32>
    %1267 = arith.mulf %1207, %1266 : vector<1x128xf32>
    %1268 = arith.addf %1055, %1267 : vector<1x128xf32>
    %c13_i32_263 = arith.constant 13 : i32
    %1269 = arith.addi %1092, %c13_i32_263 : i32
    %c4_i32_264 = arith.constant 4 : i32
    %1270 = arith.addi %1269, %c4_i32_264 : i32
    %1271 = arith.index_cast %1270 : i32 to index
    %1272 = memref.load %arg2[%1271] : memref<336xf32, #tpu.memory_space<smem>>
    %1273 = vector.broadcast %1272 : f32 to vector<1x128xf32>
    %1274 = arith.select %1214, %1273, %1061 : vector<1x128xi1>, vector<1x128xf32>
    %1275 = vector.broadcast %1272 : f32 to vector<1x128xf32>
    %1276 = arith.mulf %1207, %1275 : vector<1x128xf32>
    %1277 = arith.addf %1064, %1276 : vector<1x128xf32>
    %c13_i32_265 = arith.constant 13 : i32
    %1278 = arith.addi %1092, %c13_i32_265 : i32
    %c5_i32_266 = arith.constant 5 : i32
    %1279 = arith.addi %1278, %c5_i32_266 : i32
    %1280 = arith.index_cast %1279 : i32 to index
    %1281 = memref.load %arg2[%1280] : memref<336xf32, #tpu.memory_space<smem>>
    %1282 = vector.broadcast %1281 : f32 to vector<1x128xf32>
    %1283 = arith.select %1214, %1282, %1070 : vector<1x128xi1>, vector<1x128xf32>
    %1284 = vector.broadcast %1281 : f32 to vector<1x128xf32>
    %1285 = arith.mulf %1207, %1284 : vector<1x128xf32>
    %1286 = arith.addf %1073, %1285 : vector<1x128xf32>
    %c13_i32_267 = arith.constant 13 : i32
    %1287 = arith.addi %1092, %c13_i32_267 : i32
    %c6_i32_268 = arith.constant 6 : i32
    %1288 = arith.addi %1287, %c6_i32_268 : i32
    %1289 = arith.index_cast %1288 : i32 to index
    %1290 = memref.load %arg2[%1289] : memref<336xf32, #tpu.memory_space<smem>>
    %1291 = vector.broadcast %1290 : f32 to vector<1x128xf32>
    %1292 = arith.select %1214, %1291, %1079 : vector<1x128xi1>, vector<1x128xf32>
    %1293 = vector.broadcast %1290 : f32 to vector<1x128xf32>
    %1294 = arith.mulf %1207, %1293 : vector<1x128xf32>
    %1295 = arith.addf %1082, %1294 : vector<1x128xf32>
    %c13_i32_269 = arith.constant 13 : i32
    %1296 = arith.addi %1092, %c13_i32_269 : i32
    %c7_i32_270 = arith.constant 7 : i32
    %1297 = arith.addi %1296, %c7_i32_270 : i32
    %1298 = arith.index_cast %1297 : i32 to index
    %1299 = memref.load %arg2[%1298] : memref<336xf32, #tpu.memory_space<smem>>
    %1300 = vector.broadcast %1299 : f32 to vector<1x128xf32>
    %1301 = arith.select %1214, %1300, %1088 : vector<1x128xi1>, vector<1x128xf32>
    %1302 = vector.broadcast %1299 : f32 to vector<1x128xf32>
    %1303 = arith.mulf %1207, %1302 : vector<1x128xf32>
    %1304 = arith.addf %1091, %1303 : vector<1x128xf32>
    %c126_i32 = arith.constant 126 : i32
    %1305 = arith.addi %24, %c126_i32 : i32
    %c0_i32_271 = arith.constant 0 : i32
    %1306 = arith.addi %1305, %c0_i32_271 : i32
    %1307 = arith.index_cast %1306 : i32 to index
    %1308 = memref.load %arg2[%1307] : memref<336xf32, #tpu.memory_space<smem>>
    %c1_i32_272 = arith.constant 1 : i32
    %1309 = arith.addi %1305, %c1_i32_272 : i32
    %1310 = arith.index_cast %1309 : i32 to index
    %1311 = memref.load %arg2[%1310] : memref<336xf32, #tpu.memory_space<smem>>
    %c2_i32_273 = arith.constant 2 : i32
    %1312 = arith.addi %1305, %c2_i32_273 : i32
    %1313 = arith.index_cast %1312 : i32 to index
    %1314 = memref.load %arg2[%1313] : memref<336xf32, #tpu.memory_space<smem>>
    %c3_i32_274 = arith.constant 3 : i32
    %1315 = arith.addi %1305, %c3_i32_274 : i32
    %1316 = arith.index_cast %1315 : i32 to index
    %1317 = memref.load %arg2[%1316] : memref<336xf32, #tpu.memory_space<smem>>
    %c4_i32_275 = arith.constant 4 : i32
    %1318 = arith.addi %1305, %c4_i32_275 : i32
    %1319 = arith.index_cast %1318 : i32 to index
    %1320 = memref.load %arg2[%1319] : memref<336xf32, #tpu.memory_space<smem>>
    %c5_i32_276 = arith.constant 5 : i32
    %1321 = arith.addi %1305, %c5_i32_276 : i32
    %1322 = arith.index_cast %1321 : i32 to index
    %1323 = memref.load %arg2[%1322] : memref<336xf32, #tpu.memory_space<smem>>
    %c6_i32_277 = arith.constant 6 : i32
    %1324 = arith.addi %1305, %c6_i32_277 : i32
    %1325 = arith.index_cast %1324 : i32 to index
    %1326 = memref.load %arg2[%1325] : memref<336xf32, #tpu.memory_space<smem>>
    %c7_i32_278 = arith.constant 7 : i32
    %1327 = arith.addi %1305, %c7_i32_278 : i32
    %1328 = arith.index_cast %1327 : i32 to index
    %1329 = memref.load %arg2[%1328] : memref<336xf32, #tpu.memory_space<smem>>
    %c8_i32_279 = arith.constant 8 : i32
    %1330 = arith.addi %1305, %c8_i32_279 : i32
    %1331 = arith.index_cast %1330 : i32 to index
    %1332 = memref.load %arg2[%1331] : memref<336xf32, #tpu.memory_space<smem>>
    %c9_i32_280 = arith.constant 9 : i32
    %1333 = arith.addi %1305, %c9_i32_280 : i32
    %1334 = arith.index_cast %1333 : i32 to index
    %1335 = memref.load %arg2[%1334] : memref<336xf32, #tpu.memory_space<smem>>
    %c10_i32_281 = arith.constant 10 : i32
    %1336 = arith.addi %1305, %c10_i32_281 : i32
    %1337 = arith.index_cast %1336 : i32 to index
    %1338 = memref.load %arg2[%1337] : memref<336xf32, #tpu.memory_space<smem>>
    %c11_i32_282 = arith.constant 11 : i32
    %1339 = arith.addi %1305, %c11_i32_282 : i32
    %1340 = arith.index_cast %1339 : i32 to index
    %1341 = memref.load %arg2[%1340] : memref<336xf32, #tpu.memory_space<smem>>
    %cst_283 = arith.constant 0.000000e+00 : f32
    %1342 = arith.cmpf oge, %1308, %cst_283 : f32
    %cst_284 = arith.constant 1.000000e+00 : f32
    %cst_285 = arith.constant 0.000000e+00 : f32
    %1343 = arith.select %1342, %cst_284, %cst_285 : f32
    %1344 = vector.broadcast %1338 : f32 to vector<1x128xf32>
    %1345 = arith.minimumf %7, %1344 : vector<1x128xf32>
    %1346 = vector.broadcast %1332 : f32 to vector<1x128xf32>
    %1347 = arith.maximumf %3, %1346 : vector<1x128xf32>
    %1348 = arith.subf %1345, %1347 : vector<1x128xf32>
    %cst_286 = arith.constant 0.000000e+00 : f32
    %1349 = vector.broadcast %cst_286 : f32 to vector<1x128xf32>
    %1350 = arith.maximumf %1348, %1349 : vector<1x128xf32>
    %1351 = vector.broadcast %1341 : f32 to vector<1x128xf32>
    %1352 = arith.minimumf %5, %1351 : vector<1x128xf32>
    %1353 = vector.broadcast %1335 : f32 to vector<1x128xf32>
    %1354 = arith.maximumf %1, %1353 : vector<1x128xf32>
    %1355 = arith.subf %1352, %1354 : vector<1x128xf32>
    %cst_287 = arith.constant 0.000000e+00 : f32
    %1356 = vector.broadcast %cst_287 : f32 to vector<1x128xf32>
    %1357 = arith.maximumf %1355, %1356 : vector<1x128xf32>
    %1358 = arith.mulf %1350, %1357 : vector<1x128xf32>
    %1359 = arith.subf %1338, %1332 : f32
    %1360 = arith.subf %1341, %1335 : f32
    %1361 = arith.mulf %1359, %1360 : f32
    %1362 = vector.broadcast %1361 : f32 to vector<1x128xf32>
    %1363 = arith.addf %16, %1362 : vector<1x128xf32>
    %1364 = arith.subf %1363, %1358 : vector<1x128xf32>
    %cst_288 = arith.constant 9.99999993E-9 : f32
    %1365 = vector.broadcast %cst_288 : f32 to vector<1x128xf32>
    %1366 = arith.maximumf %1364, %1365 : vector<1x128xf32>
    %1367 = arith.divf %1358, %1366 : vector<1x128xf32>
    %1368 = vector.broadcast %1314 : f32 to vector<1x128xf32>
    %1369 = arith.minimumf %7, %1368 : vector<1x128xf32>
    %1370 = vector.broadcast %1308 : f32 to vector<1x128xf32>
    %1371 = arith.maximumf %3, %1370 : vector<1x128xf32>
    %1372 = arith.subf %1369, %1371 : vector<1x128xf32>
    %cst_289 = arith.constant 0.000000e+00 : f32
    %1373 = vector.broadcast %cst_289 : f32 to vector<1x128xf32>
    %1374 = arith.maximumf %1372, %1373 : vector<1x128xf32>
    %1375 = vector.broadcast %1317 : f32 to vector<1x128xf32>
    %1376 = arith.minimumf %5, %1375 : vector<1x128xf32>
    %1377 = vector.broadcast %1311 : f32 to vector<1x128xf32>
    %1378 = arith.maximumf %1, %1377 : vector<1x128xf32>
    %1379 = arith.subf %1376, %1378 : vector<1x128xf32>
    %cst_290 = arith.constant 0.000000e+00 : f32
    %1380 = vector.broadcast %cst_290 : f32 to vector<1x128xf32>
    %1381 = arith.maximumf %1379, %1380 : vector<1x128xf32>
    %1382 = arith.mulf %1374, %1381 : vector<1x128xf32>
    %1383 = arith.subf %1314, %1308 : f32
    %1384 = arith.subf %1317, %1311 : f32
    %1385 = arith.mulf %1383, %1384 : f32
    %cst_291 = arith.constant 9.99999993E-9 : f32
    %1386 = arith.maximumf %1385, %cst_291 : f32
    %1387 = vector.broadcast %1386 : f32 to vector<1x128xf32>
    %1388 = arith.divf %1382, %1387 : vector<1x128xf32>
    %1389 = vector.broadcast %1326 : f32 to vector<1x128xf32>
    %1390 = arith.minimumf %7, %1389 : vector<1x128xf32>
    %1391 = vector.broadcast %1320 : f32 to vector<1x128xf32>
    %1392 = arith.maximumf %3, %1391 : vector<1x128xf32>
    %1393 = arith.subf %1390, %1392 : vector<1x128xf32>
    %cst_292 = arith.constant 0.000000e+00 : f32
    %1394 = vector.broadcast %cst_292 : f32 to vector<1x128xf32>
    %1395 = arith.maximumf %1393, %1394 : vector<1x128xf32>
    %1396 = vector.broadcast %1329 : f32 to vector<1x128xf32>
    %1397 = arith.minimumf %5, %1396 : vector<1x128xf32>
    %1398 = vector.broadcast %1323 : f32 to vector<1x128xf32>
    %1399 = arith.maximumf %1, %1398 : vector<1x128xf32>
    %1400 = arith.subf %1397, %1399 : vector<1x128xf32>
    %cst_293 = arith.constant 0.000000e+00 : f32
    %1401 = vector.broadcast %cst_293 : f32 to vector<1x128xf32>
    %1402 = arith.maximumf %1400, %1401 : vector<1x128xf32>
    %1403 = arith.mulf %1395, %1402 : vector<1x128xf32>
    %1404 = arith.subf %1326, %1320 : f32
    %1405 = arith.subf %1329, %1323 : f32
    %1406 = arith.mulf %1404, %1405 : f32
    %cst_294 = arith.constant 9.99999993E-9 : f32
    %1407 = arith.maximumf %1406, %cst_294 : f32
    %1408 = vector.broadcast %1407 : f32 to vector<1x128xf32>
    %1409 = arith.divf %1403, %1408 : vector<1x128xf32>
    %cst_295 = arith.constant 2.500000e-01 : f32
    %1410 = vector.broadcast %cst_295 : f32 to vector<1x128xf32>
    %1411 = arith.cmpf ogt, %1367, %1410 : vector<1x128xf32>
    %cst_296 = arith.constant 2.500000e-01 : f32
    %1412 = vector.broadcast %cst_296 : f32 to vector<1x128xf32>
    %1413 = arith.cmpf ogt, %1388, %1412 : vector<1x128xf32>
    %1414 = arith.andi %1411, %1413 : vector<1x128xi1>
    %cst_297 = arith.constant 2.500000e-01 : f32
    %1415 = vector.broadcast %cst_297 : f32 to vector<1x128xf32>
    %1416 = arith.cmpf ogt, %1409, %1415 : vector<1x128xf32>
    %1417 = arith.andi %1414, %1416 : vector<1x128xi1>
    %cst_298 = arith.constant 0.000000e+00 : f32
    %1418 = vector.broadcast %1343 : f32 to vector<1x128xf32>
    %1419 = vector.broadcast %cst_298 : f32 to vector<1x128xf32>
    %1420 = arith.select %1417, %1418, %1419 : vector<1x128xi1>, vector<1x128xf32>
    %1421 = arith.mulf %1388, %1409 : vector<1x128xf32>
    %1422 = math.sqrt %1421 : vector<1x128xf32>
    %1423 = arith.addf %1367, %1422 : vector<1x128xf32>
    %cst_299 = arith.constant 5.000000e-01 : f32
    %1424 = vector.broadcast %cst_299 : f32 to vector<1x128xf32>
    %1425 = arith.mulf %1424, %1423 : vector<1x128xf32>
    %1426 = arith.mulf %1425, %1420 : vector<1x128xf32>
    %1427 = arith.cmpf ogt, %1426, %1215 : vector<1x128xf32>
    %1428 = arith.select %1427, %1426, %1215 : vector<1x128xi1>, vector<1x128xf32>
    %1429 = arith.maximumf %1216, %1420 : vector<1x128xf32>
    %1430 = vector.broadcast %1308 : f32 to vector<1x128xf32>
    %1431 = arith.select %1427, %1430, %1218 : vector<1x128xi1>, vector<1x128xf32>
    %1432 = vector.broadcast %1311 : f32 to vector<1x128xf32>
    %1433 = arith.select %1427, %1432, %1220 : vector<1x128xi1>, vector<1x128xf32>
    %1434 = vector.broadcast %1314 : f32 to vector<1x128xf32>
    %1435 = arith.select %1427, %1434, %1222 : vector<1x128xi1>, vector<1x128xf32>
    %1436 = vector.broadcast %1317 : f32 to vector<1x128xf32>
    %1437 = arith.select %1427, %1436, %1224 : vector<1x128xi1>, vector<1x128xf32>
    %1438 = vector.broadcast %1320 : f32 to vector<1x128xf32>
    %1439 = arith.select %1427, %1438, %1226 : vector<1x128xi1>, vector<1x128xf32>
    %1440 = vector.broadcast %1323 : f32 to vector<1x128xf32>
    %1441 = arith.select %1427, %1440, %1228 : vector<1x128xi1>, vector<1x128xf32>
    %1442 = vector.broadcast %1326 : f32 to vector<1x128xf32>
    %1443 = arith.select %1427, %1442, %1230 : vector<1x128xi1>, vector<1x128xf32>
    %1444 = vector.broadcast %1329 : f32 to vector<1x128xf32>
    %1445 = arith.select %1427, %1444, %1232 : vector<1x128xi1>, vector<1x128xf32>
    %c13_i32_300 = arith.constant 13 : i32
    %1446 = arith.addi %1305, %c13_i32_300 : i32
    %c0_i32_301 = arith.constant 0 : i32
    %1447 = arith.addi %1446, %c0_i32_301 : i32
    %1448 = arith.index_cast %1447 : i32 to index
    %1449 = memref.load %arg2[%1448] : memref<336xf32, #tpu.memory_space<smem>>
    %1450 = vector.broadcast %1449 : f32 to vector<1x128xf32>
    %1451 = arith.select %1427, %1450, %1238 : vector<1x128xi1>, vector<1x128xf32>
    %1452 = vector.broadcast %1449 : f32 to vector<1x128xf32>
    %1453 = arith.mulf %1420, %1452 : vector<1x128xf32>
    %1454 = arith.addf %1241, %1453 : vector<1x128xf32>
    %c13_i32_302 = arith.constant 13 : i32
    %1455 = arith.addi %1305, %c13_i32_302 : i32
    %c1_i32_303 = arith.constant 1 : i32
    %1456 = arith.addi %1455, %c1_i32_303 : i32
    %1457 = arith.index_cast %1456 : i32 to index
    %1458 = memref.load %arg2[%1457] : memref<336xf32, #tpu.memory_space<smem>>
    %1459 = vector.broadcast %1458 : f32 to vector<1x128xf32>
    %1460 = arith.select %1427, %1459, %1247 : vector<1x128xi1>, vector<1x128xf32>
    %1461 = vector.broadcast %1458 : f32 to vector<1x128xf32>
    %1462 = arith.mulf %1420, %1461 : vector<1x128xf32>
    %1463 = arith.addf %1250, %1462 : vector<1x128xf32>
    %c13_i32_304 = arith.constant 13 : i32
    %1464 = arith.addi %1305, %c13_i32_304 : i32
    %c2_i32_305 = arith.constant 2 : i32
    %1465 = arith.addi %1464, %c2_i32_305 : i32
    %1466 = arith.index_cast %1465 : i32 to index
    %1467 = memref.load %arg2[%1466] : memref<336xf32, #tpu.memory_space<smem>>
    %1468 = vector.broadcast %1467 : f32 to vector<1x128xf32>
    %1469 = arith.select %1427, %1468, %1256 : vector<1x128xi1>, vector<1x128xf32>
    %1470 = vector.broadcast %1467 : f32 to vector<1x128xf32>
    %1471 = arith.mulf %1420, %1470 : vector<1x128xf32>
    %1472 = arith.addf %1259, %1471 : vector<1x128xf32>
    %c13_i32_306 = arith.constant 13 : i32
    %1473 = arith.addi %1305, %c13_i32_306 : i32
    %c3_i32_307 = arith.constant 3 : i32
    %1474 = arith.addi %1473, %c3_i32_307 : i32
    %1475 = arith.index_cast %1474 : i32 to index
    %1476 = memref.load %arg2[%1475] : memref<336xf32, #tpu.memory_space<smem>>
    %1477 = vector.broadcast %1476 : f32 to vector<1x128xf32>
    %1478 = arith.select %1427, %1477, %1265 : vector<1x128xi1>, vector<1x128xf32>
    %1479 = vector.broadcast %1476 : f32 to vector<1x128xf32>
    %1480 = arith.mulf %1420, %1479 : vector<1x128xf32>
    %1481 = arith.addf %1268, %1480 : vector<1x128xf32>
    %c13_i32_308 = arith.constant 13 : i32
    %1482 = arith.addi %1305, %c13_i32_308 : i32
    %c4_i32_309 = arith.constant 4 : i32
    %1483 = arith.addi %1482, %c4_i32_309 : i32
    %1484 = arith.index_cast %1483 : i32 to index
    %1485 = memref.load %arg2[%1484] : memref<336xf32, #tpu.memory_space<smem>>
    %1486 = vector.broadcast %1485 : f32 to vector<1x128xf32>
    %1487 = arith.select %1427, %1486, %1274 : vector<1x128xi1>, vector<1x128xf32>
    %1488 = vector.broadcast %1485 : f32 to vector<1x128xf32>
    %1489 = arith.mulf %1420, %1488 : vector<1x128xf32>
    %1490 = arith.addf %1277, %1489 : vector<1x128xf32>
    %c13_i32_310 = arith.constant 13 : i32
    %1491 = arith.addi %1305, %c13_i32_310 : i32
    %c5_i32_311 = arith.constant 5 : i32
    %1492 = arith.addi %1491, %c5_i32_311 : i32
    %1493 = arith.index_cast %1492 : i32 to index
    %1494 = memref.load %arg2[%1493] : memref<336xf32, #tpu.memory_space<smem>>
    %1495 = vector.broadcast %1494 : f32 to vector<1x128xf32>
    %1496 = arith.select %1427, %1495, %1283 : vector<1x128xi1>, vector<1x128xf32>
    %1497 = vector.broadcast %1494 : f32 to vector<1x128xf32>
    %1498 = arith.mulf %1420, %1497 : vector<1x128xf32>
    %1499 = arith.addf %1286, %1498 : vector<1x128xf32>
    %c13_i32_312 = arith.constant 13 : i32
    %1500 = arith.addi %1305, %c13_i32_312 : i32
    %c6_i32_313 = arith.constant 6 : i32
    %1501 = arith.addi %1500, %c6_i32_313 : i32
    %1502 = arith.index_cast %1501 : i32 to index
    %1503 = memref.load %arg2[%1502] : memref<336xf32, #tpu.memory_space<smem>>
    %1504 = vector.broadcast %1503 : f32 to vector<1x128xf32>
    %1505 = arith.select %1427, %1504, %1292 : vector<1x128xi1>, vector<1x128xf32>
    %1506 = vector.broadcast %1503 : f32 to vector<1x128xf32>
    %1507 = arith.mulf %1420, %1506 : vector<1x128xf32>
    %1508 = arith.addf %1295, %1507 : vector<1x128xf32>
    %c13_i32_314 = arith.constant 13 : i32
    %1509 = arith.addi %1305, %c13_i32_314 : i32
    %c7_i32_315 = arith.constant 7 : i32
    %1510 = arith.addi %1509, %c7_i32_315 : i32
    %1511 = arith.index_cast %1510 : i32 to index
    %1512 = memref.load %arg2[%1511] : memref<336xf32, #tpu.memory_space<smem>>
    %1513 = vector.broadcast %1512 : f32 to vector<1x128xf32>
    %1514 = arith.select %1427, %1513, %1301 : vector<1x128xi1>, vector<1x128xf32>
    %1515 = vector.broadcast %1512 : f32 to vector<1x128xf32>
    %1516 = arith.mulf %1420, %1515 : vector<1x128xf32>
    %1517 = arith.addf %1304, %1516 : vector<1x128xf32>
    %c147_i32 = arith.constant 147 : i32
    %1518 = arith.addi %24, %c147_i32 : i32
    %c0_i32_316 = arith.constant 0 : i32
    %1519 = arith.addi %1518, %c0_i32_316 : i32
    %1520 = arith.index_cast %1519 : i32 to index
    %1521 = memref.load %arg2[%1520] : memref<336xf32, #tpu.memory_space<smem>>
    %c1_i32_317 = arith.constant 1 : i32
    %1522 = arith.addi %1518, %c1_i32_317 : i32
    %1523 = arith.index_cast %1522 : i32 to index
    %1524 = memref.load %arg2[%1523] : memref<336xf32, #tpu.memory_space<smem>>
    %c2_i32_318 = arith.constant 2 : i32
    %1525 = arith.addi %1518, %c2_i32_318 : i32
    %1526 = arith.index_cast %1525 : i32 to index
    %1527 = memref.load %arg2[%1526] : memref<336xf32, #tpu.memory_space<smem>>
    %c3_i32_319 = arith.constant 3 : i32
    %1528 = arith.addi %1518, %c3_i32_319 : i32
    %1529 = arith.index_cast %1528 : i32 to index
    %1530 = memref.load %arg2[%1529] : memref<336xf32, #tpu.memory_space<smem>>
    %c4_i32_320 = arith.constant 4 : i32
    %1531 = arith.addi %1518, %c4_i32_320 : i32
    %1532 = arith.index_cast %1531 : i32 to index
    %1533 = memref.load %arg2[%1532] : memref<336xf32, #tpu.memory_space<smem>>
    %c5_i32_321 = arith.constant 5 : i32
    %1534 = arith.addi %1518, %c5_i32_321 : i32
    %1535 = arith.index_cast %1534 : i32 to index
    %1536 = memref.load %arg2[%1535] : memref<336xf32, #tpu.memory_space<smem>>
    %c6_i32_322 = arith.constant 6 : i32
    %1537 = arith.addi %1518, %c6_i32_322 : i32
    %1538 = arith.index_cast %1537 : i32 to index
    %1539 = memref.load %arg2[%1538] : memref<336xf32, #tpu.memory_space<smem>>
    %c7_i32_323 = arith.constant 7 : i32
    %1540 = arith.addi %1518, %c7_i32_323 : i32
    %1541 = arith.index_cast %1540 : i32 to index
    %1542 = memref.load %arg2[%1541] : memref<336xf32, #tpu.memory_space<smem>>
    %c8_i32_324 = arith.constant 8 : i32
    %1543 = arith.addi %1518, %c8_i32_324 : i32
    %1544 = arith.index_cast %1543 : i32 to index
    %1545 = memref.load %arg2[%1544] : memref<336xf32, #tpu.memory_space<smem>>
    %c9_i32_325 = arith.constant 9 : i32
    %1546 = arith.addi %1518, %c9_i32_325 : i32
    %1547 = arith.index_cast %1546 : i32 to index
    %1548 = memref.load %arg2[%1547] : memref<336xf32, #tpu.memory_space<smem>>
    %c10_i32_326 = arith.constant 10 : i32
    %1549 = arith.addi %1518, %c10_i32_326 : i32
    %1550 = arith.index_cast %1549 : i32 to index
    %1551 = memref.load %arg2[%1550] : memref<336xf32, #tpu.memory_space<smem>>
    %c11_i32_327 = arith.constant 11 : i32
    %1552 = arith.addi %1518, %c11_i32_327 : i32
    %1553 = arith.index_cast %1552 : i32 to index
    %1554 = memref.load %arg2[%1553] : memref<336xf32, #tpu.memory_space<smem>>
    %cst_328 = arith.constant 0.000000e+00 : f32
    %1555 = arith.cmpf oge, %1521, %cst_328 : f32
    %cst_329 = arith.constant 1.000000e+00 : f32
    %cst_330 = arith.constant 0.000000e+00 : f32
    %1556 = arith.select %1555, %cst_329, %cst_330 : f32
    %1557 = vector.broadcast %1551 : f32 to vector<1x128xf32>
    %1558 = arith.minimumf %7, %1557 : vector<1x128xf32>
    %1559 = vector.broadcast %1545 : f32 to vector<1x128xf32>
    %1560 = arith.maximumf %3, %1559 : vector<1x128xf32>
    %1561 = arith.subf %1558, %1560 : vector<1x128xf32>
    %cst_331 = arith.constant 0.000000e+00 : f32
    %1562 = vector.broadcast %cst_331 : f32 to vector<1x128xf32>
    %1563 = arith.maximumf %1561, %1562 : vector<1x128xf32>
    %1564 = vector.broadcast %1554 : f32 to vector<1x128xf32>
    %1565 = arith.minimumf %5, %1564 : vector<1x128xf32>
    %1566 = vector.broadcast %1548 : f32 to vector<1x128xf32>
    %1567 = arith.maximumf %1, %1566 : vector<1x128xf32>
    %1568 = arith.subf %1565, %1567 : vector<1x128xf32>
    %cst_332 = arith.constant 0.000000e+00 : f32
    %1569 = vector.broadcast %cst_332 : f32 to vector<1x128xf32>
    %1570 = arith.maximumf %1568, %1569 : vector<1x128xf32>
    %1571 = arith.mulf %1563, %1570 : vector<1x128xf32>
    %1572 = arith.subf %1551, %1545 : f32
    %1573 = arith.subf %1554, %1548 : f32
    %1574 = arith.mulf %1572, %1573 : f32
    %1575 = vector.broadcast %1574 : f32 to vector<1x128xf32>
    %1576 = arith.addf %16, %1575 : vector<1x128xf32>
    %1577 = arith.subf %1576, %1571 : vector<1x128xf32>
    %cst_333 = arith.constant 9.99999993E-9 : f32
    %1578 = vector.broadcast %cst_333 : f32 to vector<1x128xf32>
    %1579 = arith.maximumf %1577, %1578 : vector<1x128xf32>
    %1580 = arith.divf %1571, %1579 : vector<1x128xf32>
    %1581 = vector.broadcast %1527 : f32 to vector<1x128xf32>
    %1582 = arith.minimumf %7, %1581 : vector<1x128xf32>
    %1583 = vector.broadcast %1521 : f32 to vector<1x128xf32>
    %1584 = arith.maximumf %3, %1583 : vector<1x128xf32>
    %1585 = arith.subf %1582, %1584 : vector<1x128xf32>
    %cst_334 = arith.constant 0.000000e+00 : f32
    %1586 = vector.broadcast %cst_334 : f32 to vector<1x128xf32>
    %1587 = arith.maximumf %1585, %1586 : vector<1x128xf32>
    %1588 = vector.broadcast %1530 : f32 to vector<1x128xf32>
    %1589 = arith.minimumf %5, %1588 : vector<1x128xf32>
    %1590 = vector.broadcast %1524 : f32 to vector<1x128xf32>
    %1591 = arith.maximumf %1, %1590 : vector<1x128xf32>
    %1592 = arith.subf %1589, %1591 : vector<1x128xf32>
    %cst_335 = arith.constant 0.000000e+00 : f32
    %1593 = vector.broadcast %cst_335 : f32 to vector<1x128xf32>
    %1594 = arith.maximumf %1592, %1593 : vector<1x128xf32>
    %1595 = arith.mulf %1587, %1594 : vector<1x128xf32>
    %1596 = arith.subf %1527, %1521 : f32
    %1597 = arith.subf %1530, %1524 : f32
    %1598 = arith.mulf %1596, %1597 : f32
    %cst_336 = arith.constant 9.99999993E-9 : f32
    %1599 = arith.maximumf %1598, %cst_336 : f32
    %1600 = vector.broadcast %1599 : f32 to vector<1x128xf32>
    %1601 = arith.divf %1595, %1600 : vector<1x128xf32>
    %1602 = vector.broadcast %1539 : f32 to vector<1x128xf32>
    %1603 = arith.minimumf %7, %1602 : vector<1x128xf32>
    %1604 = vector.broadcast %1533 : f32 to vector<1x128xf32>
    %1605 = arith.maximumf %3, %1604 : vector<1x128xf32>
    %1606 = arith.subf %1603, %1605 : vector<1x128xf32>
    %cst_337 = arith.constant 0.000000e+00 : f32
    %1607 = vector.broadcast %cst_337 : f32 to vector<1x128xf32>
    %1608 = arith.maximumf %1606, %1607 : vector<1x128xf32>
    %1609 = vector.broadcast %1542 : f32 to vector<1x128xf32>
    %1610 = arith.minimumf %5, %1609 : vector<1x128xf32>
    %1611 = vector.broadcast %1536 : f32 to vector<1x128xf32>
    %1612 = arith.maximumf %1, %1611 : vector<1x128xf32>
    %1613 = arith.subf %1610, %1612 : vector<1x128xf32>
    %cst_338 = arith.constant 0.000000e+00 : f32
    %1614 = vector.broadcast %cst_338 : f32 to vector<1x128xf32>
    %1615 = arith.maximumf %1613, %1614 : vector<1x128xf32>
    %1616 = arith.mulf %1608, %1615 : vector<1x128xf32>
    %1617 = arith.subf %1539, %1533 : f32
    %1618 = arith.subf %1542, %1536 : f32
    %1619 = arith.mulf %1617, %1618 : f32
    %cst_339 = arith.constant 9.99999993E-9 : f32
    %1620 = arith.maximumf %1619, %cst_339 : f32
    %1621 = vector.broadcast %1620 : f32 to vector<1x128xf32>
    %1622 = arith.divf %1616, %1621 : vector<1x128xf32>
    %cst_340 = arith.constant 2.500000e-01 : f32
    %1623 = vector.broadcast %cst_340 : f32 to vector<1x128xf32>
    %1624 = arith.cmpf ogt, %1580, %1623 : vector<1x128xf32>
    %cst_341 = arith.constant 2.500000e-01 : f32
    %1625 = vector.broadcast %cst_341 : f32 to vector<1x128xf32>
    %1626 = arith.cmpf ogt, %1601, %1625 : vector<1x128xf32>
    %1627 = arith.andi %1624, %1626 : vector<1x128xi1>
    %cst_342 = arith.constant 2.500000e-01 : f32
    %1628 = vector.broadcast %cst_342 : f32 to vector<1x128xf32>
    %1629 = arith.cmpf ogt, %1622, %1628 : vector<1x128xf32>
    %1630 = arith.andi %1627, %1629 : vector<1x128xi1>
    %cst_343 = arith.constant 0.000000e+00 : f32
    %1631 = vector.broadcast %1556 : f32 to vector<1x128xf32>
    %1632 = vector.broadcast %cst_343 : f32 to vector<1x128xf32>
    %1633 = arith.select %1630, %1631, %1632 : vector<1x128xi1>, vector<1x128xf32>
    %1634 = arith.mulf %1601, %1622 : vector<1x128xf32>
    %1635 = math.sqrt %1634 : vector<1x128xf32>
    %1636 = arith.addf %1580, %1635 : vector<1x128xf32>
    %cst_344 = arith.constant 5.000000e-01 : f32
    %1637 = vector.broadcast %cst_344 : f32 to vector<1x128xf32>
    %1638 = arith.mulf %1637, %1636 : vector<1x128xf32>
    %1639 = arith.mulf %1638, %1633 : vector<1x128xf32>
    %1640 = arith.cmpf ogt, %1639, %1428 : vector<1x128xf32>
    %1641 = arith.select %1640, %1639, %1428 : vector<1x128xi1>, vector<1x128xf32>
    %1642 = arith.maximumf %1429, %1633 : vector<1x128xf32>
    %1643 = vector.broadcast %1521 : f32 to vector<1x128xf32>
    %1644 = arith.select %1640, %1643, %1431 : vector<1x128xi1>, vector<1x128xf32>
    %1645 = vector.broadcast %1524 : f32 to vector<1x128xf32>
    %1646 = arith.select %1640, %1645, %1433 : vector<1x128xi1>, vector<1x128xf32>
    %1647 = vector.broadcast %1527 : f32 to vector<1x128xf32>
    %1648 = arith.select %1640, %1647, %1435 : vector<1x128xi1>, vector<1x128xf32>
    %1649 = vector.broadcast %1530 : f32 to vector<1x128xf32>
    %1650 = arith.select %1640, %1649, %1437 : vector<1x128xi1>, vector<1x128xf32>
    %1651 = vector.broadcast %1533 : f32 to vector<1x128xf32>
    %1652 = arith.select %1640, %1651, %1439 : vector<1x128xi1>, vector<1x128xf32>
    %1653 = vector.broadcast %1536 : f32 to vector<1x128xf32>
    %1654 = arith.select %1640, %1653, %1441 : vector<1x128xi1>, vector<1x128xf32>
    %1655 = vector.broadcast %1539 : f32 to vector<1x128xf32>
    %1656 = arith.select %1640, %1655, %1443 : vector<1x128xi1>, vector<1x128xf32>
    %1657 = vector.broadcast %1542 : f32 to vector<1x128xf32>
    %1658 = arith.select %1640, %1657, %1445 : vector<1x128xi1>, vector<1x128xf32>
    %c13_i32_345 = arith.constant 13 : i32
    %1659 = arith.addi %1518, %c13_i32_345 : i32
    %c0_i32_346 = arith.constant 0 : i32
    %1660 = arith.addi %1659, %c0_i32_346 : i32
    %1661 = arith.index_cast %1660 : i32 to index
    %1662 = memref.load %arg2[%1661] : memref<336xf32, #tpu.memory_space<smem>>
    %1663 = vector.broadcast %1662 : f32 to vector<1x128xf32>
    %1664 = arith.select %1640, %1663, %1451 : vector<1x128xi1>, vector<1x128xf32>
    %1665 = vector.broadcast %1662 : f32 to vector<1x128xf32>
    %1666 = arith.mulf %1633, %1665 : vector<1x128xf32>
    %1667 = arith.addf %1454, %1666 : vector<1x128xf32>
    %c13_i32_347 = arith.constant 13 : i32
    %1668 = arith.addi %1518, %c13_i32_347 : i32
    %c1_i32_348 = arith.constant 1 : i32
    %1669 = arith.addi %1668, %c1_i32_348 : i32
    %1670 = arith.index_cast %1669 : i32 to index
    %1671 = memref.load %arg2[%1670] : memref<336xf32, #tpu.memory_space<smem>>
    %1672 = vector.broadcast %1671 : f32 to vector<1x128xf32>
    %1673 = arith.select %1640, %1672, %1460 : vector<1x128xi1>, vector<1x128xf32>
    %1674 = vector.broadcast %1671 : f32 to vector<1x128xf32>
    %1675 = arith.mulf %1633, %1674 : vector<1x128xf32>
    %1676 = arith.addf %1463, %1675 : vector<1x128xf32>
    %c13_i32_349 = arith.constant 13 : i32
    %1677 = arith.addi %1518, %c13_i32_349 : i32
    %c2_i32_350 = arith.constant 2 : i32
    %1678 = arith.addi %1677, %c2_i32_350 : i32
    %1679 = arith.index_cast %1678 : i32 to index
    %1680 = memref.load %arg2[%1679] : memref<336xf32, #tpu.memory_space<smem>>
    %1681 = vector.broadcast %1680 : f32 to vector<1x128xf32>
    %1682 = arith.select %1640, %1681, %1469 : vector<1x128xi1>, vector<1x128xf32>
    %1683 = vector.broadcast %1680 : f32 to vector<1x128xf32>
    %1684 = arith.mulf %1633, %1683 : vector<1x128xf32>
    %1685 = arith.addf %1472, %1684 : vector<1x128xf32>
    %c13_i32_351 = arith.constant 13 : i32
    %1686 = arith.addi %1518, %c13_i32_351 : i32
    %c3_i32_352 = arith.constant 3 : i32
    %1687 = arith.addi %1686, %c3_i32_352 : i32
    %1688 = arith.index_cast %1687 : i32 to index
    %1689 = memref.load %arg2[%1688] : memref<336xf32, #tpu.memory_space<smem>>
    %1690 = vector.broadcast %1689 : f32 to vector<1x128xf32>
    %1691 = arith.select %1640, %1690, %1478 : vector<1x128xi1>, vector<1x128xf32>
    %1692 = vector.broadcast %1689 : f32 to vector<1x128xf32>
    %1693 = arith.mulf %1633, %1692 : vector<1x128xf32>
    %1694 = arith.addf %1481, %1693 : vector<1x128xf32>
    %c13_i32_353 = arith.constant 13 : i32
    %1695 = arith.addi %1518, %c13_i32_353 : i32
    %c4_i32_354 = arith.constant 4 : i32
    %1696 = arith.addi %1695, %c4_i32_354 : i32
    %1697 = arith.index_cast %1696 : i32 to index
    %1698 = memref.load %arg2[%1697] : memref<336xf32, #tpu.memory_space<smem>>
    %1699 = vector.broadcast %1698 : f32 to vector<1x128xf32>
    %1700 = arith.select %1640, %1699, %1487 : vector<1x128xi1>, vector<1x128xf32>
    %1701 = vector.broadcast %1698 : f32 to vector<1x128xf32>
    %1702 = arith.mulf %1633, %1701 : vector<1x128xf32>
    %1703 = arith.addf %1490, %1702 : vector<1x128xf32>
    %c13_i32_355 = arith.constant 13 : i32
    %1704 = arith.addi %1518, %c13_i32_355 : i32
    %c5_i32_356 = arith.constant 5 : i32
    %1705 = arith.addi %1704, %c5_i32_356 : i32
    %1706 = arith.index_cast %1705 : i32 to index
    %1707 = memref.load %arg2[%1706] : memref<336xf32, #tpu.memory_space<smem>>
    %1708 = vector.broadcast %1707 : f32 to vector<1x128xf32>
    %1709 = arith.select %1640, %1708, %1496 : vector<1x128xi1>, vector<1x128xf32>
    %1710 = vector.broadcast %1707 : f32 to vector<1x128xf32>
    %1711 = arith.mulf %1633, %1710 : vector<1x128xf32>
    %1712 = arith.addf %1499, %1711 : vector<1x128xf32>
    %c13_i32_357 = arith.constant 13 : i32
    %1713 = arith.addi %1518, %c13_i32_357 : i32
    %c6_i32_358 = arith.constant 6 : i32
    %1714 = arith.addi %1713, %c6_i32_358 : i32
    %1715 = arith.index_cast %1714 : i32 to index
    %1716 = memref.load %arg2[%1715] : memref<336xf32, #tpu.memory_space<smem>>
    %1717 = vector.broadcast %1716 : f32 to vector<1x128xf32>
    %1718 = arith.select %1640, %1717, %1505 : vector<1x128xi1>, vector<1x128xf32>
    %1719 = vector.broadcast %1716 : f32 to vector<1x128xf32>
    %1720 = arith.mulf %1633, %1719 : vector<1x128xf32>
    %1721 = arith.addf %1508, %1720 : vector<1x128xf32>
    %c13_i32_359 = arith.constant 13 : i32
    %1722 = arith.addi %1518, %c13_i32_359 : i32
    %c7_i32_360 = arith.constant 7 : i32
    %1723 = arith.addi %1722, %c7_i32_360 : i32
    %1724 = arith.index_cast %1723 : i32 to index
    %1725 = memref.load %arg2[%1724] : memref<336xf32, #tpu.memory_space<smem>>
    %1726 = vector.broadcast %1725 : f32 to vector<1x128xf32>
    %1727 = arith.select %1640, %1726, %1514 : vector<1x128xi1>, vector<1x128xf32>
    %1728 = vector.broadcast %1725 : f32 to vector<1x128xf32>
    %1729 = arith.mulf %1633, %1728 : vector<1x128xf32>
    %1730 = arith.addf %1517, %1729 : vector<1x128xf32>
    %cst_361 = arith.constant 0.000000e+00 : f32
    %1731 = vector.broadcast %cst_361 : f32 to vector<1x128xf32>
    %1732 = arith.cmpf ogt, %1642, %1731 : vector<1x128xf32>
    %cst_362 = arith.constant 1.000000e-01 : f32
    %1733 = vector.broadcast %cst_362 : f32 to vector<1x128xf32>
    %1734 = arith.cmpf oge, %1641, %1733 : vector<1x128xf32>
    %cst_363 = arith.constant 2.000000e+00 : f32
    %1735 = vector.broadcast %cst_363 : f32 to vector<1x128xf32>
    %1736 = arith.mulf %1735, %1664 : vector<1x128xf32>
    %cst_364 = arith.constant 0.000000e+00 : f32
    %cst_365 = arith.constant 1.000000e+00 : f32
    %1737 = vector.broadcast %cst_364 : f32 to vector<1x128xf32>
    %1738 = arith.maximumf %1737, %1667 : vector<1x128xf32>
    %1739 = vector.broadcast %cst_365 : f32 to vector<1x128xf32>
    %1740 = arith.minimumf %1739, %1738 : vector<1x128xf32>
    %1741 = arith.subf %1736, %1740 : vector<1x128xf32>
    %c0_366 = arith.constant 0 : index
    %c0_367 = arith.constant 0 : index
    %c0_368 = arith.constant 0 : index
    %c0_369 = arith.constant 0 : index
    %1742 = vector.load %arg4[%c0_366, %c0_367, %c0_368, %c0_369] : memref<1x8x1x128xf32, #tpu.memory_space<vmem>>, vector<1x1x1x128xf32>
    %1743 = vector.shape_cast %1742 : vector<1x1x1x128xf32> to vector<1x128xf32>
    %cst_370 = arith.constant 9.99999974E-5 : f32
    %cst_371 = arith.constant 0.999899983 : f32
    %1744 = vector.broadcast %cst_370 : f32 to vector<1x128xf32>
    %1745 = arith.maximumf %1744, %1743 : vector<1x128xf32>
    %1746 = vector.broadcast %cst_371 : f32 to vector<1x128xf32>
    %1747 = arith.minimumf %1746, %1745 : vector<1x128xf32>
    %cst_372 = arith.constant 1.000000e+00 : f32
    %1748 = vector.broadcast %cst_372 : f32 to vector<1x128xf32>
    %1749 = arith.cmpf oeq, %1741, %1748 : vector<1x128xf32>
    %cst_373 = arith.constant 1.000000e+00 : f32
    %1750 = vector.broadcast %cst_373 : f32 to vector<1x128xf32>
    %1751 = arith.subf %1750, %1747 : vector<1x128xf32>
    %1752 = arith.select %1749, %1747, %1751 : vector<1x128xi1>, vector<1x128xf32>
    %cst_374 = arith.constant 2.500000e-01 : f32
    %cst_375 = arith.constant 7.500000e-01 : f32
    %1753 = vector.broadcast %cst_374 : f32 to vector<1x128xf32>
    %1754 = vector.broadcast %cst_375 : f32 to vector<1x128xf32>
    %1755 = arith.select %1749, %1753, %1754 : vector<1x128xi1>, vector<1x128xf32>
    %cst_376 = arith.constant 1.000000e+00 : f32
    %1756 = vector.broadcast %cst_376 : f32 to vector<1x128xf32>
    %1757 = arith.subf %1756, %1752 : vector<1x128xf32>
    %1758 = arith.mulf %1755, %1757 : vector<1x128xf32>
    %cst_377 = arith.constant 1.000000e+00 : f32
    %1759 = vector.broadcast %cst_377 : f32 to vector<1x128xf32>
    %1760 = arith.subf %1759, %1752 : vector<1x128xf32>
    %1761 = arith.mulf %1758, %1760 : vector<1x128xf32>
    %1762 = math.log %1752 : vector<1x128xf32>
    %cst_378 = arith.constant 0.000000e+00 : f32
    %1763 = vector.broadcast %cst_378 : f32 to vector<1x128xf32>
    %1764 = arith.subf %1763, %1762 : vector<1x128xf32>
    %1765 = arith.mulf %1761, %1764 : vector<1x128xf32>
    %cst_379 = arith.constant -1.000000e+00 : f32
    %1766 = vector.broadcast %cst_379 : f32 to vector<1x128xf32>
    %1767 = arith.cmpf one, %1741, %1766 : vector<1x128xf32>
    %cst_380 = arith.constant 0.000000e+00 : f32
    %1768 = vector.broadcast %cst_380 : f32 to vector<1x128xf32>
    %1769 = arith.select %1767, %1765, %1768 : vector<1x128xi1>, vector<1x128xf32>
    %1770 = arith.addf %23, %1769 : vector<1x128xf32>
    %cst_381 = arith.constant 2.000000e+00 : f32
    %1771 = vector.broadcast %cst_381 : f32 to vector<1x128xf32>
    %1772 = arith.mulf %1771, %1673 : vector<1x128xf32>
    %cst_382 = arith.constant 0.000000e+00 : f32
    %cst_383 = arith.constant 1.000000e+00 : f32
    %1773 = vector.broadcast %cst_382 : f32 to vector<1x128xf32>
    %1774 = arith.maximumf %1773, %1676 : vector<1x128xf32>
    %1775 = vector.broadcast %cst_383 : f32 to vector<1x128xf32>
    %1776 = arith.minimumf %1775, %1774 : vector<1x128xf32>
    %1777 = arith.subf %1772, %1776 : vector<1x128xf32>
    %c0_384 = arith.constant 0 : index
    %c1_385 = arith.constant 1 : index
    %c0_386 = arith.constant 0 : index
    %c0_387 = arith.constant 0 : index
    %1778 = vector.load %arg4[%c0_384, %c1_385, %c0_386, %c0_387] : memref<1x8x1x128xf32, #tpu.memory_space<vmem>>, vector<1x1x1x128xf32>
    %1779 = vector.shape_cast %1778 : vector<1x1x1x128xf32> to vector<1x128xf32>
    %cst_388 = arith.constant 9.99999974E-5 : f32
    %cst_389 = arith.constant 0.999899983 : f32
    %1780 = vector.broadcast %cst_388 : f32 to vector<1x128xf32>
    %1781 = arith.maximumf %1780, %1779 : vector<1x128xf32>
    %1782 = vector.broadcast %cst_389 : f32 to vector<1x128xf32>
    %1783 = arith.minimumf %1782, %1781 : vector<1x128xf32>
    %cst_390 = arith.constant 1.000000e+00 : f32
    %1784 = vector.broadcast %cst_390 : f32 to vector<1x128xf32>
    %1785 = arith.cmpf oeq, %1777, %1784 : vector<1x128xf32>
    %cst_391 = arith.constant 1.000000e+00 : f32
    %1786 = vector.broadcast %cst_391 : f32 to vector<1x128xf32>
    %1787 = arith.subf %1786, %1783 : vector<1x128xf32>
    %1788 = arith.select %1785, %1783, %1787 : vector<1x128xi1>, vector<1x128xf32>
    %cst_392 = arith.constant 2.500000e-01 : f32
    %cst_393 = arith.constant 7.500000e-01 : f32
    %1789 = vector.broadcast %cst_392 : f32 to vector<1x128xf32>
    %1790 = vector.broadcast %cst_393 : f32 to vector<1x128xf32>
    %1791 = arith.select %1785, %1789, %1790 : vector<1x128xi1>, vector<1x128xf32>
    %cst_394 = arith.constant 1.000000e+00 : f32
    %1792 = vector.broadcast %cst_394 : f32 to vector<1x128xf32>
    %1793 = arith.subf %1792, %1788 : vector<1x128xf32>
    %1794 = arith.mulf %1791, %1793 : vector<1x128xf32>
    %cst_395 = arith.constant 1.000000e+00 : f32
    %1795 = vector.broadcast %cst_395 : f32 to vector<1x128xf32>
    %1796 = arith.subf %1795, %1788 : vector<1x128xf32>
    %1797 = arith.mulf %1794, %1796 : vector<1x128xf32>
    %1798 = math.log %1788 : vector<1x128xf32>
    %cst_396 = arith.constant 0.000000e+00 : f32
    %1799 = vector.broadcast %cst_396 : f32 to vector<1x128xf32>
    %1800 = arith.subf %1799, %1798 : vector<1x128xf32>
    %1801 = arith.mulf %1797, %1800 : vector<1x128xf32>
    %cst_397 = arith.constant -1.000000e+00 : f32
    %1802 = vector.broadcast %cst_397 : f32 to vector<1x128xf32>
    %1803 = arith.cmpf one, %1777, %1802 : vector<1x128xf32>
    %cst_398 = arith.constant 0.000000e+00 : f32
    %1804 = vector.broadcast %cst_398 : f32 to vector<1x128xf32>
    %1805 = arith.select %1803, %1801, %1804 : vector<1x128xi1>, vector<1x128xf32>
    %1806 = arith.addf %1770, %1805 : vector<1x128xf32>
    %cst_399 = arith.constant 2.000000e+00 : f32
    %1807 = vector.broadcast %cst_399 : f32 to vector<1x128xf32>
    %1808 = arith.mulf %1807, %1682 : vector<1x128xf32>
    %cst_400 = arith.constant 0.000000e+00 : f32
    %cst_401 = arith.constant 1.000000e+00 : f32
    %1809 = vector.broadcast %cst_400 : f32 to vector<1x128xf32>
    %1810 = arith.maximumf %1809, %1685 : vector<1x128xf32>
    %1811 = vector.broadcast %cst_401 : f32 to vector<1x128xf32>
    %1812 = arith.minimumf %1811, %1810 : vector<1x128xf32>
    %1813 = arith.subf %1808, %1812 : vector<1x128xf32>
    %c0_402 = arith.constant 0 : index
    %c2_403 = arith.constant 2 : index
    %c0_404 = arith.constant 0 : index
    %c0_405 = arith.constant 0 : index
    %1814 = vector.load %arg4[%c0_402, %c2_403, %c0_404, %c0_405] : memref<1x8x1x128xf32, #tpu.memory_space<vmem>>, vector<1x1x1x128xf32>
    %1815 = vector.shape_cast %1814 : vector<1x1x1x128xf32> to vector<1x128xf32>
    %cst_406 = arith.constant 9.99999974E-5 : f32
    %cst_407 = arith.constant 0.999899983 : f32
    %1816 = vector.broadcast %cst_406 : f32 to vector<1x128xf32>
    %1817 = arith.maximumf %1816, %1815 : vector<1x128xf32>
    %1818 = vector.broadcast %cst_407 : f32 to vector<1x128xf32>
    %1819 = arith.minimumf %1818, %1817 : vector<1x128xf32>
    %cst_408 = arith.constant 1.000000e+00 : f32
    %1820 = vector.broadcast %cst_408 : f32 to vector<1x128xf32>
    %1821 = arith.cmpf oeq, %1813, %1820 : vector<1x128xf32>
    %cst_409 = arith.constant 1.000000e+00 : f32
    %1822 = vector.broadcast %cst_409 : f32 to vector<1x128xf32>
    %1823 = arith.subf %1822, %1819 : vector<1x128xf32>
    %1824 = arith.select %1821, %1819, %1823 : vector<1x128xi1>, vector<1x128xf32>
    %cst_410 = arith.constant 2.500000e-01 : f32
    %cst_411 = arith.constant 7.500000e-01 : f32
    %1825 = vector.broadcast %cst_410 : f32 to vector<1x128xf32>
    %1826 = vector.broadcast %cst_411 : f32 to vector<1x128xf32>
    %1827 = arith.select %1821, %1825, %1826 : vector<1x128xi1>, vector<1x128xf32>
    %cst_412 = arith.constant 1.000000e+00 : f32
    %1828 = vector.broadcast %cst_412 : f32 to vector<1x128xf32>
    %1829 = arith.subf %1828, %1824 : vector<1x128xf32>
    %1830 = arith.mulf %1827, %1829 : vector<1x128xf32>
    %cst_413 = arith.constant 1.000000e+00 : f32
    %1831 = vector.broadcast %cst_413 : f32 to vector<1x128xf32>
    %1832 = arith.subf %1831, %1824 : vector<1x128xf32>
    %1833 = arith.mulf %1830, %1832 : vector<1x128xf32>
    %1834 = math.log %1824 : vector<1x128xf32>
    %cst_414 = arith.constant 0.000000e+00 : f32
    %1835 = vector.broadcast %cst_414 : f32 to vector<1x128xf32>
    %1836 = arith.subf %1835, %1834 : vector<1x128xf32>
    %1837 = arith.mulf %1833, %1836 : vector<1x128xf32>
    %cst_415 = arith.constant -1.000000e+00 : f32
    %1838 = vector.broadcast %cst_415 : f32 to vector<1x128xf32>
    %1839 = arith.cmpf one, %1813, %1838 : vector<1x128xf32>
    %cst_416 = arith.constant 0.000000e+00 : f32
    %1840 = vector.broadcast %cst_416 : f32 to vector<1x128xf32>
    %1841 = arith.select %1839, %1837, %1840 : vector<1x128xi1>, vector<1x128xf32>
    %1842 = arith.addf %1806, %1841 : vector<1x128xf32>
    %cst_417 = arith.constant 2.000000e+00 : f32
    %1843 = vector.broadcast %cst_417 : f32 to vector<1x128xf32>
    %1844 = arith.mulf %1843, %1691 : vector<1x128xf32>
    %cst_418 = arith.constant 0.000000e+00 : f32
    %cst_419 = arith.constant 1.000000e+00 : f32
    %1845 = vector.broadcast %cst_418 : f32 to vector<1x128xf32>
    %1846 = arith.maximumf %1845, %1694 : vector<1x128xf32>
    %1847 = vector.broadcast %cst_419 : f32 to vector<1x128xf32>
    %1848 = arith.minimumf %1847, %1846 : vector<1x128xf32>
    %1849 = arith.subf %1844, %1848 : vector<1x128xf32>
    %c0_420 = arith.constant 0 : index
    %c3_421 = arith.constant 3 : index
    %c0_422 = arith.constant 0 : index
    %c0_423 = arith.constant 0 : index
    %1850 = vector.load %arg4[%c0_420, %c3_421, %c0_422, %c0_423] : memref<1x8x1x128xf32, #tpu.memory_space<vmem>>, vector<1x1x1x128xf32>
    %1851 = vector.shape_cast %1850 : vector<1x1x1x128xf32> to vector<1x128xf32>
    %cst_424 = arith.constant 9.99999974E-5 : f32
    %cst_425 = arith.constant 0.999899983 : f32
    %1852 = vector.broadcast %cst_424 : f32 to vector<1x128xf32>
    %1853 = arith.maximumf %1852, %1851 : vector<1x128xf32>
    %1854 = vector.broadcast %cst_425 : f32 to vector<1x128xf32>
    %1855 = arith.minimumf %1854, %1853 : vector<1x128xf32>
    %cst_426 = arith.constant 1.000000e+00 : f32
    %1856 = vector.broadcast %cst_426 : f32 to vector<1x128xf32>
    %1857 = arith.cmpf oeq, %1849, %1856 : vector<1x128xf32>
    %cst_427 = arith.constant 1.000000e+00 : f32
    %1858 = vector.broadcast %cst_427 : f32 to vector<1x128xf32>
    %1859 = arith.subf %1858, %1855 : vector<1x128xf32>
    %1860 = arith.select %1857, %1855, %1859 : vector<1x128xi1>, vector<1x128xf32>
    %cst_428 = arith.constant 2.500000e-01 : f32
    %cst_429 = arith.constant 7.500000e-01 : f32
    %1861 = vector.broadcast %cst_428 : f32 to vector<1x128xf32>
    %1862 = vector.broadcast %cst_429 : f32 to vector<1x128xf32>
    %1863 = arith.select %1857, %1861, %1862 : vector<1x128xi1>, vector<1x128xf32>
    %cst_430 = arith.constant 1.000000e+00 : f32
    %1864 = vector.broadcast %cst_430 : f32 to vector<1x128xf32>
    %1865 = arith.subf %1864, %1860 : vector<1x128xf32>
    %1866 = arith.mulf %1863, %1865 : vector<1x128xf32>
    %cst_431 = arith.constant 1.000000e+00 : f32
    %1867 = vector.broadcast %cst_431 : f32 to vector<1x128xf32>
    %1868 = arith.subf %1867, %1860 : vector<1x128xf32>
    %1869 = arith.mulf %1866, %1868 : vector<1x128xf32>
    %1870 = math.log %1860 : vector<1x128xf32>
    %cst_432 = arith.constant 0.000000e+00 : f32
    %1871 = vector.broadcast %cst_432 : f32 to vector<1x128xf32>
    %1872 = arith.subf %1871, %1870 : vector<1x128xf32>
    %1873 = arith.mulf %1869, %1872 : vector<1x128xf32>
    %cst_433 = arith.constant -1.000000e+00 : f32
    %1874 = vector.broadcast %cst_433 : f32 to vector<1x128xf32>
    %1875 = arith.cmpf one, %1849, %1874 : vector<1x128xf32>
    %cst_434 = arith.constant 0.000000e+00 : f32
    %1876 = vector.broadcast %cst_434 : f32 to vector<1x128xf32>
    %1877 = arith.select %1875, %1873, %1876 : vector<1x128xi1>, vector<1x128xf32>
    %1878 = arith.addf %1842, %1877 : vector<1x128xf32>
    %cst_435 = arith.constant 2.000000e+00 : f32
    %1879 = vector.broadcast %cst_435 : f32 to vector<1x128xf32>
    %1880 = arith.mulf %1879, %1700 : vector<1x128xf32>
    %cst_436 = arith.constant 0.000000e+00 : f32
    %cst_437 = arith.constant 1.000000e+00 : f32
    %1881 = vector.broadcast %cst_436 : f32 to vector<1x128xf32>
    %1882 = arith.maximumf %1881, %1703 : vector<1x128xf32>
    %1883 = vector.broadcast %cst_437 : f32 to vector<1x128xf32>
    %1884 = arith.minimumf %1883, %1882 : vector<1x128xf32>
    %1885 = arith.subf %1880, %1884 : vector<1x128xf32>
    %c0_438 = arith.constant 0 : index
    %c4 = arith.constant 4 : index
    %c0_439 = arith.constant 0 : index
    %c0_440 = arith.constant 0 : index
    %1886 = vector.load %arg4[%c0_438, %c4, %c0_439, %c0_440] : memref<1x8x1x128xf32, #tpu.memory_space<vmem>>, vector<1x1x1x128xf32>
    %1887 = vector.shape_cast %1886 : vector<1x1x1x128xf32> to vector<1x128xf32>
    %cst_441 = arith.constant 9.99999974E-5 : f32
    %cst_442 = arith.constant 0.999899983 : f32
    %1888 = vector.broadcast %cst_441 : f32 to vector<1x128xf32>
    %1889 = arith.maximumf %1888, %1887 : vector<1x128xf32>
    %1890 = vector.broadcast %cst_442 : f32 to vector<1x128xf32>
    %1891 = arith.minimumf %1890, %1889 : vector<1x128xf32>
    %cst_443 = arith.constant 1.000000e+00 : f32
    %1892 = vector.broadcast %cst_443 : f32 to vector<1x128xf32>
    %1893 = arith.cmpf oeq, %1885, %1892 : vector<1x128xf32>
    %cst_444 = arith.constant 1.000000e+00 : f32
    %1894 = vector.broadcast %cst_444 : f32 to vector<1x128xf32>
    %1895 = arith.subf %1894, %1891 : vector<1x128xf32>
    %1896 = arith.select %1893, %1891, %1895 : vector<1x128xi1>, vector<1x128xf32>
    %cst_445 = arith.constant 2.500000e-01 : f32
    %cst_446 = arith.constant 7.500000e-01 : f32
    %1897 = vector.broadcast %cst_445 : f32 to vector<1x128xf32>
    %1898 = vector.broadcast %cst_446 : f32 to vector<1x128xf32>
    %1899 = arith.select %1893, %1897, %1898 : vector<1x128xi1>, vector<1x128xf32>
    %cst_447 = arith.constant 1.000000e+00 : f32
    %1900 = vector.broadcast %cst_447 : f32 to vector<1x128xf32>
    %1901 = arith.subf %1900, %1896 : vector<1x128xf32>
    %1902 = arith.mulf %1899, %1901 : vector<1x128xf32>
    %cst_448 = arith.constant 1.000000e+00 : f32
    %1903 = vector.broadcast %cst_448 : f32 to vector<1x128xf32>
    %1904 = arith.subf %1903, %1896 : vector<1x128xf32>
    %1905 = arith.mulf %1902, %1904 : vector<1x128xf32>
    %1906 = math.log %1896 : vector<1x128xf32>
    %cst_449 = arith.constant 0.000000e+00 : f32
    %1907 = vector.broadcast %cst_449 : f32 to vector<1x128xf32>
    %1908 = arith.subf %1907, %1906 : vector<1x128xf32>
    %1909 = arith.mulf %1905, %1908 : vector<1x128xf32>
    %cst_450 = arith.constant -1.000000e+00 : f32
    %1910 = vector.broadcast %cst_450 : f32 to vector<1x128xf32>
    %1911 = arith.cmpf one, %1885, %1910 : vector<1x128xf32>
    %cst_451 = arith.constant 0.000000e+00 : f32
    %1912 = vector.broadcast %cst_451 : f32 to vector<1x128xf32>
    %1913 = arith.select %1911, %1909, %1912 : vector<1x128xi1>, vector<1x128xf32>
    %1914 = arith.addf %1878, %1913 : vector<1x128xf32>
    %cst_452 = arith.constant 2.000000e+00 : f32
    %1915 = vector.broadcast %cst_452 : f32 to vector<1x128xf32>
    %1916 = arith.mulf %1915, %1709 : vector<1x128xf32>
    %cst_453 = arith.constant 0.000000e+00 : f32
    %cst_454 = arith.constant 1.000000e+00 : f32
    %1917 = vector.broadcast %cst_453 : f32 to vector<1x128xf32>
    %1918 = arith.maximumf %1917, %1712 : vector<1x128xf32>
    %1919 = vector.broadcast %cst_454 : f32 to vector<1x128xf32>
    %1920 = arith.minimumf %1919, %1918 : vector<1x128xf32>
    %1921 = arith.subf %1916, %1920 : vector<1x128xf32>
    %c0_455 = arith.constant 0 : index
    %c5 = arith.constant 5 : index
    %c0_456 = arith.constant 0 : index
    %c0_457 = arith.constant 0 : index
    %1922 = vector.load %arg4[%c0_455, %c5, %c0_456, %c0_457] : memref<1x8x1x128xf32, #tpu.memory_space<vmem>>, vector<1x1x1x128xf32>
    %1923 = vector.shape_cast %1922 : vector<1x1x1x128xf32> to vector<1x128xf32>
    %cst_458 = arith.constant 9.99999974E-5 : f32
    %cst_459 = arith.constant 0.999899983 : f32
    %1924 = vector.broadcast %cst_458 : f32 to vector<1x128xf32>
    %1925 = arith.maximumf %1924, %1923 : vector<1x128xf32>
    %1926 = vector.broadcast %cst_459 : f32 to vector<1x128xf32>
    %1927 = arith.minimumf %1926, %1925 : vector<1x128xf32>
    %cst_460 = arith.constant 1.000000e+00 : f32
    %1928 = vector.broadcast %cst_460 : f32 to vector<1x128xf32>
    %1929 = arith.cmpf oeq, %1921, %1928 : vector<1x128xf32>
    %cst_461 = arith.constant 1.000000e+00 : f32
    %1930 = vector.broadcast %cst_461 : f32 to vector<1x128xf32>
    %1931 = arith.subf %1930, %1927 : vector<1x128xf32>
    %1932 = arith.select %1929, %1927, %1931 : vector<1x128xi1>, vector<1x128xf32>
    %cst_462 = arith.constant 2.500000e-01 : f32
    %cst_463 = arith.constant 7.500000e-01 : f32
    %1933 = vector.broadcast %cst_462 : f32 to vector<1x128xf32>
    %1934 = vector.broadcast %cst_463 : f32 to vector<1x128xf32>
    %1935 = arith.select %1929, %1933, %1934 : vector<1x128xi1>, vector<1x128xf32>
    %cst_464 = arith.constant 1.000000e+00 : f32
    %1936 = vector.broadcast %cst_464 : f32 to vector<1x128xf32>
    %1937 = arith.subf %1936, %1932 : vector<1x128xf32>
    %1938 = arith.mulf %1935, %1937 : vector<1x128xf32>
    %cst_465 = arith.constant 1.000000e+00 : f32
    %1939 = vector.broadcast %cst_465 : f32 to vector<1x128xf32>
    %1940 = arith.subf %1939, %1932 : vector<1x128xf32>
    %1941 = arith.mulf %1938, %1940 : vector<1x128xf32>
    %1942 = math.log %1932 : vector<1x128xf32>
    %cst_466 = arith.constant 0.000000e+00 : f32
    %1943 = vector.broadcast %cst_466 : f32 to vector<1x128xf32>
    %1944 = arith.subf %1943, %1942 : vector<1x128xf32>
    %1945 = arith.mulf %1941, %1944 : vector<1x128xf32>
    %cst_467 = arith.constant -1.000000e+00 : f32
    %1946 = vector.broadcast %cst_467 : f32 to vector<1x128xf32>
    %1947 = arith.cmpf one, %1921, %1946 : vector<1x128xf32>
    %cst_468 = arith.constant 0.000000e+00 : f32
    %1948 = vector.broadcast %cst_468 : f32 to vector<1x128xf32>
    %1949 = arith.select %1947, %1945, %1948 : vector<1x128xi1>, vector<1x128xf32>
    %1950 = arith.addf %1914, %1949 : vector<1x128xf32>
    %cst_469 = arith.constant 2.000000e+00 : f32
    %1951 = vector.broadcast %cst_469 : f32 to vector<1x128xf32>
    %1952 = arith.mulf %1951, %1718 : vector<1x128xf32>
    %cst_470 = arith.constant 0.000000e+00 : f32
    %cst_471 = arith.constant 1.000000e+00 : f32
    %1953 = vector.broadcast %cst_470 : f32 to vector<1x128xf32>
    %1954 = arith.maximumf %1953, %1721 : vector<1x128xf32>
    %1955 = vector.broadcast %cst_471 : f32 to vector<1x128xf32>
    %1956 = arith.minimumf %1955, %1954 : vector<1x128xf32>
    %1957 = arith.subf %1952, %1956 : vector<1x128xf32>
    %c0_472 = arith.constant 0 : index
    %c6 = arith.constant 6 : index
    %c0_473 = arith.constant 0 : index
    %c0_474 = arith.constant 0 : index
    %1958 = vector.load %arg4[%c0_472, %c6, %c0_473, %c0_474] : memref<1x8x1x128xf32, #tpu.memory_space<vmem>>, vector<1x1x1x128xf32>
    %1959 = vector.shape_cast %1958 : vector<1x1x1x128xf32> to vector<1x128xf32>
    %cst_475 = arith.constant 9.99999974E-5 : f32
    %cst_476 = arith.constant 0.999899983 : f32
    %1960 = vector.broadcast %cst_475 : f32 to vector<1x128xf32>
    %1961 = arith.maximumf %1960, %1959 : vector<1x128xf32>
    %1962 = vector.broadcast %cst_476 : f32 to vector<1x128xf32>
    %1963 = arith.minimumf %1962, %1961 : vector<1x128xf32>
    %cst_477 = arith.constant 1.000000e+00 : f32
    %1964 = vector.broadcast %cst_477 : f32 to vector<1x128xf32>
    %1965 = arith.cmpf oeq, %1957, %1964 : vector<1x128xf32>
    %cst_478 = arith.constant 1.000000e+00 : f32
    %1966 = vector.broadcast %cst_478 : f32 to vector<1x128xf32>
    %1967 = arith.subf %1966, %1963 : vector<1x128xf32>
    %1968 = arith.select %1965, %1963, %1967 : vector<1x128xi1>, vector<1x128xf32>
    %cst_479 = arith.constant 2.500000e-01 : f32
    %cst_480 = arith.constant 7.500000e-01 : f32
    %1969 = vector.broadcast %cst_479 : f32 to vector<1x128xf32>
    %1970 = vector.broadcast %cst_480 : f32 to vector<1x128xf32>
    %1971 = arith.select %1965, %1969, %1970 : vector<1x128xi1>, vector<1x128xf32>
    %cst_481 = arith.constant 1.000000e+00 : f32
    %1972 = vector.broadcast %cst_481 : f32 to vector<1x128xf32>
    %1973 = arith.subf %1972, %1968 : vector<1x128xf32>
    %1974 = arith.mulf %1971, %1973 : vector<1x128xf32>
    %cst_482 = arith.constant 1.000000e+00 : f32
    %1975 = vector.broadcast %cst_482 : f32 to vector<1x128xf32>
    %1976 = arith.subf %1975, %1968 : vector<1x128xf32>
    %1977 = arith.mulf %1974, %1976 : vector<1x128xf32>
    %1978 = math.log %1968 : vector<1x128xf32>
    %cst_483 = arith.constant 0.000000e+00 : f32
    %1979 = vector.broadcast %cst_483 : f32 to vector<1x128xf32>
    %1980 = arith.subf %1979, %1978 : vector<1x128xf32>
    %1981 = arith.mulf %1977, %1980 : vector<1x128xf32>
    %cst_484 = arith.constant -1.000000e+00 : f32
    %1982 = vector.broadcast %cst_484 : f32 to vector<1x128xf32>
    %1983 = arith.cmpf one, %1957, %1982 : vector<1x128xf32>
    %cst_485 = arith.constant 0.000000e+00 : f32
    %1984 = vector.broadcast %cst_485 : f32 to vector<1x128xf32>
    %1985 = arith.select %1983, %1981, %1984 : vector<1x128xi1>, vector<1x128xf32>
    %1986 = arith.addf %1950, %1985 : vector<1x128xf32>
    %cst_486 = arith.constant 2.000000e+00 : f32
    %1987 = vector.broadcast %cst_486 : f32 to vector<1x128xf32>
    %1988 = arith.mulf %1987, %1727 : vector<1x128xf32>
    %cst_487 = arith.constant 0.000000e+00 : f32
    %cst_488 = arith.constant 1.000000e+00 : f32
    %1989 = vector.broadcast %cst_487 : f32 to vector<1x128xf32>
    %1990 = arith.maximumf %1989, %1730 : vector<1x128xf32>
    %1991 = vector.broadcast %cst_488 : f32 to vector<1x128xf32>
    %1992 = arith.minimumf %1991, %1990 : vector<1x128xf32>
    %1993 = arith.subf %1988, %1992 : vector<1x128xf32>
    %c0_489 = arith.constant 0 : index
    %c7 = arith.constant 7 : index
    %c0_490 = arith.constant 0 : index
    %c0_491 = arith.constant 0 : index
    %1994 = vector.load %arg4[%c0_489, %c7, %c0_490, %c0_491] : memref<1x8x1x128xf32, #tpu.memory_space<vmem>>, vector<1x1x1x128xf32>
    %1995 = vector.shape_cast %1994 : vector<1x1x1x128xf32> to vector<1x128xf32>
    %cst_492 = arith.constant 9.99999974E-5 : f32
    %cst_493 = arith.constant 0.999899983 : f32
    %1996 = vector.broadcast %cst_492 : f32 to vector<1x128xf32>
    %1997 = arith.maximumf %1996, %1995 : vector<1x128xf32>
    %1998 = vector.broadcast %cst_493 : f32 to vector<1x128xf32>
    %1999 = arith.minimumf %1998, %1997 : vector<1x128xf32>
    %cst_494 = arith.constant 1.000000e+00 : f32
    %2000 = vector.broadcast %cst_494 : f32 to vector<1x128xf32>
    %2001 = arith.cmpf oeq, %1993, %2000 : vector<1x128xf32>
    %cst_495 = arith.constant 1.000000e+00 : f32
    %2002 = vector.broadcast %cst_495 : f32 to vector<1x128xf32>
    %2003 = arith.subf %2002, %1999 : vector<1x128xf32>
    %2004 = arith.select %2001, %1999, %2003 : vector<1x128xi1>, vector<1x128xf32>
    %cst_496 = arith.constant 2.500000e-01 : f32
    %cst_497 = arith.constant 7.500000e-01 : f32
    %2005 = vector.broadcast %cst_496 : f32 to vector<1x128xf32>
    %2006 = vector.broadcast %cst_497 : f32 to vector<1x128xf32>
    %2007 = arith.select %2001, %2005, %2006 : vector<1x128xi1>, vector<1x128xf32>
    %cst_498 = arith.constant 1.000000e+00 : f32
    %2008 = vector.broadcast %cst_498 : f32 to vector<1x128xf32>
    %2009 = arith.subf %2008, %2004 : vector<1x128xf32>
    %2010 = arith.mulf %2007, %2009 : vector<1x128xf32>
    %cst_499 = arith.constant 1.000000e+00 : f32
    %2011 = vector.broadcast %cst_499 : f32 to vector<1x128xf32>
    %2012 = arith.subf %2011, %2004 : vector<1x128xf32>
    %2013 = arith.mulf %2010, %2012 : vector<1x128xf32>
    %2014 = math.log %2004 : vector<1x128xf32>
    %cst_500 = arith.constant 0.000000e+00 : f32
    %2015 = vector.broadcast %cst_500 : f32 to vector<1x128xf32>
    %2016 = arith.subf %2015, %2014 : vector<1x128xf32>
    %2017 = arith.mulf %2013, %2016 : vector<1x128xf32>
    %cst_501 = arith.constant -1.000000e+00 : f32
    %2018 = vector.broadcast %cst_501 : f32 to vector<1x128xf32>
    %2019 = arith.cmpf one, %1993, %2018 : vector<1x128xf32>
    %cst_502 = arith.constant 0.000000e+00 : f32
    %2020 = vector.broadcast %cst_502 : f32 to vector<1x128xf32>
    %2021 = arith.select %2019, %2017, %2020 : vector<1x128xi1>, vector<1x128xf32>
    %2022 = arith.addf %1986, %2021 : vector<1x128xf32>
    %cst_503 = arith.constant 0.000000e+00 : f32
    %2023 = vector.broadcast %cst_503 : f32 to vector<1x128xf32>
    %2024 = arith.select %1732, %2022, %2023 : vector<1x128xi1>, vector<1x128xf32>
    %2025 = arith.subf %1648, %1644 : vector<1x128xf32>
    %2026 = arith.subf %1650, %1646 : vector<1x128xf32>
    %2027 = arith.subf %1656, %1652 : vector<1x128xf32>
    %2028 = arith.subf %1658, %1654 : vector<1x128xf32>
    %cst_504 = arith.constant 5.000000e-01 : f32
    %2029 = vector.broadcast %cst_504 : f32 to vector<1x128xf32>
    %2030 = arith.mulf %2029, %2025 : vector<1x128xf32>
    %2031 = arith.addf %1644, %2030 : vector<1x128xf32>
    %cst_505 = arith.constant 5.000000e-01 : f32
    %2032 = vector.broadcast %cst_505 : f32 to vector<1x128xf32>
    %2033 = arith.mulf %2032, %2026 : vector<1x128xf32>
    %2034 = arith.addf %1646, %2033 : vector<1x128xf32>
    %cst_506 = arith.constant 5.000000e-01 : f32
    %2035 = vector.broadcast %cst_506 : f32 to vector<1x128xf32>
    %2036 = arith.mulf %2035, %2027 : vector<1x128xf32>
    %2037 = arith.addf %1652, %2036 : vector<1x128xf32>
    %cst_507 = arith.constant 5.000000e-01 : f32
    %2038 = vector.broadcast %cst_507 : f32 to vector<1x128xf32>
    %2039 = arith.mulf %2038, %2028 : vector<1x128xf32>
    %2040 = arith.addf %1654, %2039 : vector<1x128xf32>
    %cst_508 = arith.constant 1.000000e+00 : f32
    %2041 = vector.broadcast %cst_508 : f32 to vector<1x128xf32>
    %2042 = arith.maximumf %2025, %2041 : vector<1x128xf32>
    %2043 = math.log %2042 : vector<1x128xf32>
    %cst_509 = arith.constant 1.000000e+00 : f32
    %2044 = vector.broadcast %cst_509 : f32 to vector<1x128xf32>
    %2045 = arith.maximumf %2026, %2044 : vector<1x128xf32>
    %2046 = math.log %2045 : vector<1x128xf32>
    %cst_510 = arith.constant 1.000000e+00 : f32
    %2047 = vector.broadcast %cst_510 : f32 to vector<1x128xf32>
    %2048 = arith.maximumf %2027, %2047 : vector<1x128xf32>
    %2049 = math.log %2048 : vector<1x128xf32>
    %cst_511 = arith.constant 1.000000e+00 : f32
    %2050 = vector.broadcast %cst_511 : f32 to vector<1x128xf32>
    %2051 = arith.maximumf %2028, %2050 : vector<1x128xf32>
    %2052 = math.log %2051 : vector<1x128xf32>
    %c0_512 = arith.constant 0 : index
    %c0_513 = arith.constant 0 : index
    %c0_514 = arith.constant 0 : index
    %c0_515 = arith.constant 0 : index
    %2053 = vector.load %arg5[%c0_512, %c0_513, %c0_514, %c0_515] : memref<1x4x1x128xf32, #tpu.memory_space<vmem>>, vector<1x1x1x128xf32>
    %2054 = vector.shape_cast %2053 : vector<1x1x1x128xf32> to vector<1x128xf32>
    %c0_516 = arith.constant 0 : index
    %c1_517 = arith.constant 1 : index
    %c0_518 = arith.constant 0 : index
    %c0_519 = arith.constant 0 : index
    %2055 = vector.load %arg5[%c0_516, %c1_517, %c0_518, %c0_519] : memref<1x4x1x128xf32, #tpu.memory_space<vmem>>, vector<1x1x1x128xf32>
    %2056 = vector.shape_cast %2055 : vector<1x1x1x128xf32> to vector<1x128xf32>
    %c0_520 = arith.constant 0 : index
    %c2_521 = arith.constant 2 : index
    %c0_522 = arith.constant 0 : index
    %c0_523 = arith.constant 0 : index
    %2057 = vector.load %arg5[%c0_520, %c2_521, %c0_522, %c0_523] : memref<1x4x1x128xf32, #tpu.memory_space<vmem>>, vector<1x1x1x128xf32>
    %2058 = vector.shape_cast %2057 : vector<1x1x1x128xf32> to vector<1x128xf32>
    %c0_524 = arith.constant 0 : index
    %c3_525 = arith.constant 3 : index
    %c0_526 = arith.constant 0 : index
    %c0_527 = arith.constant 0 : index
    %2059 = vector.load %arg5[%c0_524, %c3_525, %c0_526, %c0_527] : memref<1x4x1x128xf32, #tpu.memory_space<vmem>>, vector<1x1x1x128xf32>
    %2060 = vector.shape_cast %2059 : vector<1x1x1x128xf32> to vector<1x128xf32>
    %c0_528 = arith.constant 0 : index
    %c0_529 = arith.constant 0 : index
    %c0_530 = arith.constant 0 : index
    %c0_531 = arith.constant 0 : index
    %2061 = vector.load %arg6[%c0_528, %c0_529, %c0_530, %c0_531] : memref<1x4x1x128xf32, #tpu.memory_space<vmem>>, vector<1x1x1x128xf32>
    %2062 = vector.shape_cast %2061 : vector<1x1x1x128xf32> to vector<1x128xf32>
    %c0_532 = arith.constant 0 : index
    %c1_533 = arith.constant 1 : index
    %c0_534 = arith.constant 0 : index
    %c0_535 = arith.constant 0 : index
    %2063 = vector.load %arg6[%c0_532, %c1_533, %c0_534, %c0_535] : memref<1x4x1x128xf32, #tpu.memory_space<vmem>>, vector<1x1x1x128xf32>
    %2064 = vector.shape_cast %2063 : vector<1x1x1x128xf32> to vector<1x128xf32>
    %c0_536 = arith.constant 0 : index
    %c2_537 = arith.constant 2 : index
    %c0_538 = arith.constant 0 : index
    %c0_539 = arith.constant 0 : index
    %2065 = vector.load %arg6[%c0_536, %c2_537, %c0_538, %c0_539] : memref<1x4x1x128xf32, #tpu.memory_space<vmem>>, vector<1x1x1x128xf32>
    %2066 = vector.shape_cast %2065 : vector<1x1x1x128xf32> to vector<1x128xf32>
    %c0_540 = arith.constant 0 : index
    %c3_541 = arith.constant 3 : index
    %c0_542 = arith.constant 0 : index
    %c0_543 = arith.constant 0 : index
    %2067 = vector.load %arg6[%c0_540, %c3_541, %c0_542, %c0_543] : memref<1x4x1x128xf32, #tpu.memory_space<vmem>>, vector<1x1x1x128xf32>
    %2068 = vector.shape_cast %2067 : vector<1x1x1x128xf32> to vector<1x128xf32>
    %2069 = arith.subf %2034, %15 : vector<1x128xf32>
    %2070 = arith.mulf %2069, %20 : vector<1x128xf32>
    %2071 = arith.subf %2070, %2054 : vector<1x128xf32>
    %2072 = math.absf %2071 : vector<1x128xf32>
    %cst_544 = arith.constant 0.111111112 : f32
    %2073 = vector.broadcast %cst_544 : f32 to vector<1x128xf32>
    %2074 = arith.cmpf ole, %2072, %2073 : vector<1x128xf32>
    %cst_545 = arith.constant 4.500000e+00 : f32
    %2075 = vector.broadcast %cst_545 : f32 to vector<1x128xf32>
    %2076 = arith.mulf %2075, %2072 : vector<1x128xf32>
    %2077 = arith.mulf %2076, %2072 : vector<1x128xf32>
    %cst_546 = arith.constant 0.055555556 : f32
    %2078 = vector.broadcast %cst_546 : f32 to vector<1x128xf32>
    %2079 = arith.subf %2072, %2078 : vector<1x128xf32>
    %2080 = arith.select %2074, %2077, %2079 : vector<1x128xi1>, vector<1x128xf32>
    %2081 = arith.subf %2031, %12 : vector<1x128xf32>
    %2082 = arith.mulf %2081, %18 : vector<1x128xf32>
    %2083 = arith.subf %2082, %2056 : vector<1x128xf32>
    %2084 = math.absf %2083 : vector<1x128xf32>
    %cst_547 = arith.constant 0.111111112 : f32
    %2085 = vector.broadcast %cst_547 : f32 to vector<1x128xf32>
    %2086 = arith.cmpf ole, %2084, %2085 : vector<1x128xf32>
    %cst_548 = arith.constant 4.500000e+00 : f32
    %2087 = vector.broadcast %cst_548 : f32 to vector<1x128xf32>
    %2088 = arith.mulf %2087, %2084 : vector<1x128xf32>
    %2089 = arith.mulf %2088, %2084 : vector<1x128xf32>
    %cst_549 = arith.constant 0.055555556 : f32
    %2090 = vector.broadcast %cst_549 : f32 to vector<1x128xf32>
    %2091 = arith.subf %2084, %2090 : vector<1x128xf32>
    %2092 = arith.select %2086, %2089, %2091 : vector<1x128xi1>, vector<1x128xf32>
    %2093 = arith.addf %2080, %2092 : vector<1x128xf32>
    %2094 = arith.subf %2046, %22 : vector<1x128xf32>
    %2095 = arith.subf %2094, %2058 : vector<1x128xf32>
    %2096 = math.absf %2095 : vector<1x128xf32>
    %cst_550 = arith.constant 0.111111112 : f32
    %2097 = vector.broadcast %cst_550 : f32 to vector<1x128xf32>
    %2098 = arith.cmpf ole, %2096, %2097 : vector<1x128xf32>
    %cst_551 = arith.constant 4.500000e+00 : f32
    %2099 = vector.broadcast %cst_551 : f32 to vector<1x128xf32>
    %2100 = arith.mulf %2099, %2096 : vector<1x128xf32>
    %2101 = arith.mulf %2100, %2096 : vector<1x128xf32>
    %cst_552 = arith.constant 0.055555556 : f32
    %2102 = vector.broadcast %cst_552 : f32 to vector<1x128xf32>
    %2103 = arith.subf %2096, %2102 : vector<1x128xf32>
    %2104 = arith.select %2098, %2101, %2103 : vector<1x128xi1>, vector<1x128xf32>
    %2105 = arith.addf %2093, %2104 : vector<1x128xf32>
    %2106 = arith.subf %2043, %21 : vector<1x128xf32>
    %2107 = arith.subf %2106, %2060 : vector<1x128xf32>
    %2108 = math.absf %2107 : vector<1x128xf32>
    %cst_553 = arith.constant 0.111111112 : f32
    %2109 = vector.broadcast %cst_553 : f32 to vector<1x128xf32>
    %2110 = arith.cmpf ole, %2108, %2109 : vector<1x128xf32>
    %cst_554 = arith.constant 4.500000e+00 : f32
    %2111 = vector.broadcast %cst_554 : f32 to vector<1x128xf32>
    %2112 = arith.mulf %2111, %2108 : vector<1x128xf32>
    %2113 = arith.mulf %2112, %2108 : vector<1x128xf32>
    %cst_555 = arith.constant 0.055555556 : f32
    %2114 = vector.broadcast %cst_555 : f32 to vector<1x128xf32>
    %2115 = arith.subf %2108, %2114 : vector<1x128xf32>
    %2116 = arith.select %2110, %2113, %2115 : vector<1x128xi1>, vector<1x128xf32>
    %2117 = arith.addf %2105, %2116 : vector<1x128xf32>
    %2118 = arith.subf %2040, %15 : vector<1x128xf32>
    %2119 = arith.mulf %2118, %20 : vector<1x128xf32>
    %2120 = arith.subf %2119, %2062 : vector<1x128xf32>
    %2121 = math.absf %2120 : vector<1x128xf32>
    %cst_556 = arith.constant 0.111111112 : f32
    %2122 = vector.broadcast %cst_556 : f32 to vector<1x128xf32>
    %2123 = arith.cmpf ole, %2121, %2122 : vector<1x128xf32>
    %cst_557 = arith.constant 4.500000e+00 : f32
    %2124 = vector.broadcast %cst_557 : f32 to vector<1x128xf32>
    %2125 = arith.mulf %2124, %2121 : vector<1x128xf32>
    %2126 = arith.mulf %2125, %2121 : vector<1x128xf32>
    %cst_558 = arith.constant 0.055555556 : f32
    %2127 = vector.broadcast %cst_558 : f32 to vector<1x128xf32>
    %2128 = arith.subf %2121, %2127 : vector<1x128xf32>
    %2129 = arith.select %2123, %2126, %2128 : vector<1x128xi1>, vector<1x128xf32>
    %2130 = arith.subf %2037, %12 : vector<1x128xf32>
    %2131 = arith.mulf %2130, %18 : vector<1x128xf32>
    %2132 = arith.subf %2131, %2064 : vector<1x128xf32>
    %2133 = math.absf %2132 : vector<1x128xf32>
    %cst_559 = arith.constant 0.111111112 : f32
    %2134 = vector.broadcast %cst_559 : f32 to vector<1x128xf32>
    %2135 = arith.cmpf ole, %2133, %2134 : vector<1x128xf32>
    %cst_560 = arith.constant 4.500000e+00 : f32
    %2136 = vector.broadcast %cst_560 : f32 to vector<1x128xf32>
    %2137 = arith.mulf %2136, %2133 : vector<1x128xf32>
    %2138 = arith.mulf %2137, %2133 : vector<1x128xf32>
    %cst_561 = arith.constant 0.055555556 : f32
    %2139 = vector.broadcast %cst_561 : f32 to vector<1x128xf32>
    %2140 = arith.subf %2133, %2139 : vector<1x128xf32>
    %2141 = arith.select %2135, %2138, %2140 : vector<1x128xi1>, vector<1x128xf32>
    %2142 = arith.addf %2129, %2141 : vector<1x128xf32>
    %2143 = arith.subf %2052, %22 : vector<1x128xf32>
    %2144 = arith.subf %2143, %2066 : vector<1x128xf32>
    %2145 = math.absf %2144 : vector<1x128xf32>
    %cst_562 = arith.constant 0.111111112 : f32
    %2146 = vector.broadcast %cst_562 : f32 to vector<1x128xf32>
    %2147 = arith.cmpf ole, %2145, %2146 : vector<1x128xf32>
    %cst_563 = arith.constant 4.500000e+00 : f32
    %2148 = vector.broadcast %cst_563 : f32 to vector<1x128xf32>
    %2149 = arith.mulf %2148, %2145 : vector<1x128xf32>
    %2150 = arith.mulf %2149, %2145 : vector<1x128xf32>
    %cst_564 = arith.constant 0.055555556 : f32
    %2151 = vector.broadcast %cst_564 : f32 to vector<1x128xf32>
    %2152 = arith.subf %2145, %2151 : vector<1x128xf32>
    %2153 = arith.select %2147, %2150, %2152 : vector<1x128xi1>, vector<1x128xf32>
    %2154 = arith.addf %2142, %2153 : vector<1x128xf32>
    %2155 = arith.subf %2049, %21 : vector<1x128xf32>
    %2156 = arith.subf %2155, %2068 : vector<1x128xf32>
    %2157 = math.absf %2156 : vector<1x128xf32>
    %cst_565 = arith.constant 0.111111112 : f32
    %2158 = vector.broadcast %cst_565 : f32 to vector<1x128xf32>
    %2159 = arith.cmpf ole, %2157, %2158 : vector<1x128xf32>
    %cst_566 = arith.constant 4.500000e+00 : f32
    %2160 = vector.broadcast %cst_566 : f32 to vector<1x128xf32>
    %2161 = arith.mulf %2160, %2157 : vector<1x128xf32>
    %2162 = arith.mulf %2161, %2157 : vector<1x128xf32>
    %cst_567 = arith.constant 0.055555556 : f32
    %2163 = vector.broadcast %cst_567 : f32 to vector<1x128xf32>
    %2164 = arith.subf %2157, %2163 : vector<1x128xf32>
    %2165 = arith.select %2159, %2162, %2164 : vector<1x128xi1>, vector<1x128xf32>
    %2166 = arith.addf %2154, %2165 : vector<1x128xf32>
    %2167 = arith.subf %2040, %2034 : vector<1x128xf32>
    %2168 = arith.mulf %2167, %20 : vector<1x128xf32>
    %2169 = arith.subf %2062, %2054 : vector<1x128xf32>
    %2170 = arith.subf %2168, %2169 : vector<1x128xf32>
    %2171 = math.absf %2170 : vector<1x128xf32>
    %cst_568 = arith.constant 0.111111112 : f32
    %2172 = vector.broadcast %cst_568 : f32 to vector<1x128xf32>
    %2173 = arith.cmpf ole, %2171, %2172 : vector<1x128xf32>
    %cst_569 = arith.constant 4.500000e+00 : f32
    %2174 = vector.broadcast %cst_569 : f32 to vector<1x128xf32>
    %2175 = arith.mulf %2174, %2171 : vector<1x128xf32>
    %2176 = arith.mulf %2175, %2171 : vector<1x128xf32>
    %cst_570 = arith.constant 0.055555556 : f32
    %2177 = vector.broadcast %cst_570 : f32 to vector<1x128xf32>
    %2178 = arith.subf %2171, %2177 : vector<1x128xf32>
    %2179 = arith.select %2173, %2176, %2178 : vector<1x128xi1>, vector<1x128xf32>
    %2180 = arith.subf %2037, %2031 : vector<1x128xf32>
    %2181 = arith.mulf %2180, %18 : vector<1x128xf32>
    %2182 = arith.subf %2064, %2056 : vector<1x128xf32>
    %2183 = arith.subf %2181, %2182 : vector<1x128xf32>
    %2184 = math.absf %2183 : vector<1x128xf32>
    %cst_571 = arith.constant 0.111111112 : f32
    %2185 = vector.broadcast %cst_571 : f32 to vector<1x128xf32>
    %2186 = arith.cmpf ole, %2184, %2185 : vector<1x128xf32>
    %cst_572 = arith.constant 4.500000e+00 : f32
    %2187 = vector.broadcast %cst_572 : f32 to vector<1x128xf32>
    %2188 = arith.mulf %2187, %2184 : vector<1x128xf32>
    %2189 = arith.mulf %2188, %2184 : vector<1x128xf32>
    %cst_573 = arith.constant 0.055555556 : f32
    %2190 = vector.broadcast %cst_573 : f32 to vector<1x128xf32>
    %2191 = arith.subf %2184, %2190 : vector<1x128xf32>
    %2192 = arith.select %2186, %2189, %2191 : vector<1x128xi1>, vector<1x128xf32>
    %2193 = arith.addf %2179, %2192 : vector<1x128xf32>
    %2194 = arith.subf %2052, %2046 : vector<1x128xf32>
    %2195 = arith.subf %2066, %2058 : vector<1x128xf32>
    %2196 = arith.subf %2194, %2195 : vector<1x128xf32>
    %2197 = math.absf %2196 : vector<1x128xf32>
    %cst_574 = arith.constant 0.111111112 : f32
    %2198 = vector.broadcast %cst_574 : f32 to vector<1x128xf32>
    %2199 = arith.cmpf ole, %2197, %2198 : vector<1x128xf32>
    %cst_575 = arith.constant 4.500000e+00 : f32
    %2200 = vector.broadcast %cst_575 : f32 to vector<1x128xf32>
    %2201 = arith.mulf %2200, %2197 : vector<1x128xf32>
    %2202 = arith.mulf %2201, %2197 : vector<1x128xf32>
    %cst_576 = arith.constant 0.055555556 : f32
    %2203 = vector.broadcast %cst_576 : f32 to vector<1x128xf32>
    %2204 = arith.subf %2197, %2203 : vector<1x128xf32>
    %2205 = arith.select %2199, %2202, %2204 : vector<1x128xi1>, vector<1x128xf32>
    %2206 = arith.addf %2193, %2205 : vector<1x128xf32>
    %2207 = arith.subf %2049, %2043 : vector<1x128xf32>
    %2208 = arith.subf %2068, %2060 : vector<1x128xf32>
    %2209 = arith.subf %2207, %2208 : vector<1x128xf32>
    %2210 = math.absf %2209 : vector<1x128xf32>
    %cst_577 = arith.constant 0.111111112 : f32
    %2211 = vector.broadcast %cst_577 : f32 to vector<1x128xf32>
    %2212 = arith.cmpf ole, %2210, %2211 : vector<1x128xf32>
    %cst_578 = arith.constant 4.500000e+00 : f32
    %2213 = vector.broadcast %cst_578 : f32 to vector<1x128xf32>
    %2214 = arith.mulf %2213, %2210 : vector<1x128xf32>
    %2215 = arith.mulf %2214, %2210 : vector<1x128xf32>
    %cst_579 = arith.constant 0.055555556 : f32
    %2216 = vector.broadcast %cst_579 : f32 to vector<1x128xf32>
    %2217 = arith.subf %2210, %2216 : vector<1x128xf32>
    %2218 = arith.select %2212, %2215, %2217 : vector<1x128xi1>, vector<1x128xf32>
    %2219 = arith.addf %2206, %2218 : vector<1x128xf32>
    %c0_i32_580 = arith.constant 0 : i32
    %2220 = arith.cmpi eq, %arg1, %c0_i32_580 : i32
    %2221 = arith.extui %2220 : i1 to i32
    %c0_i32_581 = arith.constant 0 : i32
    %2222 = arith.cmpi ne, %2221, %c0_i32_581 : i32
    scf.if %2222 {
      %cst_611 = arith.constant 0.000000e+00 : f32
      %2254 = vector.broadcast %cst_611 : f32 to vector<1x128xf32>
      %c0_612 = arith.constant 0 : index
      %c0_613 = arith.constant 0 : index
      %2255 = vector.load %arg8[%c0_612, %c0_613] : memref<1x128xf32, #tpu.memory_space<vmem>>, vector<1x128xf32>
      tpu.vector_store %arg8[%c0_612, %c0_613], %2254 {strides = array<i32>} : memref<1x128xf32, #tpu.memory_space<vmem>>, vector<1x128xf32>,
      %cst_614 = arith.constant 0.000000e+00 : f32
      %2256 = vector.broadcast %cst_614 : f32 to vector<1x128xf32>
      %c0_615 = arith.constant 0 : index
      %c0_616 = arith.constant 0 : index
      %2257 = vector.load %arg9[%c0_615, %c0_616] : memref<1x128xf32, #tpu.memory_space<vmem>>, vector<1x128xf32>
      tpu.vector_store %arg9[%c0_615, %c0_616], %2256 {strides = array<i32>} : memref<1x128xf32, #tpu.memory_space<vmem>>, vector<1x128xf32>,
      %cst_617 = arith.constant 0.000000e+00 : f32
      %2258 = vector.broadcast %cst_617 : f32 to vector<1x128xf32>
      %c0_618 = arith.constant 0 : index
      %c0_619 = arith.constant 0 : index
      %2259 = vector.load %arg10[%c0_618, %c0_619] : memref<1x128xf32, #tpu.memory_space<vmem>>, vector<1x128xf32>
      tpu.vector_store %arg10[%c0_618, %c0_619], %2258 {strides = array<i32>} : memref<1x128xf32, #tpu.memory_space<vmem>>, vector<1x128xf32>,
      %cst_620 = arith.constant 0.000000e+00 : f32
      %2260 = vector.broadcast %cst_620 : f32 to vector<1x128xf32>
      %c0_621 = arith.constant 0 : index
      %c0_622 = arith.constant 0 : index
      %2261 = vector.load %arg11[%c0_621, %c0_622] : memref<1x128xf32, #tpu.memory_space<vmem>>, vector<1x128xf32>
      tpu.vector_store %arg11[%c0_621, %c0_622], %2260 {strides = array<i32>} : memref<1x128xf32, #tpu.memory_space<vmem>>, vector<1x128xf32>,
      %cst_623 = arith.constant 0.000000e+00 : f32
      %2262 = vector.broadcast %cst_623 : f32 to vector<1x128xf32>
      %c0_624 = arith.constant 0 : index
      %c0_625 = arith.constant 0 : index
      %2263 = vector.load %arg12[%c0_624, %c0_625] : memref<1x128xf32, #tpu.memory_space<vmem>>, vector<1x128xf32>
      tpu.vector_store %arg12[%c0_624, %c0_625], %2262 {strides = array<i32>} : memref<1x128xf32, #tpu.memory_space<vmem>>, vector<1x128xf32>,
      %cst_626 = arith.constant 0.000000e+00 : f32
      %2264 = vector.broadcast %cst_626 : f32 to vector<1x128xf32>
      %c0_627 = arith.constant 0 : index
      %c0_628 = arith.constant 0 : index
      %2265 = vector.load %arg13[%c0_627, %c0_628] : memref<1x128xf32, #tpu.memory_space<vmem>>, vector<1x128xf32>
      tpu.vector_store %arg13[%c0_627, %c0_628], %2264 {strides = array<i32>} : memref<1x128xf32, #tpu.memory_space<vmem>>, vector<1x128xf32>,
    } else {
    }
    %c0_582 = arith.constant 0 : index
    %c0_583 = arith.constant 0 : index
    %2223 = vector.load %arg8[%c0_582, %c0_583] : memref<1x128xf32, #tpu.memory_space<vmem>>, vector<1x128xf32>
    %2224 = arith.addf %2223, %2024 : vector<1x128xf32>
    %c0_584 = arith.constant 0 : index
    %c0_585 = arith.constant 0 : index
    %2225 = vector.load %arg8[%c0_584, %c0_585] : memref<1x128xf32, #tpu.memory_space<vmem>>, vector<1x128xf32>
    tpu.vector_store %arg8[%c0_584, %c0_585], %2224 {strides = array<i32>} : memref<1x128xf32, #tpu.memory_space<vmem>>, vector<1x128xf32>,
    %c0_586 = arith.constant 0 : index
    %c0_587 = arith.constant 0 : index
    %2226 = vector.load %arg9[%c0_586, %c0_587] : memref<1x128xf32, #tpu.memory_space<vmem>>, vector<1x128xf32>
    %2227 = arith.extui %1732 : vector<1x128xi1> to vector<1x128xi32>
    %2228 = arith.sitofp %2227 : vector<1x128xi32> to vector<1x128xf32>
    %2229 = arith.addf %2226, %2228 : vector<1x128xf32>
    %c0_588 = arith.constant 0 : index
    %c0_589 = arith.constant 0 : index
    %2230 = vector.load %arg9[%c0_588, %c0_589] : memref<1x128xf32, #tpu.memory_space<vmem>>, vector<1x128xf32>
    tpu.vector_store %arg9[%c0_588, %c0_589], %2229 {strides = array<i32>} : memref<1x128xf32, #tpu.memory_space<vmem>>, vector<1x128xf32>,
    %c0_590 = arith.constant 0 : index
    %c0_591 = arith.constant 0 : index
    %2231 = vector.load %arg10[%c0_590, %c0_591] : memref<1x128xf32, #tpu.memory_space<vmem>>, vector<1x128xf32>
    %2232 = arith.extui %1734 : vector<1x128xi1> to vector<1x128xi32>
    %2233 = arith.sitofp %2232 : vector<1x128xi32> to vector<1x128xf32>
    %2234 = arith.addf %2231, %2233 : vector<1x128xf32>
    %c0_592 = arith.constant 0 : index
    %c0_593 = arith.constant 0 : index
    %2235 = vector.load %arg10[%c0_592, %c0_593] : memref<1x128xf32, #tpu.memory_space<vmem>>, vector<1x128xf32>
    tpu.vector_store %arg10[%c0_592, %c0_593], %2234 {strides = array<i32>} : memref<1x128xf32, #tpu.memory_space<vmem>>, vector<1x128xf32>,
    %c0_594 = arith.constant 0 : index
    %c0_595 = arith.constant 0 : index
    %2236 = vector.load %arg11[%c0_594, %c0_595] : memref<1x128xf32, #tpu.memory_space<vmem>>, vector<1x128xf32>
    %cst_596 = arith.constant 0.000000e+00 : f32
    %2237 = vector.broadcast %cst_596 : f32 to vector<1x128xf32>
    %2238 = arith.select %1734, %2117, %2237 : vector<1x128xi1>, vector<1x128xf32>
    %2239 = arith.addf %2236, %2238 : vector<1x128xf32>
    %c0_597 = arith.constant 0 : index
    %c0_598 = arith.constant 0 : index
    %2240 = vector.load %arg11[%c0_597, %c0_598] : memref<1x128xf32, #tpu.memory_space<vmem>>, vector<1x128xf32>
    tpu.vector_store %arg11[%c0_597, %c0_598], %2239 {strides = array<i32>} : memref<1x128xf32, #tpu.memory_space<vmem>>, vector<1x128xf32>,
    %c0_599 = arith.constant 0 : index
    %c0_600 = arith.constant 0 : index
    %2241 = vector.load %arg12[%c0_599, %c0_600] : memref<1x128xf32, #tpu.memory_space<vmem>>, vector<1x128xf32>
    %cst_601 = arith.constant 0.000000e+00 : f32
    %2242 = vector.broadcast %cst_601 : f32 to vector<1x128xf32>
    %2243 = arith.select %1734, %2166, %2242 : vector<1x128xi1>, vector<1x128xf32>
    %2244 = arith.addf %2241, %2243 : vector<1x128xf32>
    %c0_602 = arith.constant 0 : index
    %c0_603 = arith.constant 0 : index
    %2245 = vector.load %arg12[%c0_602, %c0_603] : memref<1x128xf32, #tpu.memory_space<vmem>>, vector<1x128xf32>
    tpu.vector_store %arg12[%c0_602, %c0_603], %2244 {strides = array<i32>} : memref<1x128xf32, #tpu.memory_space<vmem>>, vector<1x128xf32>,
    %c0_604 = arith.constant 0 : index
    %c0_605 = arith.constant 0 : index
    %2246 = vector.load %arg13[%c0_604, %c0_605] : memref<1x128xf32, #tpu.memory_space<vmem>>, vector<1x128xf32>
    %cst_606 = arith.constant 0.000000e+00 : f32
    %2247 = vector.broadcast %cst_606 : f32 to vector<1x128xf32>
    %2248 = arith.select %1734, %2219, %2247 : vector<1x128xi1>, vector<1x128xf32>
    %2249 = arith.addf %2246, %2248 : vector<1x128xf32>
    %c0_607 = arith.constant 0 : index
    %c0_608 = arith.constant 0 : index
    %2250 = vector.load %arg13[%c0_607, %c0_608] : memref<1x128xf32, #tpu.memory_space<vmem>>, vector<1x128xf32>
    tpu.vector_store %arg13[%c0_607, %c0_608], %2249 {strides = array<i32>} : memref<1x128xf32, #tpu.memory_space<vmem>>, vector<1x128xf32>,
    %c0_i32_609 = arith.constant 0 : i32
    %2251 = arith.cmpi eq, %arg1, %c0_i32_609 : i32
    %2252 = arith.extui %2251 : i1 to i32
    %c0_i32_610 = arith.constant 0 : i32
    %2253 = arith.cmpi ne, %2252, %c0_i32_610 : i32
    scf.if %2253 {
      %c0_611 = arith.constant 0 : index
      %c0_612 = arith.constant 0 : index
      %2254 = vector.load %arg9[%c0_611, %c0_612] : memref<1x128xf32, #tpu.memory_space<vmem>>, vector<1x128xf32>
      %cst_613 = arith.constant dense<0.000000e+00> : vector<1xf32>
      %2255 = vector.multi_reduction <add>, %2254, %cst_613 [1] : vector<1x128xf32> to vector<1xf32>
      %2256 = vector.shape_cast %2255 : vector<1xf32> to vector<1x1xf32>
      %cst_614 = arith.constant dense<0.000000e+00> : vector<1xf32>
      %2257 = vector.multi_reduction <add>, %2256, %cst_614 [0] : vector<1x1xf32> to vector<1xf32>
      %2258 = vector.shape_cast %2257 : vector<1xf32> to vector<1x1xf32>
      %c0_615 = arith.constant 0 : index
      %c0_616 = arith.constant 0 : index
      %2259 = vector.load %arg10[%c0_615, %c0_616] : memref<1x128xf32, #tpu.memory_space<vmem>>, vector<1x128xf32>
      %cst_617 = arith.constant dense<0.000000e+00> : vector<1xf32>
      %2260 = vector.multi_reduction <add>, %2259, %cst_617 [1] : vector<1x128xf32> to vector<1xf32>
      %2261 = vector.shape_cast %2260 : vector<1xf32> to vector<1x1xf32>
      %cst_618 = arith.constant dense<0.000000e+00> : vector<1xf32>
      %2262 = vector.multi_reduction <add>, %2261, %cst_618 [0] : vector<1x1xf32> to vector<1xf32>
      %2263 = vector.shape_cast %2262 : vector<1xf32> to vector<1x1xf32>
      %c0_619 = arith.constant 0 : index
      %c0_620 = arith.constant 0 : index
      %2264 = vector.load %arg8[%c0_619, %c0_620] : memref<1x128xf32, #tpu.memory_space<vmem>>, vector<1x128xf32>
      %cst_621 = arith.constant dense<0.000000e+00> : vector<1xf32>
      %2265 = vector.multi_reduction <add>, %2264, %cst_621 [1] : vector<1x128xf32> to vector<1xf32>
      %2266 = vector.shape_cast %2265 : vector<1xf32> to vector<1x1xf32>
      %cst_622 = arith.constant dense<0.000000e+00> : vector<1xf32>
      %2267 = vector.multi_reduction <add>, %2266, %cst_622 [0] : vector<1x1xf32> to vector<1xf32>
      %2268 = vector.shape_cast %2267 : vector<1xf32> to vector<1x1xf32>
      %cst_623 = arith.constant 1.000000e+00 : f32
      %2269 = vector.broadcast %cst_623 : f32 to vector<1x1xf32>
      %2270 = arith.maximumf %2258, %2269 : vector<1x1xf32>
      %2271 = arith.divf %2268, %2270 : vector<1x1xf32>
      %cst_624 = arith.constant 0.000000e+00 : f32
      %2272 = vector.broadcast %cst_624 : f32 to vector<1x1xf32>
      %2273 = arith.cmpf ogt, %2263, %2272 : vector<1x1xf32>
      %cst_625 = arith.constant 1.000000e+00 : f32
      %2274 = vector.broadcast %cst_625 : f32 to vector<1x1xf32>
      %2275 = arith.maximumf %2263, %2274 : vector<1x1xf32>
      %cst_626 = arith.constant 4.000000e+00 : f32
      %2276 = vector.broadcast %cst_626 : f32 to vector<1x1xf32>
      %2277 = arith.mulf %2276, %2275 : vector<1x1xf32>
      %c0_627 = arith.constant 0 : index
      %c0_628 = arith.constant 0 : index
      %2278 = vector.load %arg11[%c0_627, %c0_628] : memref<1x128xf32, #tpu.memory_space<vmem>>, vector<1x128xf32>
      %cst_629 = arith.constant dense<0.000000e+00> : vector<1xf32>
      %2279 = vector.multi_reduction <add>, %2278, %cst_629 [1] : vector<1x128xf32> to vector<1xf32>
      %2280 = vector.shape_cast %2279 : vector<1xf32> to vector<1x1xf32>
      %cst_630 = arith.constant dense<0.000000e+00> : vector<1xf32>
      %2281 = vector.multi_reduction <add>, %2280, %cst_630 [0] : vector<1x1xf32> to vector<1xf32>
      %2282 = vector.shape_cast %2281 : vector<1xf32> to vector<1x1xf32>
      %2283 = arith.divf %2282, %2277 : vector<1x1xf32>
      %cst_631 = arith.constant 0.000000e+00 : f32
      %2284 = vector.broadcast %cst_631 : f32 to vector<1x1xf32>
      %2285 = arith.select %2273, %2283, %2284 : vector<1x1xi1>, vector<1x1xf32>
      %c0_632 = arith.constant 0 : index
      %c0_633 = arith.constant 0 : index
      %2286 = vector.load %arg12[%c0_632, %c0_633] : memref<1x128xf32, #tpu.memory_space<vmem>>, vector<1x128xf32>
      %cst_634 = arith.constant dense<0.000000e+00> : vector<1xf32>
      %2287 = vector.multi_reduction <add>, %2286, %cst_634 [1] : vector<1x128xf32> to vector<1xf32>
      %2288 = vector.shape_cast %2287 : vector<1xf32> to vector<1x1xf32>
      %cst_635 = arith.constant dense<0.000000e+00> : vector<1xf32>
      %2289 = vector.multi_reduction <add>, %2288, %cst_635 [0] : vector<1x1xf32> to vector<1xf32>
      %2290 = vector.shape_cast %2289 : vector<1xf32> to vector<1x1xf32>
      %2291 = arith.divf %2290, %2277 : vector<1x1xf32>
      %cst_636 = arith.constant 0.000000e+00 : f32
      %2292 = vector.broadcast %cst_636 : f32 to vector<1x1xf32>
      %2293 = arith.select %2273, %2291, %2292 : vector<1x1xi1>, vector<1x1xf32>
      %c0_637 = arith.constant 0 : index
      %c0_638 = arith.constant 0 : index
      %2294 = vector.load %arg13[%c0_637, %c0_638] : memref<1x128xf32, #tpu.memory_space<vmem>>, vector<1x128xf32>
      %cst_639 = arith.constant dense<0.000000e+00> : vector<1xf32>
      %2295 = vector.multi_reduction <add>, %2294, %cst_639 [1] : vector<1x128xf32> to vector<1xf32>
      %2296 = vector.shape_cast %2295 : vector<1xf32> to vector<1x1xf32>
      %cst_640 = arith.constant dense<0.000000e+00> : vector<1xf32>
      %2297 = vector.multi_reduction <add>, %2296, %cst_640 [0] : vector<1x1xf32> to vector<1xf32>
      %2298 = vector.shape_cast %2297 : vector<1xf32> to vector<1x1xf32>
      %2299 = arith.divf %2298, %2277 : vector<1x1xf32>
      %cst_641 = arith.constant 0.000000e+00 : f32
      %2300 = vector.broadcast %cst_641 : f32 to vector<1x1xf32>
      %2301 = arith.select %2273, %2299, %2300 : vector<1x1xi1>, vector<1x1xf32>
      %2302 = tpu.iota {dimensions = array<i32: 1>} : vector<1x4xi32>
      %c0_i32_642 = arith.constant 0 : i32
      %2303 = vector.broadcast %c0_i32_642 : i32 to vector<1x4xi32>
      %2304 = arith.cmpi eq, %2302, %2303 : vector<1x4xi32>
      %c1_i32_643 = arith.constant 1 : i32
      %2305 = vector.broadcast %c1_i32_643 : i32 to vector<1x4xi32>
      %2306 = arith.cmpi eq, %2302, %2305 : vector<1x4xi32>
      %c2_i32_644 = arith.constant 2 : i32
      %2307 = vector.broadcast %c2_i32_644 : i32 to vector<1x4xi32>
      %2308 = arith.cmpi eq, %2302, %2307 : vector<1x4xi32>
      %2309 = vector.shape_cast %2293 : vector<1x1xf32> to vector<1x1xf32>
      %2310 = vector.broadcast %2309 : vector<1x1xf32> to vector<1x4xf32>
      %2311 = vector.shape_cast %2301 : vector<1x1xf32> to vector<1x1xf32>
      %2312 = vector.broadcast %2311 : vector<1x1xf32> to vector<1x4xf32>
      %2313 = arith.select %2308, %2310, %2312 : vector<1x4xi1>, vector<1x4xf32>
      %2314 = vector.shape_cast %2285 : vector<1x1xf32> to vector<1x1xf32>
      %2315 = vector.broadcast %2314 : vector<1x1xf32> to vector<1x4xf32>
      %2316 = arith.select %2306, %2315, %2313 : vector<1x4xi1>, vector<1x4xf32>
      %2317 = vector.shape_cast %2271 : vector<1x1xf32> to vector<1x1xf32>
      %2318 = vector.broadcast %2317 : vector<1x1xf32> to vector<1x4xf32>
      %2319 = arith.select %2304, %2318, %2316 : vector<1x4xi1>, vector<1x4xf32>
      %c0_645 = arith.constant 0 : index
      %c0_646 = arith.constant 0 : index
      %c0_647 = arith.constant 0 : index
      %2320 = vector.load %arg7[%c0_645, %c0_646, %c0_647] : memref<1x1x4xf32, #tpu.memory_space<vmem>>, vector<1x1x4xf32>
      %2321 = vector.shape_cast %2320 : vector<1x1x4xf32> to vector<1x4xf32>
      %2322 = vector.shape_cast %2319 : vector<1x4xf32> to vector<1x1x4xf32>
      tpu.vector_store %arg7[%c0_645, %c0_646, %c0_647], %2322 {strides = array<i32>} : memref<1x1x4xf32, #tpu.memory_space<vmem>>, vector<1x1x4xf32>,
    } else {
    }
    return
  }
  func.func @transform_0(%arg0: i32, %arg1: i32) -> i32 {
    %c0_i32 = arith.constant 0 : i32
    %c0_i32_0 = arith.constant 0 : i32
    return %c0_i32 : i32
  }
  func.func @transform_1(%arg0: i32, %arg1: i32) -> (i32, i32, i32) {
    %c0_i32 = arith.constant 0 : i32
    %c0_i32_0 = arith.constant 0 : i32
    %c0_i32_1 = arith.constant 0 : i32
    return %c0_i32, %arg1, %c0_i32_0 : i32, i32, i32
  }
  func.func @transform_2(%arg0: i32, %arg1: i32) -> (i32, i32, i32, i32) {
    %c0_i32 = arith.constant 0 : i32
    %c0_i32_0 = arith.constant 0 : i32
    %c0_i32_1 = arith.constant 0 : i32
    return %arg0, %c0_i32, %arg1, %c0_i32_0 : i32, i32, i32, i32
  }
  func.func @transform_3(%arg0: i32, %arg1: i32) -> (i32, i32, i32, i32) {
    %c0_i32 = arith.constant 0 : i32
    %c0_i32_0 = arith.constant 0 : i32
    %c0_i32_1 = arith.constant 0 : i32
    return %arg0, %c0_i32, %arg1, %c0_i32_0 : i32, i32, i32, i32
  }
  func.func @transform_4(%arg0: i32, %arg1: i32) -> (i32, i32, i32, i32) {
    %c0_i32 = arith.constant 0 : i32
    %c0_i32_0 = arith.constant 0 : i32
    %c0_i32_1 = arith.constant 0 : i32
    return %arg0, %c0_i32, %arg1, %c0_i32_0 : i32, i32, i32, i32
  }
  func.func @transform_5(%arg0: i32, %arg1: i32) -> (i32, i32, i32) {
    %c0_i32 = arith.constant 0 : i32
    %c0_i32_0 = arith.constant 0 : i32
    %c0_i32_1 = arith.constant 0 : i32
    return %arg0, %c0_i32, %c0_i32_0 : i32, i32, i32
  }
}

</mosaic_0001>

<llo_original>
// kernel: tpu_custom_call.1
$region0: #{tpu_custom_call.1}
  #allocation0 [shape = 'u32[]', space=smem, size = 0x4, offset = 0x4, fixed_abs, tag = 'smem constant byte address 0x4 - core index']
  #allocation1 [shape = 'u32[144,128]{1,0:T(1,128)}', space=vmem, size = 0x12000, scoped, tag = 'internal scratch']
  #allocation2 [shape = 'f32[1,128]{1,0:T(1,128)}', space=vmem, size = 0x200, scoped, tag = 'scratch operand']
  #allocation3 [shape = 'f32[1,128]{1,0:T(1,128)}', space=vmem, size = 0x200, scoped, tag = 'scratch operand']
  #allocation4 [shape = 'f32[1,128]{1,0:T(1,128)}', space=vmem, size = 0x200, scoped, tag = 'scratch operand']
  #allocation5 [shape = 'f32[1,128]{1,0:T(1,128)}', space=vmem, size = 0x200, scoped, tag = 'scratch operand']
  #allocation6 [shape = 'f32[1,128]{1,0:T(1,128)}', space=vmem, size = 0x200, scoped, tag = 'scratch operand']
  #allocation7 [shape = 'f32[1,128]{1,0:T(1,128)}', space=vmem, size = 0x200, scoped, tag = 'scratch operand']
  %s0 = inlined_call_operand.hbm [shape: f32[336], index: 0, kind: input, shape index: {}]
  %s1 = inlined_call_operand.hbm [shape: f32[4,1,128], index: 1, kind: input, shape index: {}]
  %s2 = inlined_call_operand.hbm [shape: f32[2,8,1,128], index: 2, kind: input, shape index: {}]
  %s3 = inlined_call_operand.hbm [shape: f32[2,4,1,128], index: 3, kind: input, shape index: {}]
  %s4 = inlined_call_operand.hbm [shape: f32[2,4,1,128], index: 4, kind: input, shape index: {}]
  %s5 = inlined_call_operand.hbm [shape: f32[2,1,4], index: 5, kind: output, shape index: {}]
  %s6 = sld [smem:[#allocation0]]
  $region81: #{tpu_custom_call.1} parent=0
    _
  %s8 = ssub.s32 1, %s6
  %s9 = scalar_select 0, %s8, %s6
  $region1: #{tpu_custom_call.1} parent=0
    #allocation8 [shape = 'u8[1536]{0}', space=smem, size = 0x600, scoped, tag = 'input window, operand 0, single buffered']
    #allocation9 [shape = 's32[2]{0}', space=sflag, size = 0x8, scoped, tag = 'scoped memory for tpu_custom_call.1']
    #allocation10 [shape = 's32[2]{0}', space=sflag, size = 0x8, scoped, tag = 'scoped memory for tpu_custom_call.1']
    #allocation11 [shape = 's32[2]{0}', space=sflag, size = 0x8, scoped, tag = 'scoped memory for tpu_custom_call.1']
    #allocation12 [shape = 'u8[2048]{0}', space=vmem, size = 0x800, scoped, tag = 'input window, operand 1, single buffered']
    #allocation13 [shape = 'u8[8192]{0}', space=vmem, size = 0x2000, scoped, tag = 'input window, operand 2']
    #allocation14 [shape = 's32[2]{0}', space=sflag, size = 0x8, scoped, tag = 'scoped memory for tpu_custom_call.1']
    #allocation15 [shape = 'u8[4096]{0}', space=vmem, size = 0x1000, scoped, tag = 'input window, operand 3']
    #allocation16 [shape = 'u8[4096]{0}', space=vmem, size = 0x1000, scoped, tag = 'input window, operand 4']
    #allocation17 [shape = 's32[2]{0}', space=sflag, size = 0x8, scoped, tag = 'scoped memory for tpu_custom_call.1']
    #allocation18 [shape = 'u8[1024]{0}', space=vmem, size = 0x400, scoped, tag = 'output window, operand 0']
    %10 = vsyncpa [#allocation11], 0
    %11 = vsyncpa [#allocation9], 0
    %12 = vsyncpa [#allocation14], 0
    %s13 = scalar_lea.sflag [#allocation14], 1
    %14 = vsyncpa %s13, 0
    %15 = vsyncpa [#allocation17], 0
    %s16 = scalar_lea.sflag [#allocation17], 1
    %17 = vsyncpa %s16, 0
    %18 = vsyncpa [#allocation10], 0
    %s19 = scalar_lea.sflag [#allocation10], 1
    %20 = vsyncpa %s19, 0
    loop: start=0, step=1, limit=4
    $region2: #{tpu_custom_call.1} parent=1 // loop_pre_header
      _
    $region3: #{tpu_custom_call.1} parent=1 // loop_header
      %s22 = sphi 0, %s26
      %p23 = scmp.ge.s32.totalorder %s22, 4
      %s29 = sphi 0, %s41
      %s30 = sphi 0, %s37
      %s31 = sphi 0, %s29
      %s32 = sphi 0, %s30
      %s33 = sphi 0, %s31
      %s34 = sphi 0, %s32
      %s42 = sphi 0, %s42
      %s44 = sphi 0, %s42
      %s45 = sphi 0, %s44
      %s59 = sphi 0, %s45
      %s65 = sphi 0, %s67
      %s68 = sphi 0, %s65
      %s69 = sphi 0, %s68
      %s85 = sphi 0, %s69
      %s93 = sphi 0, %s95
      %s96 = sphi 0, %s93
      %s97 = sphi 0, %s96
      %s113 = sphi 0, %s97
      %s121 = sphi 0, %s123
      %s124 = sphi 0, %s121
      %s125 = sphi 0, %s124
      %s141 = sphi 0, %s125
      %s149 = sphi 0, %s151
      %s152 = sphi 0, %s149
      %s153 = sphi 0, %s152
      %s169 = sphi 0, %s153
      %s175 = sphi 0, %s177
      %s178 = sphi 0, %s175
      %s179 = sphi 0, %s178
      %s195 = sphi 0, %s179
    $region4: #{tpu_custom_call.1} parent=1 // loop_header_branch
      %25 = sbr.rel (%p23) target = $region8
    $region5: #{tpu_custom_call.1} parent=1 // loop_body
      %s27 = ssub.s32 %s22, 1
      %s28 = ssub.s32 %s22, 2
      %s35 = sadd.s32 1, %s30
      %p36 = scmp.ge.s32.totalorder %s35, 1
      %s37 = scalar_select %p36, 0, %s35
      %s38 = sadd.s32 1, %s29
      %s39 = scalar_select %p36, %s38, %s29
      %p40 = scmp.ge.s32.totalorder %s39, 2
      %s41 = scalar_select %p40, 0, %s39
      %s43 = sadd.s32 %s42, 1
      %p46 = scmp.eq.s32.totalorder %s22, 1
      %p47 = scmp.ne.s32.totalorder %s42, %s44
      %p48 = scmp.eq.s32.totalorder %s22, 0
      %p49 = por %p47, %p48
      %p50 = scmp.ne.s32.totalorder %s42, %s44
      %p51 = scmp.eq.s32.totalorder %s27, 1
      %p52 = por %p50, %p51
      %p53 = scmp.ne.s32.totalorder %s44, %s45
      %p54 = scmp.eq.s32.totalorder %s27, 0
      %p55 = por %p53, %p54
      %p56 = scmp.ne.s32.totalorder %s44, %s45
      %p57 = scmp.eq.s32.totalorder %s28, 1
      %p58 = por %p56, %p57
      %p60 = scmp.ne.s32.totalorder %s45, %s59
      %p61 = scmp.eq.s32.totalorder %s28, 0
      %p62 = por %p60, %p61
      %s63 = ssub.s32 %s30, %s37
      %p64 = scmp.eq.s32.totalorder %s63, 0
      %s66 = sadd.s32 %s65, 1
      %s67 = scalar_select %p64, %s65, %s66
      %p70 = pneg %p64
      %p71 = scmp.eq.s32.totalorder %s22, 1
      %p72 = por %p70, %p71
      %p73 = scmp.ne.s32.totalorder %s65, %s68
      %p74 = scmp.eq.s32.totalorder %s22, 0
      %p75 = por %p73, %p74
      %p76 = scmp.ne.s32.totalorder %s65, %s68
      %p77 = scmp.eq.s32.totalorder %s27, 1
      %p78 = por %p76, %p77
      %p79 = scmp.ne.s32.totalorder %s68, %s69
      %p80 = scmp.eq.s32.totalorder %s27, 0
      %p81 = por %p79, %p80
      %p82 = scmp.ne.s32.totalorder %s68, %s69
      %p83 = scmp.eq.s32.totalorder %s28, 1
      %p84 = por %p82, %p83
      %p86 = scmp.ne.s32.totalorder %s69, %s85
      %p87 = scmp.eq.s32.totalorder %s28, 0
      %p88 = por %p86, %p87
      %s89 = ssub.s32 %s29, %s41
      %s90 = ssub.s32 %s30, %s37
      %s91 = sor.u32 %s89, %s90
      %p92 = scmp.eq.s32.totalorder %s91, 0
      %s94 = sadd.s32 %s93, 1
      %s95 = scalar_select %p92, %s93, %s94
      %p98 = pneg %p92
      %p99 = scmp.eq.s32.totalorder %s22, 1
      %p100 = por %p98, %p99
      %p101 = scmp.ne.s32.totalorder %s93, %s96
      %p102 = scmp.eq.s32.totalorder %s22, 0
      %p103 = por %p101, %p102
      %p104 = scmp.ne.s32.totalorder %s93, %s96
      %p105 = scmp.eq.s32.totalorder %s27, 1
      %p106 = por %p104, %p105
      %p107 = scmp.ne.s32.totalorder %s96, %s97
      %p108 = scmp.eq.s32.totalorder %s27, 0
      %p109 = por %p107, %p108
      %p110 = scmp.ne.s32.totalorder %s96, %s97
      %p111 = scmp.eq.s32.totalorder %s28, 1
      %p112 = por %p110, %p111
      %p114 = scmp.ne.s32.totalorder %s97, %s113
      %p115 = scmp.eq.s32.totalorder %s28, 0
      %p116 = por %p114, %p115
      %s117 = ssub.s32 %s29, %s41
      %s118 = ssub.s32 %s30, %s37
      %s119 = sor.u32 %s117, %s118
      %p120 = scmp.eq.s32.totalorder %s119, 0
      %s122 = sadd.s32 %s121, 1
      %s123 = scalar_select %p120, %s121, %s122
      %p126 = pneg %p120
      %p127 = scmp.eq.s32.totalorder %s22, 1
      %p128 = por %p126, %p127
      %p129 = scmp.ne.s32.totalorder %s121, %s124
      %p130 = scmp.eq.s32.totalorder %s22, 0
      %p131 = por %p129, %p130
      %p132 = scmp.ne.s32.totalorder %s121, %s124
      %p133 = scmp.eq.s32.totalorder %s27, 1
      %p134 = por %p132, %p133
      %p135 = scmp.ne.s32.totalorder %s124, %s125
      %p136 = scmp.eq.s32.totalorder %s27, 0
      %p137 = por %p135, %p136
      %p138 = scmp.ne.s32.totalorder %s124, %s125
      %p139 = scmp.eq.s32.totalorder %s28, 1
      %p140 = por %p138, %p139
      %p142 = scmp.ne.s32.totalorder %s125, %s141
      %p143 = scmp.eq.s32.totalorder %s28, 0
      %p144 = por %p142, %p143
      %s145 = ssub.s32 %s29, %s41
      %s146 = ssub.s32 %s30, %s37
      %s147 = sor.u32 %s145, %s146
      %p148 = scmp.eq.s32.totalorder %s147, 0
      %s150 = sadd.s32 %s149, 1
      %s151 = scalar_select %p148, %s149, %s150
      %p154 = pneg %p148
      %p155 = scmp.eq.s32.totalorder %s22, 1
      %p156 = por %p154, %p155
      %p157 = scmp.ne.s32.totalorder %s149, %s152
      %p158 = scmp.eq.s32.totalorder %s22, 0
      %p159 = por %p157, %p158
      %p160 = scmp.ne.s32.totalorder %s149, %s152
      %p161 = scmp.eq.s32.totalorder %s27, 1
      %p162 = por %p160, %p161
      %p163 = scmp.ne.s32.totalorder %s152, %s153
      %p164 = scmp.eq.s32.totalorder %s27, 0
      %p165 = por %p163, %p164
      %p166 = scmp.ne.s32.totalorder %s152, %s153
      %p167 = scmp.eq.s32.totalorder %s28, 1
      %p168 = por %p166, %p167
      %p170 = scmp.ne.s32.totalorder %s153, %s169
      %p171 = scmp.eq.s32.totalorder %s28, 0
      %p172 = por %p170, %p171
      %s173 = ssub.s32 %s29, %s41
      %p174 = scmp.eq.s32.totalorder %s173, 0
      %s176 = sadd.s32 %s175, 1
      %s177 = scalar_select %p174, %s175, %s176
      %p180 = pneg %p174
      %p181 = scmp.eq.s32.totalorder %s22, 1
      %p182 = por %p180, %p181
      %p183 = scmp.ne.s32.totalorder %s175, %s178
      %p184 = scmp.eq.s32.totalorder %s22, 0
      %p185 = por %p183, %p184
      %p186 = scmp.ne.s32.totalorder %s175, %s178
      %p187 = scmp.eq.s32.totalorder %s27, 1
      %p188 = por %p186, %p187
      %p189 = scmp.ne.s32.totalorder %s178, %s179
      %p190 = scmp.eq.s32.totalorder %s27, 0
      %p191 = por %p189, %p190
      %p192 = scmp.ne.s32.totalorder %s178, %s179
      %p193 = scmp.eq.s32.totalorder %s28, 1
      %p194 = por %p192, %p193
      %p196 = scmp.ne.s32.totalorder %s179, %s195
      %p197 = scmp.eq.s32.totalorder %s28, 0
      %p198 = por %p196, %p197
      %p199 = scmp.le.s32.totalorder 1, %s22
      %p200 = scmp.lt.s32.totalorder %s22, 3
      %p201 = pnand %p199, %p200
      %p202 = pneg %p201
      // Predicated region
      $region9: #{tpu_custom_call.1} parent=5 // pred_check
        _
      $region10: #{tpu_custom_call.1} parent=5 // pred_check_branch
        %204 = sbr.rel (%p201) target = $region12
      $region11: #{tpu_custom_call.1} parent=5 // pred_region
        %s205 = ssub.s32 %s22, 1
        // Predicated region
        $region13: #{tpu_custom_call.1} parent=11 // pred_check
          %p206 = pneg %p55
        $region14: #{tpu_custom_call.1} parent=11 // pred_check_branch
          %208 = sbr.rel (%p206) target = $region16
        $region15: #{tpu_custom_call.1} parent=11 // pred_region
          %s210 = ssub.s32 48, 48
          %211 = vsyncadd [#allocation11], %s210
          %214 = dma.hbm_to_smem %s0, 48, [#allocation8], [#allocation11]
        $region16: #{tpu_custom_call.1} parent=11 // pred_fallthru
          _
        // Predicated region
        $region17: #{tpu_custom_call.1} parent=11 // pred_check
          %p215 = pneg %p81
        $region18: #{tpu_custom_call.1} parent=11 // pred_check_branch
          %217 = sbr.rel (%p215) target = $region20
        $region19: #{tpu_custom_call.1} parent=11 // pred_region
          %s219 = ssub.s32 64, 64
          %220 = vsyncadd [#allocation9], %s219
          %s221 = smul.addr %s32, 16
          %s222 = scalar_lea.hbm %s1, %s221
          %s223 = sshll.u32 [#allocation12], 4
          %s224 = int_to_ptr.vmem [resolvable:$true] %s223
          %229 = dma.hbm_to_vmem [thread:$0]  %s222, 64, %s224, [#allocation9], 16, 16, 1
        $region20: #{tpu_custom_call.1} parent=11 // pred_fallthru
          _
      $region12: #{tpu_custom_call.1} parent=5 // pred_fallthru
        _
      %p230 = scmp.lt.s32.totalorder %s22, 2
      // Predicated region
      $region21: #{tpu_custom_call.1} parent=5 // pred_check
        %p231 = pneg %p230
      $region22: #{tpu_custom_call.1} parent=5 // pred_check_branch
        %233 = sbr.rel (%p231) target = $region24
      $region23: #{tpu_custom_call.1} parent=5 // pred_region
        // Predicated region
        $region25: #{tpu_custom_call.1} parent=23 // pred_check
          %p234 = pneg %p103
        $region26: #{tpu_custom_call.1} parent=23 // pred_check_branch
          %236 = sbr.rel (%p234) target = $region28
        $region27: #{tpu_custom_call.1} parent=23 // pred_region
          %s237 = sand.u32 %s22, 1
          %s238 = scalar_lea.sflag [#allocation14], %s237
          %s239 = sand.u32 %s93, 1
          %s240 = smul.addr %s239, 8
          %s241 = scalar_lea.vmem [#allocation13], %s240
          %s243 = ssub.s32 128, 128
          %244 = vsyncadd %s238, %s243
          %s245 = smul.addr %s29, 8
          %s246 = sadd.s32 %s30, %s245
          %s247 = smul.addr %s246, 16
          %s248 = scalar_lea.hbm %s2, %s247
          %s249 = sshll.u32 %s241, 4
          %s250 = int_to_ptr.vmem [resolvable:$true] %s249
          %255 = dma.hbm_to_vmem [thread:$0]  %s248, 128, %s250, %s238, 16, 16, 1
        $region28: #{tpu_custom_call.1} parent=23 // pred_fallthru
          _
        // Predicated region
        $region29: #{tpu_custom_call.1} parent=23 // pred_check
          %p256 = pneg %p131
        $region30: #{tpu_custom_call.1} parent=23 // pred_check_branch
          %258 = sbr.rel (%p256) target = $region32
        $region31: #{tpu_custom_call.1} parent=23 // pred_region
          %s259 = sand.u32 %s22, 1
          %s260 = scalar_lea.sflag [#allocation14], %s259
          %s261 = sand.u32 %s121, 1
          %s262 = smul.addr %s261, 4
          %s263 = scalar_lea.vmem [#allocation15], %s262
          %s265 = ssub.s32 64, 64
          %266 = vsyncadd %s260, %s265
          %s267 = smul.addr %s29, 4
          %s268 = sadd.s32 %s30, %s267
          %s269 = smul.addr %s268, 16
          %s270 = scalar_lea.hbm %s3, %s269
          %s271 = sshll.u32 %s263, 4
          %s272 = int_to_ptr.vmem [resolvable:$true] %s271
          %277 = dma.hbm_to_vmem [thread:$0]  %s270, 64, %s272, %s260, 16, 16, 1
        $region32: #{tpu_custom_call.1} parent=23 // pred_fallthru
          _
        // Predicated region
        $region33: #{tpu_custom_call.1} parent=23 // pred_check
          %p278 = pneg %p159
        $region34: #{tpu_custom_call.1} parent=23 // pred_check_branch
          %280 = sbr.rel (%p278) target = $region36
        $region35: #{tpu_custom_call.1} parent=23 // pred_region
          %s281 = sand.u32 %s149, 1
          %s282 = scalar_lea.sflag [#allocation17], %s281
          %s283 = sand.u32 %s149, 1
          %s284 = smul.addr %s283, 4
          %s285 = scalar_lea.vmem [#allocation16], %s284
          %s287 = ssub.s32 64, 64
          %288 = vsyncadd %s282, %s287
          %s289 = smul.addr %s29, 4
          %s290 = sadd.s32 %s30, %s289
          %s291 = smul.addr %s290, 16
          %s292 = scalar_lea.hbm %s4, %s291
          %s293 = sshll.u32 %s285, 4
          %s294 = int_to_ptr.vmem [resolvable:$true] %s293
          %299 = dma.hbm_to_vmem [thread:$0]  %s292, 64, %s294, %s282, 16, 16, 1
        $region36: #{tpu_custom_call.1} parent=23 // pred_fallthru
          _
      $region24: #{tpu_custom_call.1} parent=5 // pred_fallthru
        _
      %p300 = scmp.le.s32.totalorder 1, %s22
      %p301 = scmp.lt.s32.totalorder %s22, 3
      %p302 = pnand %p300, %p301
      %p303 = pneg %p302
      // Predicated region
      $region37: #{tpu_custom_call.1} parent=5 // pred_check
        _
      $region38: #{tpu_custom_call.1} parent=5 // pred_check_branch
        %305 = sbr.rel (%p302) target = $region40
      $region39: #{tpu_custom_call.1} parent=5 // pred_region
        %s306 = ssub.s32 %s22, 1
        // Predicated region
        $region41: #{tpu_custom_call.1} parent=39 // pred_check
          %p307 = pneg %p55
        $region42: #{tpu_custom_call.1} parent=39 // pred_check_branch
          %309 = sbr.rel (%p307) target = $region44
        $region43: #{tpu_custom_call.1} parent=39 // pred_region
          %310 = dma.done [#allocation11], 48
        $region44: #{tpu_custom_call.1} parent=39 // pred_fallthru
          _
        // Predicated region
        $region45: #{tpu_custom_call.1} parent=39 // pred_check
          %p311 = pneg %p81
        $region46: #{tpu_custom_call.1} parent=39 // pred_check_branch
          %313 = sbr.rel (%p311) target = $region48
        $region47: #{tpu_custom_call.1} parent=39 // pred_region
          %314 = dma.done [#allocation9], 64
        $region48: #{tpu_custom_call.1} parent=39 // pred_fallthru
          _
        %s315 = sand.u32 %s27, 1
        %s316 = scalar_lea.sflag [#allocation14], %s315
        %s317 = sand.u32 %s96, 1
        %s318 = smul.addr %s317, 8
        %s319 = scalar_lea.vmem [#allocation13], %s318
        // Predicated region
        $region49: #{tpu_custom_call.1} parent=39 // pred_check
          %p320 = pneg %p109
        $region50: #{tpu_custom_call.1} parent=39 // pred_check_branch
          %322 = sbr.rel (%p320) target = $region52
        $region51: #{tpu_custom_call.1} parent=39 // pred_region
          %323 = dma.done %s316, 128
        $region52: #{tpu_custom_call.1} parent=39 // pred_fallthru
          _
        %s324 = sand.u32 %s27, 1
        %s325 = scalar_lea.sflag [#allocation14], %s324
        %s326 = sand.u32 %s124, 1
        %s327 = smul.addr %s326, 4
        %s328 = scalar_lea.vmem [#allocation15], %s327
        // Predicated region
        $region53: #{tpu_custom_call.1} parent=39 // pred_check
          %p329 = pneg %p137
        $region54: #{tpu_custom_call.1} parent=39 // pred_check_branch
          %331 = sbr.rel (%p329) target = $region56
        $region55: #{tpu_custom_call.1} parent=39 // pred_region
          %332 = dma.done %s325, 64
        $region56: #{tpu_custom_call.1} parent=39 // pred_fallthru
          _
        %s333 = sand.u32 %s152, 1
        %s334 = scalar_lea.sflag [#allocation17], %s333
        %s335 = sand.u32 %s152, 1
        %s336 = smul.addr %s335, 4
        %s337 = scalar_lea.vmem [#allocation16], %s336
        // Predicated region
        $region57: #{tpu_custom_call.1} parent=39 // pred_check
          %p338 = pneg %p165
        $region58: #{tpu_custom_call.1} parent=39 // pred_check_branch
          %340 = sbr.rel (%p338) target = $region60
        $region59: #{tpu_custom_call.1} parent=39 // pred_region
          %341 = dma.done %s334, 64
        $region60: #{tpu_custom_call.1} parent=39 // pred_fallthru
          _
        %342 = sfence
        %p343 = pneg %p55
        %p344 = pneg %p52
        %p345 = pneg %p81
        %p346 = pneg %p78
        %s347 = sand.u32 %s27, 1
        %s348 = scalar_lea.sflag [#allocation14], %s347
        %s349 = sand.u32 %s96, 1
        %s350 = smul.addr %s349, 8
        %s351 = scalar_lea.vmem [#allocation13], %s350
        %p352 = pneg %p109
        %p353 = pneg %p106
        %s354 = sand.u32 %s27, 1
        %s355 = scalar_lea.sflag [#allocation14], %s354
        %s356 = sand.u32 %s124, 1
        %s357 = smul.addr %s356, 4
        %s358 = scalar_lea.vmem [#allocation15], %s357
        %p359 = pneg %p137
        %p360 = pneg %p134
        %s361 = sand.u32 %s152, 1
        %s362 = scalar_lea.sflag [#allocation17], %s361
        %s363 = sand.u32 %s152, 1
        %s364 = smul.addr %s363, 4
        %s365 = scalar_lea.vmem [#allocation16], %s364
        %p366 = pneg %p165
        %p367 = pneg %p162
        %p368 = pneg %p191
        %p369 = pneg %p188
        %s370 = sand.u32 %s178, 1
        %s371 = scalar_lea.sflag [#allocation10], %s370
        %s372 = sand.u32 %s178, 1
        %s373 = scalar_lea.vmem [#allocation18], %s372
        %v374 = vld [vmem:[#allocation12] sm:$0x1]
        %s375 = scalar_lea.vmem [#allocation12], 1
        %v376 = vld [vmem:[%s375] sm:$0x1]
        %s377 = scalar_lea.vmem [#allocation12], 2
        %v378 = vld [vmem:[%s377] sm:$0x1]
        %s379 = scalar_lea.vmem [#allocation12], 3
        %v380 = vld [vmem:[%s379] sm:$0x1]
        %v381 = vsub.f32 %v380, %v376
        %v382 = vsub.f32 %v378, %v374
        %v383 = vmul.f32 %v381, 0.5
        %v384 = vadd.f32 %v376, %v383
        %v385 = vmul.f32 %v382, 0.5
        %v386 = vadd.f32 %v374, %v385
        %v387 = vmul.f32 %v381, %v382
        %v388 = vrcp.pop %v381
        %v389 = vmul.f32 1.0, %v388
        %v390 = vrcp.pop %v382
        %v391 = vmul.f32 1.0, %v390
        %v392 = vlog2.pop %v381
        %v393 = vmul.f32 %v392, 0.6931472
        %v394 = vlog2.pop %v382
        %v395 = vmul.f32 %v394, 0.6931472
        %s396 = smul.u32 %s31, 168
        %s397 = sld [smem:[#allocation8 + %s396]]
        %s398 = sadd.s32 %s396, 1
        %s399 = sld [smem:[#allocation8 + %s398]]
        %s400 = sadd.s32 %s396, 2
        %s401 = sld [smem:[#allocation8 + %s400]]
        %s402 = sadd.s32 %s396, 3
        %s403 = sld [smem:[#allocation8 + %s402]]
        %s404 = sadd.s32 %s396, 4
        %s405 = sld [smem:[#allocation8 + %s404]]
        %s406 = sadd.s32 %s396, 5
        %s407 = sld [smem:[#allocation8 + %s406]]
        %s408 = sadd.s32 %s396, 6
        %s409 = sld [smem:[#allocation8 + %s408]]
        %s410 = sadd.s32 %s396, 7
        %s411 = sld [smem:[#allocation8 + %s410]]
        %s412 = sadd.s32 %s396, 8
        %s413 = sld [smem:[#allocation8 + %s412]]
        %s414 = sadd.s32 %s396, 9
        %s415 = sld [smem:[#allocation8 + %s414]]
        %s416 = sadd.s32 %s396, 10
        %s417 = sld [smem:[#allocation8 + %s416]]
        %s418 = sadd.s32 %s396, 11
        %s419 = sld [smem:[#allocation8 + %s418]]
        %p420 = scmp.ge.f32.partialorder %s397, 0.0
        %s421 = scalar_select %p420, 1.0, 0.0
        %v422 = vstv %s417
        %v423 = vmin.f32 %v380, %v422
        %v424 = vstv %s413
        %v425 = vmax.f32 %v376, %v424
        %v426 = vsub.f32 %v423, %v425
        %v427 = vmax.f32 %v426, 0.0
        %v428 = vstv %s419
        %v429 = vmin.f32 %v378, %v428
        %v430 = vstv %s415
        %v431 = vmax.f32 %v374, %v430
        %v432 = vsub.f32 %v429, %v431
        %v433 = vmax.f32 %v432, 0.0
        %v434 = vmul.f32 %v427, %v433
        %s435 = ssub.f32 %s417, %s413
        %s436 = ssub.f32 %s419, %s415
        %s437 = smul.f32 %s435, %s436
        %v438 = vstv %s437
        %v439 = vadd.f32 %v387, %v438
        %v440 = vsub.f32 %v439, %v434
        %v441 = vmax.f32 %v440, 1e-08
        %v442 = vrcp.pop %v441
        %v443 = vmul.f32 %v434, %v442
        %v444 = vstv %s401
        %v445 = vmin.f32 %v380, %v444
        %v446 = vstv %s397
        %v447 = vmax.f32 %v376, %v446
        %v448 = vsub.f32 %v445, %v447
        %v449 = vmax.f32 %v448, 0.0
        %v450 = vstv %s403
        %v451 = vmin.f32 %v378, %v450
        %v452 = vstv %s399
        %v453 = vmax.f32 %v374, %v452
        %v454 = vsub.f32 %v451, %v453
        %v455 = vmax.f32 %v454, 0.0
        %v456 = vmul.f32 %v449, %v455
        %s457 = ssub.f32 %s401, %s397
        %s458 = ssub.f32 %s403, %s399
        %s459 = smul.f32 %s457, %s458
        %s460 = smax.f32 %s459, 1e-08
        %v461 = vstv %s460
        %v462 = vrcp.pop %v461
        %v463 = vmul.f32 %v456, %v462
        %v464 = vstv %s409
        %v465 = vmin.f32 %v380, %v464
        %v466 = vstv %s405
        %v467 = vmax.f32 %v376, %v466
        %v468 = vsub.f32 %v465, %v467
        %v469 = vmax.f32 %v468, 0.0
        %v470 = vstv %s411
        %v471 = vmin.f32 %v378, %v470
        %v472 = vstv %s407
        %v473 = vmax.f32 %v374, %v472
        %v474 = vsub.f32 %v471, %v473
        %v475 = vmax.f32 %v474, 0.0
        %v476 = vmul.f32 %v469, %v475
        %s477 = ssub.f32 %s409, %s405
        %s478 = ssub.f32 %s411, %s407
        %s479 = smul.f32 %s477, %s478
        %s480 = smax.f32 %s479, 1e-08
        %v481 = vstv %s480
        %v482 = vrcp.pop %v481
        %v483 = vmul.f32 %v476, %v482
        %vm484 = vcmp.gt.f32.partialorder %v443, 0.25
        %vm485 = vcmp.gt.f32.partialorder %v463, 0.25
        %vm486 = vmand %vm484, %vm485
        %vm487 = vcmp.gt.f32.partialorder %v483, 0.25
        %vm488 = vmand %vm486, %vm487
        %v489 = vstv %s421
        %v490 = vsel %vm488, %v489, 0.0
        %v491 = vmul.f32 %v463, %v483
        %v492 = vrsqrt.pop %v491
        %v493 = vmul.f32 %v491, %v492
        %vm494 = vcmp.eq.f32.partialorder %v491, inf
        %v495 = vsel %vm494, %v491, %v493
        %vm496 = vcmp.eq.f32.partialorder %v491, 0.0
        %v497 = vand.u32 %v491, 2147483648
        %v498 = vsel %vm496, %v497, %v495
        %v499 = vadd.f32 %v443, %v498
        %v500 = vmul.f32 %v499, 0.5
        %v501 = vmul.f32 %v500, %v490
        %vm502 = vcmp.gt.f32.partialorder %v501, -1.0
        %v503 = vsel %vm502, %v501, -1.0
        %v504 = vmax.f32 %v490, 0.0
        %v505 = vsel %vm502, %v446, 0.0
        %v506 = vsel %vm502, %v452, 0.0
        %v507 = vsel %vm502, %v444, 0.0
        %v508 = vsel %vm502, %v450, 0.0
        %v509 = vsel %vm502, %v466, 0.0
        %v510 = vsel %vm502, %v472, 0.0
        %v511 = vsel %vm502, %v464, 0.0
        %v512 = vsel %vm502, %v470, 0.0
        %s513 = sadd.s32 %s396, 13
        %s514 = sld [smem:[#allocation8 + %s513]]
        %v515 = vstv %s514
        %v516 = vsel %vm502, %v515, 0.0
        %v517 = vmul.f32 %v490, %v515
        %v518 = vadd.f32 %v517, 0.0
        %s519 = sadd.s32 %s396, 14
        %s520 = sld [smem:[#allocation8 + %s519]]
        %v521 = vstv %s520
        %v522 = vsel %vm502, %v521, 0.0
        %v523 = vmul.f32 %v490, %v521
        %v524 = vadd.f32 %v523, 0.0
        %s525 = sadd.s32 %s396, 15
        %s526 = sld [smem:[#allocation8 + %s525]]
        %v527 = vstv %s526
        %v528 = vsel %vm502, %v527, 0.0
        %v529 = vmul.f32 %v490, %v527
        %v530 = vadd.f32 %v529, 0.0
        %s531 = sadd.s32 %s396, 16
        %s532 = sld [smem:[#allocation8 + %s531]]
        %v533 = vstv %s532
        %v534 = vsel %vm502, %v533, 0.0
        %v535 = vmul.f32 %v490, %v533
        %v536 = vadd.f32 %v535, 0.0
        %s537 = sadd.s32 %s396, 17
        %s538 = sld [smem:[#allocation8 + %s537]]
        %v539 = vstv %s538
        %v540 = vsel %vm502, %v539, 0.0
        %v541 = vmul.f32 %v490, %v539
        %v542 = vadd.f32 %v541, 0.0
        %s543 = sadd.s32 %s396, 18
        %s544 = sld [smem:[#allocation8 + %s543]]
        %v545 = vstv %s544
        %v546 = vsel %vm502, %v545, 0.0
        %v547 = vmul.f32 %v490, %v545
        %v548 = vadd.f32 %v547, 0.0
        %s549 = sadd.s32 %s396, 19
        %s550 = sld [smem:[#allocation8 + %s549]]
        %v551 = vstv %s550
        %v552 = vsel %vm502, %v551, 0.0
        %v553 = vmul.f32 %v490, %v551
        %v554 = vadd.f32 %v553, 0.0
        %s555 = sadd.s32 %s396, 20
        %s556 = sld [smem:[#allocation8 + %s555]]
        %v557 = vstv %s556
        %v558 = vsel %vm502, %v557, 0.0
        %v559 = vmul.f32 %v490, %v557
        %v560 = vadd.f32 %v559, 0.0
        %s561 = sadd.s32 %s396, 21
        %s562 = sld [smem:[#allocation8 + %s561]]
        %s563 = sadd.s32 %s396, 22
        %s564 = sld [smem:[#allocation8 + %s563]]
        %s565 = sadd.s32 %s396, 23
        %s566 = sld [smem:[#allocation8 + %s565]]
        %s567 = sadd.s32 %s396, 24
        %s568 = sld [smem:[#allocation8 + %s567]]
        %s569 = sadd.s32 %s396, 25
        %s570 = sld [smem:[#allocation8 + %s569]]
        %s571 = sadd.s32 %s396, 26
        %s572 = sld [smem:[#allocation8 + %s571]]
        %s573 = sadd.s32 %s396, 27
        %s574 = sld [smem:[#allocation8 + %s573]]
        %s575 = sadd.s32 %s396, 28
        %s576 = sld [smem:[#allocation8 + %s575]]
        %s577 = sadd.s32 %s396, 29
        %s578 = sld [smem:[#allocation8 + %s577]]
        %s579 = sadd.s32 %s396, 30
        %s580 = sld [smem:[#allocation8 + %s579]]
        %s581 = sadd.s32 %s396, 31
        %s582 = sld [smem:[#allocation8 + %s581]]
        %s583 = sadd.s32 %s396, 32
        %s584 = sld [smem:[#allocation8 + %s583]]
        %p585 = scmp.ge.f32.partialorder %s562, 0.0
        %s586 = scalar_select %p585, 1.0, 0.0
        %v587 = vstv %s582
        %v588 = vmin.f32 %v380, %v587
        %v589 = vstv %s578
        %v590 = vmax.f32 %v376, %v589
        %v591 = vsub.f32 %v588, %v590
        %v592 = vmax.f32 %v591, 0.0
        %v593 = vstv %s584
        %v594 = vmin.f32 %v378, %v593
        %v595 = vstv %s580
        %v596 = vmax.f32 %v374, %v595
        %v597 = vsub.f32 %v594, %v596
        %v598 = vmax.f32 %v597, 0.0
        %v599 = vmul.f32 %v592, %v598
        %s600 = ssub.f32 %s582, %s578
        %s601 = ssub.f32 %s584, %s580
        %s602 = smul.f32 %s600, %s601
        %v603 = vstv %s602
        %v604 = vadd.f32 %v387, %v603
        %v605 = vsub.f32 %v604, %v599
        %v606 = vmax.f32 %v605, 1e-08
        %v607 = vrcp.pop %v606
        %v608 = vmul.f32 %v599, %v607
        %v609 = vstv %s566
        %v610 = vmin.f32 %v380, %v609
        %v611 = vstv %s562
        %v612 = vmax.f32 %v376, %v611
        %v613 = vsub.f32 %v610, %v612
        %v614 = vmax.f32 %v613, 0.0
        %v615 = vstv %s568
        %v616 = vmin.f32 %v378, %v615
        %v617 = vstv %s564
        %v618 = vmax.f32 %v374, %v617
        %v619 = vsub.f32 %v616, %v618
        %v620 = vmax.f32 %v619, 0.0
        %v621 = vmul.f32 %v614, %v620
        %s622 = ssub.f32 %s566, %s562
        %s623 = ssub.f32 %s568, %s564
        %s624 = smul.f32 %s622, %s623
        %s625 = smax.f32 %s624, 1e-08
        %v626 = vstv %s625
        %v627 = vrcp.pop %v626
        %v628 = vmul.f32 %v621, %v627
        %v629 = vstv %s574
        %v630 = vmin.f32 %v380, %v629
        %v631 = vstv %s570
        %v632 = vmax.f32 %v376, %v631
        %v633 = vsub.f32 %v630, %v632
        %v634 = vmax.f32 %v633, 0.0
        %v635 = vstv %s576
        %v636 = vmin.f32 %v378, %v635
        %v637 = vstv %s572
        %v638 = vmax.f32 %v374, %v637
        %v639 = vsub.f32 %v636, %v638
        %v640 = vmax.f32 %v639, 0.0
        %v641 = vmul.f32 %v634, %v640
        %s642 = ssub.f32 %s574, %s570
        %s643 = ssub.f32 %s576, %s572
        %s644 = smul.f32 %s642, %s643
        %s645 = smax.f32 %s644, 1e-08
        %v646 = vstv %s645
        %v647 = vrcp.pop %v646
        %v648 = vmul.f32 %v641, %v647
        %vm649 = vcmp.gt.f32.partialorder %v608, 0.25
        %vm650 = vcmp.gt.f32.partialorder %v628, 0.25
        %vm651 = vmand %vm649, %vm650
        %vm652 = vcmp.gt.f32.partialorder %v648, 0.25
        %vm653 = vmand %vm651, %vm652
        %v654 = vstv %s586
        %v655 = vsel %vm653, %v654, 0.0
        %v656 = vmul.f32 %v628, %v648
        %v657 = vrsqrt.pop %v656
        %v658 = vmul.f32 %v656, %v657
        %vm659 = vcmp.eq.f32.partialorder %v656, inf
        %v660 = vsel %vm659, %v656, %v658
        %vm661 = vcmp.eq.f32.partialorder %v656, 0.0
        %v662 = vand.u32 %v656, 2147483648
        %v663 = vsel %vm661, %v662, %v660
        %v664 = vadd.f32 %v608, %v663
        %v665 = vmul.f32 %v664, 0.5
        %v666 = vmul.f32 %v665, %v655
        %vm667 = vcmp.gt.f32.partialorder %v666, %v503
        %v668 = vsel %vm667, %v666, %v503
        %v669 = vmax.f32 %v504, %v655
        %v670 = vsel %vm667, %v611, %v505
        %v671 = vsel %vm667, %v617, %v506
        %v672 = vsel %vm667, %v609, %v507
        %v673 = vsel %vm667, %v615, %v508
        %v674 = vsel %vm667, %v631, %v509
        %v675 = vsel %vm667, %v637, %v510
        %v676 = vsel %vm667, %v629, %v511
        %v677 = vsel %vm667, %v635, %v512
        %s678 = sadd.s32 %s396, 34
        %s679 = sld [smem:[#allocation8 + %s678]]
        %v680 = vstv %s679
        %v681 = vsel %vm667, %v680, %v516
        %v682 = vmul.f32 %v655, %v680
        %v683 = vadd.f32 %v518, %v682
        %s684 = sadd.s32 %s396, 35
        %s685 = sld [smem:[#allocation8 + %s684]]
        %v686 = vstv %s685
        %v687 = vsel %vm667, %v686, %v522
        %v688 = vmul.f32 %v655, %v686
        %v689 = vadd.f32 %v524, %v688
        %s690 = sadd.s32 %s396, 36
        %s691 = sld [smem:[#allocation8 + %s690]]
        %v692 = vstv %s691
        %v693 = vsel %vm667, %v692, %v528
        %v694 = vmul.f32 %v655, %v692
        %v695 = vadd.f32 %v530, %v694
        %s696 = sadd.s32 %s396, 37
        %s697 = sld [smem:[#allocation8 + %s696]]
        %v698 = vstv %s697
        %v699 = vsel %vm667, %v698, %v534
        %v700 = vmul.f32 %v655, %v698
        %v701 = vadd.f32 %v536, %v700
        %s702 = sadd.s32 %s396, 38
        %s703 = sld [smem:[#allocation8 + %s702]]
        %v704 = vstv %s703
        %v705 = vsel %vm667, %v704, %v540
        %v706 = vmul.f32 %v655, %v704
        %v707 = vadd.f32 %v542, %v706
        %s708 = sadd.s32 %s396, 39
        %s709 = sld [smem:[#allocation8 + %s708]]
        %v710 = vstv %s709
        %v711 = vsel %vm667, %v710, %v546
        %v712 = vmul.f32 %v655, %v710
        %v713 = vadd.f32 %v548, %v712
        %s714 = sadd.s32 %s396, 40
        %s715 = sld [smem:[#allocation8 + %s714]]
        %v716 = vstv %s715
        %v717 = vsel %vm667, %v716, %v552
        %v718 = vmul.f32 %v655, %v716
        %v719 = vadd.f32 %v554, %v718
        %s720 = sadd.s32 %s396, 41
        %s721 = sld [smem:[#allocation8 + %s720]]
        %v722 = vstv %s721
        %v723 = vsel %vm667, %v722, %v558
        %v724 = vmul.f32 %v655, %v722
        %v725 = vadd.f32 %v560, %v724
        %s726 = sadd.s32 %s396, 42
        %s727 = sld [smem:[#allocation8 + %s726]]
        %s728 = sadd.s32 %s396, 43
        %s729 = sld [smem:[#allocation8 + %s728]]
        %s730 = sadd.s32 %s396, 44
        %s731 = sld [smem:[#allocation8 + %s730]]
        %s732 = sadd.s32 %s396, 45
        %s733 = sld [smem:[#allocation8 + %s732]]
        %s734 = sadd.s32 %s396, 46
        %s735 = sld [smem:[#allocation8 + %s734]]
        %s736 = sadd.s32 %s396, 47
        %s737 = sld [smem:[#allocation8 + %s736]]
        %s738 = sadd.s32 %s396, 48
        %s739 = sld [smem:[#allocation8 + %s738]]
        %s740 = sadd.s32 %s396, 49
        %s741 = sld [smem:[#allocation8 + %s740]]
        %s742 = sadd.s32 %s396, 50
        %s743 = sld [smem:[#allocation8 + %s742]]
        %s744 = sadd.s32 %s396, 51
        %s745 = sld [smem:[#allocation8 + %s744]]
        %s746 = sadd.s32 %s396, 52
        %s747 = sld [smem:[#allocation8 + %s746]]
        %s748 = sadd.s32 %s396, 53
        %s749 = sld [smem:[#allocation8 + %s748]]
        %p750 = scmp.ge.f32.partialorder %s727, 0.0
        %s751 = scalar_select %p750, 1.0, 0.0
        %v752 = vstv %s747
        %v753 = vmin.f32 %v380, %v752
        %v754 = vstv %s743
        %v755 = vmax.f32 %v376, %v754
        %v756 = vsub.f32 %v753, %v755
        %v757 = vmax.f32 %v756, 0.0
        %v758 = vstv %s749
        %v759 = vmin.f32 %v378, %v758
        %v760 = vstv %s745
        %v761 = vmax.f32 %v374, %v760
        %v762 = vsub.f32 %v759, %v761
        %v763 = vmax.f32 %v762, 0.0
        %v764 = vmul.f32 %v757, %v763
        %s765 = ssub.f32 %s747, %s743
        %s766 = ssub.f32 %s749, %s745
        %s767 = smul.f32 %s765, %s766
        %v768 = vstv %s767
        %v769 = vadd.f32 %v387, %v768
        %v770 = vsub.f32 %v769, %v764
        %v771 = vmax.f32 %v770, 1e-08
        %v772 = vrcp.pop %v771
        %v773 = vmul.f32 %v764, %v772
        %v774 = vstv %s731
        %v775 = vmin.f32 %v380, %v774
        %v776 = vstv %s727
        %v777 = vmax.f32 %v376, %v776
        %v778 = vsub.f32 %v775, %v777
        %v779 = vmax.f32 %v778, 0.0
        %v780 = vstv %s733
        %v781 = vmin.f32 %v378, %v780
        %v782 = vstv %s729
        %v783 = vmax.f32 %v374, %v782
        %v784 = vsub.f32 %v781, %v783
        %v785 = vmax.f32 %v784, 0.0
        %v786 = vmul.f32 %v779, %v785
        %s787 = ssub.f32 %s731, %s727
        %s788 = ssub.f32 %s733, %s729
        %s789 = smul.f32 %s787, %s788
        %s790 = smax.f32 %s789, 1e-08
        %v791 = vstv %s790
        %v792 = vrcp.pop %v791
        %v793 = vmul.f32 %v786, %v792
        %v794 = vstv %s739
        %v795 = vmin.f32 %v380, %v794
        %v796 = vstv %s735
        %v797 = vmax.f32 %v376, %v796
        %v798 = vsub.f32 %v795, %v797
        %v799 = vmax.f32 %v798, 0.0
        %v800 = vstv %s741
        %v801 = vmin.f32 %v378, %v800
        %v802 = vstv %s737
        %v803 = vmax.f32 %v374, %v802
        %v804 = vsub.f32 %v801, %v803
        %v805 = vmax.f32 %v804, 0.0
        %v806 = vmul.f32 %v799, %v805
        %s807 = ssub.f32 %s739, %s735
        %s808 = ssub.f32 %s741, %s737
        %s809 = smul.f32 %s807, %s808
        %s810 = smax.f32 %s809, 1e-08
        %v811 = vstv %s810
        %v812 = vrcp.pop %v811
        %v813 = vmul.f32 %v806, %v812
        %vm814 = vcmp.gt.f32.partialorder %v773, 0.25
        %vm815 = vcmp.gt.f32.partialorder %v793, 0.25
        %vm816 = vmand %vm814, %vm815
        %vm817 = vcmp.gt.f32.partialorder %v813, 0.25
        %vm818 = vmand %vm816, %vm817
        %v819 = vstv %s751
        %v820 = vsel %vm818, %v819, 0.0
        %v821 = vmul.f32 %v793, %v813
        %v822 = vrsqrt.pop %v821
        %v823 = vmul.f32 %v821, %v822
        %vm824 = vcmp.eq.f32.partialorder %v821, inf
        %v825 = vsel %vm824, %v821, %v823
        %vm826 = vcmp.eq.f32.partialorder %v821, 0.0
        %v827 = vand.u32 %v821, 2147483648
        %v828 = vsel %vm826, %v827, %v825
        %v829 = vadd.f32 %v773, %v828
        %v830 = vmul.f32 %v829, 0.5
        %v831 = vmul.f32 %v830, %v820
        %vm832 = vcmp.gt.f32.partialorder %v831, %v668
        %v833 = vsel %vm832, %v831, %v668
        %v834 = vmax.f32 %v669, %v820
        %v835 = vsel %vm832, %v776, %v670
        %v836 = vsel %vm832, %v782, %v671
        %v837 = vsel %vm832, %v774, %v672
        %v838 = vsel %vm832, %v780, %v673
        %v839 = vsel %vm832, %v796, %v674
        %v840 = vsel %vm832, %v802, %v675
        %v841 = vsel %vm832, %v794, %v676
        %v842 = vsel %vm832, %v800, %v677
        %s843 = sadd.s32 %s396, 55
        %s844 = sld [smem:[#allocation8 + %s843]]
        %v845 = vstv %s844
        %v846 = vsel %vm832, %v845, %v681
        %v847 = vmul.f32 %v820, %v845
        %v848 = vadd.f32 %v683, %v847
        %s849 = sadd.s32 %s396, 56
        %s850 = sld [smem:[#allocation8 + %s849]]
        %v851 = vstv %s850
        %v852 = vsel %vm832, %v851, %v687
        %v853 = vmul.f32 %v820, %v851
        %v854 = vadd.f32 %v689, %v853
        %s855 = sadd.s32 %s396, 57
        %s856 = sld [smem:[#allocation8 + %s855]]
        %v857 = vstv %s856
        %v858 = vsel %vm832, %v857, %v693
        %v859 = vmul.f32 %v820, %v857
        %v860 = vadd.f32 %v695, %v859
        %s861 = sadd.s32 %s396, 58
        %s862 = sld [smem:[#allocation8 + %s861]]
        %v863 = vstv %s862
        %v864 = vsel %vm832, %v863, %v699
        %v865 = vmul.f32 %v820, %v863
        %v866 = vadd.f32 %v701, %v865
        %s867 = sadd.s32 %s396, 59
        %s868 = sld [smem:[#allocation8 + %s867]]
        %v869 = vstv %s868
        %v870 = vsel %vm832, %v869, %v705
        %v871 = vmul.f32 %v820, %v869
        %v872 = vadd.f32 %v707, %v871
        %s873 = sadd.s32 %s396, 60
        %s874 = sld [smem:[#allocation8 + %s873]]
        %v875 = vstv %s874
        %v876 = vsel %vm832, %v875, %v711
        %v877 = vmul.f32 %v820, %v875
        %v878 = vadd.f32 %v713, %v877
        %s879 = sadd.s32 %s396, 61
        %s880 = sld [smem:[#allocation8 + %s879]]
        %v881 = vstv %s880
        %v882 = vsel %vm832, %v881, %v717
        %v883 = vmul.f32 %v820, %v881
        %v884 = vadd.f32 %v719, %v883
        %s885 = sadd.s32 %s396, 62
        %s886 = sld [smem:[#allocation8 + %s885]]
        %v887 = vstv %s886
        %v888 = vsel %vm832, %v887, %v723
        %v889 = vmul.f32 %v820, %v887
        %v890 = vadd.f32 %v725, %v889
        %s891 = sadd.s32 %s396, 63
        %s892 = sld [smem:[#allocation8 + %s891]]
        %s893 = sadd.s32 %s396, 64
        %s894 = sld [smem:[#allocation8 + %s893]]
        %s895 = sadd.s32 %s396, 65
        %s896 = sld [smem:[#allocation8 + %s895]]
        %s897 = sadd.s32 %s396, 66
        %s898 = sld [smem:[#allocation8 + %s897]]
        %s899 = sadd.s32 %s396, 67
        %s900 = sld [smem:[#allocation8 + %s899]]
        %s901 = sadd.s32 %s396, 68
        %s902 = sld [smem:[#allocation8 + %s901]]
        %s903 = sadd.s32 %s396, 69
        %s904 = sld [smem:[#allocation8 + %s903]]
        %s905 = sadd.s32 %s396, 70
        %s906 = sld [smem:[#allocation8 + %s905]]
        %s907 = sadd.s32 %s396, 71
        %s908 = sld [smem:[#allocation8 + %s907]]
        %s909 = sadd.s32 %s396, 72
        %s910 = sld [smem:[#allocation8 + %s909]]
        %s911 = sadd.s32 %s396, 73
        %s912 = sld [smem:[#allocation8 + %s911]]
        %s913 = sadd.s32 %s396, 74
        %s914 = sld [smem:[#allocation8 + %s913]]
        %p915 = scmp.ge.f32.partialorder %s892, 0.0
        %s916 = scalar_select %p915, 1.0, 0.0
        %v917 = vstv %s912
        %v918 = vmin.f32 %v380, %v917
        %v919 = vstv %s908
        %v920 = vmax.f32 %v376, %v919
        %v921 = vsub.f32 %v918, %v920
        %v922 = vmax.f32 %v921, 0.0
        %v923 = vstv %s914
        %v924 = vmin.f32 %v378, %v923
        %v925 = vstv %s910
        %v926 = vmax.f32 %v374, %v925
        %v927 = vsub.f32 %v924, %v926
        %v928 = vmax.f32 %v927, 0.0
        %v929 = vmul.f32 %v922, %v928
        %s930 = ssub.f32 %s912, %s908
        %s931 = ssub.f32 %s914, %s910
        %s932 = smul.f32 %s930, %s931
        %v933 = vstv %s932
        %v934 = vadd.f32 %v387, %v933
        %v935 = vsub.f32 %v934, %v929
        %v936 = vmax.f32 %v935, 1e-08
        %v937 = vrcp.pop %v936
        %v938 = vmul.f32 %v929, %v937
        %v939 = vstv %s896
        %v940 = vmin.f32 %v380, %v939
        %v941 = vstv %s892
        %v942 = vmax.f32 %v376, %v941
        %v943 = vsub.f32 %v940, %v942
        %v944 = vmax.f32 %v943, 0.0
        %v945 = vstv %s898
        %v946 = vmin.f32 %v378, %v945
        %v947 = vstv %s894
        %v948 = vmax.f32 %v374, %v947
        %v949 = vsub.f32 %v946, %v948
        %v950 = vmax.f32 %v949, 0.0
        %v951 = vmul.f32 %v944, %v950
        %s952 = ssub.f32 %s896, %s892
        %s953 = ssub.f32 %s898, %s894
        %s954 = smul.f32 %s952, %s953
        %s955 = smax.f32 %s954, 1e-08
        %v956 = vstv %s955
        %v957 = vrcp.pop %v956
        %v958 = vmul.f32 %v951, %v957
        %v959 = vstv %s904
        %v960 = vmin.f32 %v380, %v959
        %v961 = vstv %s900
        %v962 = vmax.f32 %v376, %v961
        %v963 = vsub.f32 %v960, %v962
        %v964 = vmax.f32 %v963, 0.0
        %v965 = vstv %s906
        %v966 = vmin.f32 %v378, %v965
        %v967 = vstv %s902
        %v968 = vmax.f32 %v374, %v967
        %v969 = vsub.f32 %v966, %v968
        %v970 = vmax.f32 %v969, 0.0
        %v971 = vmul.f32 %v964, %v970
        %s972 = ssub.f32 %s904, %s900
        %s973 = ssub.f32 %s906, %s902
        %s974 = smul.f32 %s972, %s973
        %s975 = smax.f32 %s974, 1e-08
        %v976 = vstv %s975
        %v977 = vrcp.pop %v976
        %v978 = vmul.f32 %v971, %v977
        %vm979 = vcmp.gt.f32.partialorder %v938, 0.25
        %vm980 = vcmp.gt.f32.partialorder %v958, 0.25
        %vm981 = vmand %vm979, %vm980
        %vm982 = vcmp.gt.f32.partialorder %v978, 0.25
        %vm983 = vmand %vm981, %vm982
        %v984 = vstv %s916
        %v985 = vsel %vm983, %v984, 0.0
        %v986 = vmul.f32 %v958, %v978
        %v987 = vrsqrt.pop %v986
        %v988 = vmul.f32 %v986, %v987
        %vm989 = vcmp.eq.f32.partialorder %v986, inf
        %v990 = vsel %vm989, %v986, %v988
        %vm991 = vcmp.eq.f32.partialorder %v986, 0.0
        %v992 = vand.u32 %v986, 2147483648
        %v993 = vsel %vm991, %v992, %v990
        %v994 = vadd.f32 %v938, %v993
        %v995 = vmul.f32 %v994, 0.5
        %v996 = vmul.f32 %v995, %v985
        %vm997 = vcmp.gt.f32.partialorder %v996, %v833
        %v998 = vsel %vm997, %v996, %v833
        %v999 = vmax.f32 %v834, %v985
        %v1000 = vsel %vm997, %v941, %v835
        %v1001 = vsel %vm997, %v947, %v836
        %v1002 = vsel %vm997, %v939, %v837
        %v1003 = vsel %vm997, %v945, %v838
        %v1004 = vsel %vm997, %v961, %v839
        %v1005 = vsel %vm997, %v967, %v840
        %v1006 = vsel %vm997, %v959, %v841
        %v1007 = vsel %vm997, %v965, %v842
        %s1008 = sadd.s32 %s396, 76
        %s1009 = sld [smem:[#allocation8 + %s1008]]
        %v1010 = vstv %s1009
        %v1011 = vsel %vm997, %v1010, %v846
        %v1012 = vmul.f32 %v985, %v1010
        %v1013 = vadd.f32 %v848, %v1012
        %s1014 = sadd.s32 %s396, 77
        %s1015 = sld [smem:[#allocation8 + %s1014]]
        %v1016 = vstv %s1015
        %v1017 = vsel %vm997, %v1016, %v852
        %v1018 = vmul.f32 %v985, %v1016
        %v1019 = vadd.f32 %v854, %v1018
        %s1020 = sadd.s32 %s396, 78
        %s1021 = sld [smem:[#allocation8 + %s1020]]
        %v1022 = vstv %s1021
        %v1023 = vsel %vm997, %v1022, %v858
        %v1024 = vmul.f32 %v985, %v1022
        %v1025 = vadd.f32 %v860, %v1024
        %s1026 = sadd.s32 %s396, 79
        %s1027 = sld [smem:[#allocation8 + %s1026]]
        %v1028 = vstv %s1027
        %v1029 = vsel %vm997, %v1028, %v864
        %v1030 = vmul.f32 %v985, %v1028
        %v1031 = vadd.f32 %v866, %v1030
        %s1032 = sadd.s32 %s396, 80
        %s1033 = sld [smem:[#allocation8 + %s1032]]
        %v1034 = vstv %s1033
        %v1035 = vsel %vm997, %v1034, %v870
        %v1036 = vmul.f32 %v985, %v1034
        %v1037 = vadd.f32 %v872, %v1036
        %s1038 = sadd.s32 %s396, 81
        %s1039 = sld [smem:[#allocation8 + %s1038]]
        %v1040 = vstv %s1039
        %v1041 = vsel %vm997, %v1040, %v876
        %v1042 = vmul.f32 %v985, %v1040
        %v1043 = vadd.f32 %v878, %v1042
        %s1044 = sadd.s32 %s396, 82
        %s1045 = sld [smem:[#allocation8 + %s1044]]
        %v1046 = vstv %s1045
        %v1047 = vsel %vm997, %v1046, %v882
        %v1048 = vmul.f32 %v985, %v1046
        %v1049 = vadd.f32 %v884, %v1048
        %s1050 = sadd.s32 %s396, 83
        %s1051 = sld [smem:[#allocation8 + %s1050]]
        %v1052 = vstv %s1051
        %v1053 = vsel %vm997, %v1052, %v888
        %v1054 = vmul.f32 %v985, %v1052
        %v1055 = vadd.f32 %v890, %v1054
        %s1056 = sadd.s32 %s396, 84
        %s1057 = sld [smem:[#allocation8 + %s1056]]
        %s1058 = sadd.s32 %s396, 85
        %s1059 = sld [smem:[#allocation8 + %s1058]]
        %s1060 = sadd.s32 %s396, 86
        %s1061 = sld [smem:[#allocation8 + %s1060]]
        %s1062 = sadd.s32 %s396, 87
        %s1063 = sld [smem:[#allocation8 + %s1062]]
        %s1064 = sadd.s32 %s396, 88
        %s1065 = sld [smem:[#allocation8 + %s1064]]
        %s1066 = sadd.s32 %s396, 89
        %s1067 = sld [smem:[#allocation8 + %s1066]]
        %s1068 = sadd.s32 %s396, 90
        %s1069 = sld [smem:[#allocation8 + %s1068]]
        %s1070 = sadd.s32 %s396, 91
        %s1071 = sld [smem:[#allocation8 + %s1070]]
        %s1072 = sadd.s32 %s396, 92
        %s1073 = sld [smem:[#allocation8 + %s1072]]
        %s1074 = sadd.s32 %s396, 93
        %s1075 = sld [smem:[#allocation8 + %s1074]]
        %s1076 = sadd.s32 %s396, 94
        %s1077 = sld [smem:[#allocation8 + %s1076]]
        %s1078 = sadd.s32 %s396, 95
        %s1079 = sld [smem:[#allocation8 + %s1078]]
        %p1080 = scmp.ge.f32.partialorder %s1057, 0.0
        %s1081 = scalar_select %p1080, 1.0, 0.0
        %v1082 = vstv %s1077
        %v1083 = vmin.f32 %v380, %v1082
        %v1084 = vstv %s1073
        %v1085 = vmax.f32 %v376, %v1084
        %v1086 = vsub.f32 %v1083, %v1085
        %v1087 = vmax.f32 %v1086, 0.0
        %v1088 = vstv %s1079
        %v1089 = vmin.f32 %v378, %v1088
        %v1090 = vstv %s1075
        %v1091 = vmax.f32 %v374, %v1090
        %v1092 = vsub.f32 %v1089, %v1091
        %v1093 = vmax.f32 %v1092, 0.0
        %v1094 = vmul.f32 %v1087, %v1093
        %s1095 = ssub.f32 %s1077, %s1073
        %s1096 = ssub.f32 %s1079, %s1075
        %s1097 = smul.f32 %s1095, %s1096
        %v1098 = vstv %s1097
        %v1099 = vadd.f32 %v387, %v1098
        %v1100 = vsub.f32 %v1099, %v1094
        %v1101 = vmax.f32 %v1100, 1e-08
        %v1102 = vrcp.pop %v1101
        %v1103 = vmul.f32 %v1094, %v1102
        %v1104 = vstv %s1061
        %v1105 = vmin.f32 %v380, %v1104
        %v1106 = vstv %s1057
        %v1107 = vmax.f32 %v376, %v1106
        %v1108 = vsub.f32 %v1105, %v1107
        %v1109 = vmax.f32 %v1108, 0.0
        %v1110 = vstv %s1063
        %v1111 = vmin.f32 %v378, %v1110
        %v1112 = vstv %s1059
        %v1113 = vmax.f32 %v374, %v1112
        %v1114 = vsub.f32 %v1111, %v1113
        %v1115 = vmax.f32 %v1114, 0.0
        %v1116 = vmul.f32 %v1109, %v1115
        %s1117 = ssub.f32 %s1061, %s1057
        %s1118 = ssub.f32 %s1063, %s1059
        %s1119 = smul.f32 %s1117, %s1118
        %s1120 = smax.f32 %s1119, 1e-08
        %v1121 = vstv %s1120
        %v1122 = vrcp.pop %v1121
        %v1123 = vmul.f32 %v1116, %v1122
        %v1124 = vstv %s1069
        %v1125 = vmin.f32 %v380, %v1124
        %v1126 = vstv %s1065
        %v1127 = vmax.f32 %v376, %v1126
        %v1128 = vsub.f32 %v1125, %v1127
        %v1129 = vmax.f32 %v1128, 0.0
        %v1130 = vstv %s1071
        %v1131 = vmin.f32 %v378, %v1130
        %v1132 = vstv %s1067
        %v1133 = vmax.f32 %v374, %v1132
        %v1134 = vsub.f32 %v1131, %v1133
        %v1135 = vmax.f32 %v1134, 0.0
        %v1136 = vmul.f32 %v1129, %v1135
        %s1137 = ssub.f32 %s1069, %s1065
        %s1138 = ssub.f32 %s1071, %s1067
        %s1139 = smul.f32 %s1137, %s1138
        %s1140 = smax.f32 %s1139, 1e-08
        %v1141 = vstv %s1140
        %v1142 = vrcp.pop %v1141
        %v1143 = vmul.f32 %v1136, %v1142
        %vm1144 = vcmp.gt.f32.partialorder %v1103, 0.25
        %vm1145 = vcmp.gt.f32.partialorder %v1123, 0.25
        %vm1146 = vmand %vm1144, %vm1145
        %vm1147 = vcmp.gt.f32.partialorder %v1143, 0.25
        %vm1148 = vmand %vm1146, %vm1147
        %v1149 = vstv %s1081
        %v1150 = vsel %vm1148, %v1149, 0.0
        %v1151 = vmul.f32 %v1123, %v1143
        %v1152 = vrsqrt.pop %v1151
        %v1153 = vmul.f32 %v1151, %v1152
        %vm1154 = vcmp.eq.f32.partialorder %v1151, inf
        %v1155 = vsel %vm1154, %v1151, %v1153
        %vm1156 = vcmp.eq.f32.partialorder %v1151, 0.0
        %v1157 = vand.u32 %v1151, 2147483648
        %v1158 = vsel %vm1156, %v1157, %v1155
        %v1159 = vadd.f32 %v1103, %v1158
        %v1160 = vmul.f32 %v1159, 0.5
        %v1161 = vmul.f32 %v1160, %v1150
        %vm1162 = vcmp.gt.f32.partialorder %v1161, %v998
        %v1163 = vsel %vm1162, %v1161, %v998
        %v1164 = vmax.f32 %v999, %v1150
        %v1165 = vsel %vm1162, %v1106, %v1000
        %v1166 = vsel %vm1162, %v1112, %v1001
        %v1167 = vsel %vm1162, %v1104, %v1002
        %v1168 = vsel %vm1162, %v1110, %v1003
        %v1169 = vsel %vm1162, %v1126, %v1004
        %v1170 = vsel %vm1162, %v1132, %v1005
        %v1171 = vsel %vm1162, %v1124, %v1006
        %v1172 = vsel %vm1162, %v1130, %v1007
        %s1173 = sadd.s32 %s396, 97
        %s1174 = sld [smem:[#allocation8 + %s1173]]
        %v1175 = vstv %s1174
        %v1176 = vsel %vm1162, %v1175, %v1011
        %v1177 = vmul.f32 %v1150, %v1175
        %v1178 = vadd.f32 %v1013, %v1177
        %s1179 = sadd.s32 %s396, 98
        %s1180 = sld [smem:[#allocation8 + %s1179]]
        %v1181 = vstv %s1180
        %v1182 = vsel %vm1162, %v1181, %v1017
        %v1183 = vmul.f32 %v1150, %v1181
        %v1184 = vadd.f32 %v1019, %v1183
        %s1185 = sadd.s32 %s396, 99
        %s1186 = sld [smem:[#allocation8 + %s1185]]
        %v1187 = vstv %s1186
        %v1188 = vsel %vm1162, %v1187, %v1023
        %v1189 = vmul.f32 %v1150, %v1187
        %v1190 = vadd.f32 %v1025, %v1189
        %s1191 = sadd.s32 %s396, 100
        %s1192 = sld [smem:[#allocation8 + %s1191]]
        %v1193 = vstv %s1192
        %v1194 = vsel %vm1162, %v1193, %v1029
        %v1195 = vmul.f32 %v1150, %v1193
        %v1196 = vadd.f32 %v1031, %v1195
        %s1197 = sadd.s32 %s396, 101
        %s1198 = sld [smem:[#allocation8 + %s1197]]
        %v1199 = vstv %s1198
        %v1200 = vsel %vm1162, %v1199, %v1035
        %v1201 = vmul.f32 %v1150, %v1199
        %v1202 = vadd.f32 %v1037, %v1201
        %s1203 = sadd.s32 %s396, 102
        %s1204 = sld [smem:[#allocation8 + %s1203]]
        %v1205 = vstv %s1204
        %v1206 = vsel %vm1162, %v1205, %v1041
        %v1207 = vmul.f32 %v1150, %v1205
        %v1208 = vadd.f32 %v1043, %v1207
        %s1209 = sadd.s32 %s396, 103
        %s1210 = sld [smem:[#allocation8 + %s1209]]
        %v1211 = vstv %s1210
        %v1212 = vsel %vm1162, %v1211, %v1047
        %v1213 = vmul.f32 %v1150, %v1211
        %v1214 = vadd.f32 %v1049, %v1213
        %s1215 = sadd.s32 %s396, 104
        %s1216 = sld [smem:[#allocation8 + %s1215]]
        %v1217 = vstv %s1216
        %v1218 = vsel %vm1162, %v1217, %v1053
        %v1219 = vmul.f32 %v1150, %v1217
        %v1220 = vadd.f32 %v1055, %v1219
        %s1221 = sadd.s32 %s396, 105
        %s1222 = sld [smem:[#allocation8 + %s1221]]
        %s1223 = sadd.s32 %s396, 106
        %s1224 = sld [smem:[#allocation8 + %s1223]]
        %s1225 = sadd.s32 %s396, 107
        %s1226 = sld [smem:[#allocation8 + %s1225]]
        %s1227 = sadd.s32 %s396, 108
        %s1228 = sld [smem:[#allocation8 + %s1227]]
        %s1229 = sadd.s32 %s396, 109
        %s1230 = sld [smem:[#allocation8 + %s1229]]
        %s1231 = sadd.s32 %s396, 110
        %s1232 = sld [smem:[#allocation8 + %s1231]]
        %s1233 = sadd.s32 %s396, 111
        %s1234 = sld [smem:[#allocation8 + %s1233]]
        %s1235 = sadd.s32 %s396, 112
        %s1236 = sld [smem:[#allocation8 + %s1235]]
        %s1237 = sadd.s32 %s396, 113
        %s1238 = sld [smem:[#allocation8 + %s1237]]
        %s1239 = sadd.s32 %s396, 114
        %s1240 = sld [smem:[#allocation8 + %s1239]]
        %s1241 = sadd.s32 %s396, 115
        %s1242 = sld [smem:[#allocation8 + %s1241]]
        %s1243 = sadd.s32 %s396, 116
        %s1244 = sld [smem:[#allocation8 + %s1243]]
        %p1245 = scmp.ge.f32.partialorder %s1222, 0.0
        %s1246 = scalar_select %p1245, 1.0, 0.0
        %v1247 = vstv %s1242
        %v1248 = vmin.f32 %v380, %v1247
        %v1249 = vstv %s1238
        %v1250 = vmax.f32 %v376, %v1249
        %v1251 = vsub.f32 %v1248, %v1250
        %v1252 = vmax.f32 %v1251, 0.0
        %v1253 = vstv %s1244
        %v1254 = vmin.f32 %v378, %v1253
        %v1255 = vstv %s1240
        %v1256 = vmax.f32 %v374, %v1255
        %v1257 = vsub.f32 %v1254, %v1256
        %v1258 = vmax.f32 %v1257, 0.0
        %v1259 = vmul.f32 %v1252, %v1258
        %s1260 = ssub.f32 %s1242, %s1238
        %s1261 = ssub.f32 %s1244, %s1240
        %s1262 = smul.f32 %s1260, %s1261
        %v1263 = vstv %s1262
        %v1264 = vadd.f32 %v387, %v1263
        %v1265 = vsub.f32 %v1264, %v1259
        %v1266 = vmax.f32 %v1265, 1e-08
        %v1267 = vrcp.pop %v1266
        %v1268 = vmul.f32 %v1259, %v1267
        %v1269 = vstv %s1226
        %v1270 = vmin.f32 %v380, %v1269
        %v1271 = vstv %s1222
        %v1272 = vmax.f32 %v376, %v1271
        %v1273 = vsub.f32 %v1270, %v1272
        %v1274 = vmax.f32 %v1273, 0.0
        %v1275 = vstv %s1228
        %v1276 = vmin.f32 %v378, %v1275
        %v1277 = vstv %s1224
        %v1278 = vmax.f32 %v374, %v1277
        %v1279 = vsub.f32 %v1276, %v1278
        %v1280 = vmax.f32 %v1279, 0.0
        %v1281 = vmul.f32 %v1274, %v1280
        %s1282 = ssub.f32 %s1226, %s1222
        %s1283 = ssub.f32 %s1228, %s1224
        %s1284 = smul.f32 %s1282, %s1283
        %s1285 = smax.f32 %s1284, 1e-08
        %v1286 = vstv %s1285
        %v1287 = vrcp.pop %v1286
        %v1288 = vmul.f32 %v1281, %v1287
        %v1289 = vstv %s1234
        %v1290 = vmin.f32 %v380, %v1289
        %v1291 = vstv %s1230
        %v1292 = vmax.f32 %v376, %v1291
        %v1293 = vsub.f32 %v1290, %v1292
        %v1294 = vmax.f32 %v1293, 0.0
        %v1295 = vstv %s1236
        %v1296 = vmin.f32 %v378, %v1295
        %v1297 = vstv %s1232
        %v1298 = vmax.f32 %v374, %v1297
        %v1299 = vsub.f32 %v1296, %v1298
        %v1300 = vmax.f32 %v1299, 0.0
        %v1301 = vmul.f32 %v1294, %v1300
        %s1302 = ssub.f32 %s1234, %s1230
        %s1303 = ssub.f32 %s1236, %s1232
        %s1304 = smul.f32 %s1302, %s1303
        %s1305 = smax.f32 %s1304, 1e-08
        %v1306 = vstv %s1305
        %v1307 = vrcp.pop %v1306
        %v1308 = vmul.f32 %v1301, %v1307
        %vm1309 = vcmp.gt.f32.partialorder %v1268, 0.25
        %vm1310 = vcmp.gt.f32.partialorder %v1288, 0.25
        %vm1311 = vmand %vm1309, %vm1310
        %vm1312 = vcmp.gt.f32.partialorder %v1308, 0.25
        %vm1313 = vmand %vm1311, %vm1312
        %v1314 = vstv %s1246
        %v1315 = vsel %vm1313, %v1314, 0.0
        %v1316 = vmul.f32 %v1288, %v1308
        %v1317 = vrsqrt.pop %v1316
        %v1318 = vmul.f32 %v1316, %v1317
        %vm1319 = vcmp.eq.f32.partialorder %v1316, inf
        %v1320 = vsel %vm1319, %v1316, %v1318
        %vm1321 = vcmp.eq.f32.partialorder %v1316, 0.0
        %v1322 = vand.u32 %v1316, 2147483648
        %v1323 = vsel %vm1321, %v1322, %v1320
        %v1324 = vadd.f32 %v1268, %v1323
        %v1325 = vmul.f32 %v1324, 0.5
        %v1326 = vmul.f32 %v1325, %v1315
        %vm1327 = vcmp.gt.f32.partialorder %v1326, %v1163
        %v1328 = vsel %vm1327, %v1326, %v1163
        %v1329 = vmax.f32 %v1164, %v1315
        %v1330 = vsel %vm1327, %v1271, %v1165
        %v1331 = vsel %vm1327, %v1277, %v1166
        %v1332 = vsel %vm1327, %v1269, %v1167
        %v1333 = vsel %vm1327, %v1275, %v1168
        %v1334 = vsel %vm1327, %v1291, %v1169
        %v1335 = vsel %vm1327, %v1297, %v1170
        %v1336 = vsel %vm1327, %v1289, %v1171
        %v1337 = vsel %vm1327, %v1295, %v1172
        %s1338 = sadd.s32 %s396, 118
        %s1339 = sld [smem:[#allocation8 + %s1338]]
        %v1340 = vstv %s1339
        %v1341 = vsel %vm1327, %v1340, %v1176
        %v1342 = vmul.f32 %v1315, %v1340
        %v1343 = vadd.f32 %v1178, %v1342
        %s1344 = sadd.s32 %s396, 119
        %s1345 = sld [smem:[#allocation8 + %s1344]]
        %v1346 = vstv %s1345
        %v1347 = vsel %vm1327, %v1346, %v1182
        %v1348 = vmul.f32 %v1315, %v1346
        %v1349 = vadd.f32 %v1184, %v1348
        %s1350 = sadd.s32 %s396, 120
        %s1351 = sld [smem:[#allocation8 + %s1350]]
        %v1352 = vstv %s1351
        %v1353 = vsel %vm1327, %v1352, %v1188
        %v1354 = vmul.f32 %v1315, %v1352
        %v1355 = vadd.f32 %v1190, %v1354
        %s1356 = sadd.s32 %s396, 121
        %s1357 = sld [smem:[#allocation8 + %s1356]]
        %v1358 = vstv %s1357
        %v1359 = vsel %vm1327, %v1358, %v1194
        %v1360 = vmul.f32 %v1315, %v1358
        %v1361 = vadd.f32 %v1196, %v1360
        %s1362 = sadd.s32 %s396, 122
        %s1363 = sld [smem:[#allocation8 + %s1362]]
        %v1364 = vstv %s1363
        %v1365 = vsel %vm1327, %v1364, %v1200
        %v1366 = vmul.f32 %v1315, %v1364
        %v1367 = vadd.f32 %v1202, %v1366
        %s1368 = sadd.s32 %s396, 123
        %s1369 = sld [smem:[#allocation8 + %s1368]]
        %v1370 = vstv %s1369
        %v1371 = vsel %vm1327, %v1370, %v1206
        %v1372 = vmul.f32 %v1315, %v1370
        %v1373 = vadd.f32 %v1208, %v1372
        %s1374 = sadd.s32 %s396, 124
        %s1375 = sld [smem:[#allocation8 + %s1374]]
        %v1376 = vstv %s1375
        %v1377 = vsel %vm1327, %v1376, %v1212
        %v1378 = vmul.f32 %v1315, %v1376
        %v1379 = vadd.f32 %v1214, %v1378
        %s1380 = sadd.s32 %s396, 125
        %s1381 = sld [smem:[#allocation8 + %s1380]]
        %v1382 = vstv %s1381
        %v1383 = vsel %vm1327, %v1382, %v1218
        %v1384 = vmul.f32 %v1315, %v1382
        %v1385 = vadd.f32 %v1220, %v1384
        %s1386 = sadd.s32 %s396, 126
        %s1387 = sld [smem:[#allocation8 + %s1386]]
        %s1388 = sadd.s32 %s396, 127
        %s1389 = sld [smem:[#allocation8 + %s1388]]
        %s1390 = sadd.s32 %s396, 128
        %s1391 = sld [smem:[#allocation8 + %s1390]]
        %s1392 = sadd.s32 %s396, 129
        %s1393 = sld [smem:[#allocation8 + %s1392]]
        %s1394 = sadd.s32 %s396, 130
        %s1395 = sld [smem:[#allocation8 + %s1394]]
        %s1396 = sadd.s32 %s396, 131
        %s1397 = sld [smem:[#allocation8 + %s1396]]
        %s1398 = sadd.s32 %s396, 132
        %s1399 = sld [smem:[#allocation8 + %s1398]]
        %s1400 = sadd.s32 %s396, 133
        %s1401 = sld [smem:[#allocation8 + %s1400]]
        %s1402 = sadd.s32 %s396, 134
        %s1403 = sld [smem:[#allocation8 + %s1402]]
        %s1404 = sadd.s32 %s396, 135
        %s1405 = sld [smem:[#allocation8 + %s1404]]
        %s1406 = sadd.s32 %s396, 136
        %s1407 = sld [smem:[#allocation8 + %s1406]]
        %s1408 = sadd.s32 %s396, 137
        %s1409 = sld [smem:[#allocation8 + %s1408]]
        %p1410 = scmp.ge.f32.partialorder %s1387, 0.0
        %s1411 = scalar_select %p1410, 1.0, 0.0
        %v1412 = vstv %s1407
        %v1413 = vmin.f32 %v380, %v1412
        %v1414 = vstv %s1403
        %v1415 = vmax.f32 %v376, %v1414
        %v1416 = vsub.f32 %v1413, %v1415
        %v1417 = vmax.f32 %v1416, 0.0
        %v1418 = vstv %s1409
        %v1419 = vmin.f32 %v378, %v1418
        %v1420 = vstv %s1405
        %v1421 = vmax.f32 %v374, %v1420
        %v1422 = vsub.f32 %v1419, %v1421
        %v1423 = vmax.f32 %v1422, 0.0
        %v1424 = vmul.f32 %v1417, %v1423
        %s1425 = ssub.f32 %s1407, %s1403
        %s1426 = ssub.f32 %s1409, %s1405
        %s1427 = smul.f32 %s1425, %s1426
        %v1428 = vstv %s1427
        %v1429 = vadd.f32 %v387, %v1428
        %v1430 = vsub.f32 %v1429, %v1424
        %v1431 = vmax.f32 %v1430, 1e-08
        %v1432 = vrcp.pop %v1431
        %v1433 = vmul.f32 %v1424, %v1432
        %v1434 = vstv %s1391
        %v1435 = vmin.f32 %v380, %v1434
        %v1436 = vstv %s1387
        %v1437 = vmax.f32 %v376, %v1436
        %v1438 = vsub.f32 %v1435, %v1437
        %v1439 = vmax.f32 %v1438, 0.0
        %v1440 = vstv %s1393
        %v1441 = vmin.f32 %v378, %v1440
        %v1442 = vstv %s1389
        %v1443 = vmax.f32 %v374, %v1442
        %v1444 = vsub.f32 %v1441, %v1443
        %v1445 = vmax.f32 %v1444, 0.0
        %v1446 = vmul.f32 %v1439, %v1445
        %s1447 = ssub.f32 %s1391, %s1387
        %s1448 = ssub.f32 %s1393, %s1389
        %s1449 = smul.f32 %s1447, %s1448
        %s1450 = smax.f32 %s1449, 1e-08
        %v1451 = vstv %s1450
        %v1452 = vrcp.pop %v1451
        %v1453 = vmul.f32 %v1446, %v1452
        %v1454 = vstv %s1399
        %v1455 = vmin.f32 %v380, %v1454
        %v1456 = vstv %s1395
        %v1457 = vmax.f32 %v376, %v1456
        %v1458 = vsub.f32 %v1455, %v1457
        %v1459 = vmax.f32 %v1458, 0.0
        %v1460 = vstv %s1401
        %v1461 = vmin.f32 %v378, %v1460
        %v1462 = vstv %s1397
        %v1463 = vmax.f32 %v374, %v1462
        %v1464 = vsub.f32 %v1461, %v1463
        %v1465 = vmax.f32 %v1464, 0.0
        %v1466 = vmul.f32 %v1459, %v1465
        %s1467 = ssub.f32 %s1399, %s1395
        %s1468 = ssub.f32 %s1401, %s1397
        %s1469 = smul.f32 %s1467, %s1468
        %s1470 = smax.f32 %s1469, 1e-08
        %v1471 = vstv %s1470
        %v1472 = vrcp.pop %v1471
        %v1473 = vmul.f32 %v1466, %v1472
        %vm1474 = vcmp.gt.f32.partialorder %v1433, 0.25
        %vm1475 = vcmp.gt.f32.partialorder %v1453, 0.25
        %vm1476 = vmand %vm1474, %vm1475
        %vm1477 = vcmp.gt.f32.partialorder %v1473, 0.25
        %vm1478 = vmand %vm1476, %vm1477
        %v1479 = vstv %s1411
        %v1480 = vsel %vm1478, %v1479, 0.0
        %v1481 = vmul.f32 %v1453, %v1473
        %v1482 = vrsqrt.pop %v1481
        %v1483 = vmul.f32 %v1481, %v1482
        %vm1484 = vcmp.eq.f32.partialorder %v1481, inf
        %v1485 = vsel %vm1484, %v1481, %v1483
        %vm1486 = vcmp.eq.f32.partialorder %v1481, 0.0
        %v1487 = vand.u32 %v1481, 2147483648
        %v1488 = vsel %vm1486, %v1487, %v1485
        %v1489 = vadd.f32 %v1433, %v1488
        %v1490 = vmul.f32 %v1489, 0.5
        %v1491 = vmul.f32 %v1490, %v1480
        %vm1492 = vcmp.gt.f32.partialorder %v1491, %v1328
        %v1493 = vsel %vm1492, %v1491, %v1328
        %v1494 = vmax.f32 %v1329, %v1480
        %v1495 = vsel %vm1492, %v1436, %v1330
        %v1496 = vsel %vm1492, %v1442, %v1331
        %v1497 = vsel %vm1492, %v1434, %v1332
        %v1498 = vsel %vm1492, %v1440, %v1333
        %v1499 = vsel %vm1492, %v1456, %v1334
        %v1500 = vsel %vm1492, %v1462, %v1335
        %v1501 = vsel %vm1492, %v1454, %v1336
        %v1502 = vsel %vm1492, %v1460, %v1337
        %s1503 = sadd.s32 %s396, 139
        %s1504 = sld [smem:[#allocation8 + %s1503]]
        %v1505 = vstv %s1504
        %v1506 = vsel %vm1492, %v1505, %v1341
        %v1507 = vmul.f32 %v1480, %v1505
        %v1508 = vadd.f32 %v1343, %v1507
        %s1509 = sadd.s32 %s396, 140
        %s1510 = sld [smem:[#allocation8 + %s1509]]
        %v1511 = vstv %s1510
        %v1512 = vsel %vm1492, %v1511, %v1347
        %v1513 = vmul.f32 %v1480, %v1511
        %v1514 = vadd.f32 %v1349, %v1513
        %s1515 = sadd.s32 %s396, 141
        %s1516 = sld [smem:[#allocation8 + %s1515]]
        %v1517 = vstv %s1516
        %v1518 = vsel %vm1492, %v1517, %v1353
        %v1519 = vmul.f32 %v1480, %v1517
        %v1520 = vadd.f32 %v1355, %v1519
        %s1521 = sadd.s32 %s396, 142
        %s1522 = sld [smem:[#allocation8 + %s1521]]
        %v1523 = vstv %s1522
        %v1524 = vsel %vm1492, %v1523, %v1359
        %v1525 = vmul.f32 %v1480, %v1523
        %v1526 = vadd.f32 %v1361, %v1525
        %s1527 = sadd.s32 %s396, 143
        %s1528 = sld [smem:[#allocation8 + %s1527]]
        %v1529 = vstv %s1528
        %v1530 = vsel %vm1492, %v1529, %v1365
        %v1531 = vmul.f32 %v1480, %v1529
        %v1532 = vadd.f32 %v1367, %v1531
        %s1533 = sadd.s32 %s396, 144
        %s1534 = sld [smem:[#allocation8 + %s1533]]
        %v1535 = vstv %s1534
        %v1536 = vsel %vm1492, %v1535, %v1371
        %v1537 = vmul.f32 %v1480, %v1535
        %v1538 = vadd.f32 %v1373, %v1537
        %s1539 = sadd.s32 %s396, 145
        %s1540 = sld [smem:[#allocation8 + %s1539]]
        %v1541 = vstv %s1540
        %v1542 = vsel %vm1492, %v1541, %v1377
        %v1543 = vmul.f32 %v1480, %v1541
        %v1544 = vadd.f32 %v1379, %v1543
        %s1545 = sadd.s32 %s396, 146
        %s1546 = sld [smem:[#allocation8 + %s1545]]
        %v1547 = vstv %s1546
        %v1548 = vsel %vm1492, %v1547, %v1383
        %v1549 = vmul.f32 %v1480, %v1547
        %v1550 = vadd.f32 %v1385, %v1549
        %s1551 = sadd.s32 %s396, 147
        %s1552 = sld [smem:[#allocation8 + %s1551]]
        %s1553 = sadd.s32 %s396, 148
        %s1554 = sld [smem:[#allocation8 + %s1553]]
        %s1555 = sadd.s32 %s396, 149
        %s1556 = sld [smem:[#allocation8 + %s1555]]
        %s1557 = sadd.s32 %s396, 150
        %s1558 = sld [smem:[#allocation8 + %s1557]]
        %s1559 = sadd.s32 %s396, 151
        %s1560 = sld [smem:[#allocation8 + %s1559]]
        %s1561 = sadd.s32 %s396, 152
        %s1562 = sld [smem:[#allocation8 + %s1561]]
        %s1563 = sadd.s32 %s396, 153
        %s1564 = sld [smem:[#allocation8 + %s1563]]
        %s1565 = sadd.s32 %s396, 154
        %s1566 = sld [smem:[#allocation8 + %s1565]]
        %s1567 = sadd.s32 %s396, 155
        %s1568 = sld [smem:[#allocation8 + %s1567]]
        %s1569 = sadd.s32 %s396, 156
        %s1570 = sld [smem:[#allocation8 + %s1569]]
        %s1571 = sadd.s32 %s396, 157
        %s1572 = sld [smem:[#allocation8 + %s1571]]
        %s1573 = sadd.s32 %s396, 158
        %s1574 = sld [smem:[#allocation8 + %s1573]]
        %p1575 = scmp.ge.f32.partialorder %s1552, 0.0
        %s1576 = scalar_select %p1575, 1.0, 0.0
        %v1577 = vstv %s1572
        %v1578 = vmin.f32 %v380, %v1577
        %v1579 = vstv %s1568
        %v1580 = vmax.f32 %v376, %v1579
        %v1581 = vsub.f32 %v1578, %v1580
        %v1582 = vmax.f32 %v1581, 0.0
        %v1583 = vstv %s1574
        %v1584 = vmin.f32 %v378, %v1583
        %v1585 = vstv %s1570
        %v1586 = vmax.f32 %v374, %v1585
        %v1587 = vsub.f32 %v1584, %v1586
        %v1588 = vmax.f32 %v1587, 0.0
        %v1589 = vmul.f32 %v1582, %v1588
        %s1590 = ssub.f32 %s1572, %s1568
        %s1591 = ssub.f32 %s1574, %s1570
        %s1592 = smul.f32 %s1590, %s1591
        %v1593 = vstv %s1592
        %v1594 = vadd.f32 %v387, %v1593
        %v1595 = vsub.f32 %v1594, %v1589
        %v1596 = vmax.f32 %v1595, 1e-08
        %v1597 = vrcp.pop %v1596
        %v1598 = vmul.f32 %v1589, %v1597
        %v1599 = vstv %s1556
        %v1600 = vmin.f32 %v380, %v1599
        %v1601 = vstv %s1552
        %v1602 = vmax.f32 %v376, %v1601
        %v1603 = vsub.f32 %v1600, %v1602
        %v1604 = vmax.f32 %v1603, 0.0
        %v1605 = vstv %s1558
        %v1606 = vmin.f32 %v378, %v1605
        %v1607 = vstv %s1554
        %v1608 = vmax.f32 %v374, %v1607
        %v1609 = vsub.f32 %v1606, %v1608
        %v1610 = vmax.f32 %v1609, 0.0
        %v1611 = vmul.f32 %v1604, %v1610
        %s1612 = ssub.f32 %s1556, %s1552
        %s1613 = ssub.f32 %s1558, %s1554
        %s1614 = smul.f32 %s1612, %s1613
        %s1615 = smax.f32 %s1614, 1e-08
        %v1616 = vstv %s1615
        %v1617 = vrcp.pop %v1616
        %v1618 = vmul.f32 %v1611, %v1617
        %v1619 = vstv %s1564
        %v1620 = vmin.f32 %v380, %v1619
        %v1621 = vstv %s1560
        %v1622 = vmax.f32 %v376, %v1621
        %v1623 = vsub.f32 %v1620, %v1622
        %v1624 = vmax.f32 %v1623, 0.0
        %v1625 = vstv %s1566
        %v1626 = vmin.f32 %v378, %v1625
        %v1627 = vstv %s1562
        %v1628 = vmax.f32 %v374, %v1627
        %v1629 = vsub.f32 %v1626, %v1628
        %v1630 = vmax.f32 %v1629, 0.0
        %v1631 = vmul.f32 %v1624, %v1630
        %s1632 = ssub.f32 %s1564, %s1560
        %s1633 = ssub.f32 %s1566, %s1562
        %s1634 = smul.f32 %s1632, %s1633
        %s1635 = smax.f32 %s1634, 1e-08
        %v1636 = vstv %s1635
        %v1637 = vrcp.pop %v1636
        %v1638 = vmul.f32 %v1631, %v1637
        %vm1639 = vcmp.gt.f32.partialorder %v1598, 0.25
        %vm1640 = vcmp.gt.f32.partialorder %v1618, 0.25
        %vm1641 = vmand %vm1639, %vm1640
        %vm1642 = vcmp.gt.f32.partialorder %v1638, 0.25
        %vm1643 = vmand %vm1641, %vm1642
        %v1644 = vstv %s1576
        %v1645 = vsel %vm1643, %v1644, 0.0
        %v1646 = vmul.f32 %v1618, %v1638
        %v1647 = vrsqrt.pop %v1646
        %v1648 = vmul.f32 %v1646, %v1647
        %vm1649 = vcmp.eq.f32.partialorder %v1646, inf
        %v1650 = vsel %vm1649, %v1646, %v1648
        %vm1651 = vcmp.eq.f32.partialorder %v1646, 0.0
        %v1652 = vand.u32 %v1646, 2147483648
        %v1653 = vsel %vm1651, %v1652, %v1650
        %v1654 = vadd.f32 %v1598, %v1653
        %v1655 = vmul.f32 %v1654, 0.5
        %v1656 = vmul.f32 %v1655, %v1645
        %vm1657 = vcmp.gt.f32.partialorder %v1656, %v1493
        %v1658 = vsel %vm1657, %v1656, %v1493
        %v1659 = vmax.f32 %v1494, %v1645
        %v1660 = vsel %vm1657, %v1601, %v1495
        %v1661 = vsel %vm1657, %v1607, %v1496
        %v1662 = vsel %vm1657, %v1599, %v1497
        %v1663 = vsel %vm1657, %v1605, %v1498
        %v1664 = vsel %vm1657, %v1621, %v1499
        %v1665 = vsel %vm1657, %v1627, %v1500
        %v1666 = vsel %vm1657, %v1619, %v1501
        %v1667 = vsel %vm1657, %v1625, %v1502
        %s1668 = sadd.s32 %s396, 160
        %s1669 = sld [smem:[#allocation8 + %s1668]]
        %v1670 = vstv %s1669
        %v1671 = vsel %vm1657, %v1670, %v1506
        %v1672 = vmul.f32 %v1645, %v1670
        %v1673 = vadd.f32 %v1508, %v1672
        %s1674 = sadd.s32 %s396, 161
        %s1675 = sld [smem:[#allocation8 + %s1674]]
        %v1676 = vstv %s1675
        %v1677 = vsel %vm1657, %v1676, %v1512
        %v1678 = vmul.f32 %v1645, %v1676
        %v1679 = vadd.f32 %v1514, %v1678
        %s1680 = sadd.s32 %s396, 162
        %s1681 = sld [smem:[#allocation8 + %s1680]]
        %v1682 = vstv %s1681
        %v1683 = vsel %vm1657, %v1682, %v1518
        %v1684 = vmul.f32 %v1645, %v1682
        %v1685 = vadd.f32 %v1520, %v1684
        %s1686 = sadd.s32 %s396, 163
        %s1687 = sld [smem:[#allocation8 + %s1686]]
        %v1688 = vstv %s1687
        %v1689 = vsel %vm1657, %v1688, %v1524
        %v1690 = vmul.f32 %v1645, %v1688
        %v1691 = vadd.f32 %v1526, %v1690
        %s1692 = sadd.s32 %s396, 164
        %s1693 = sld [smem:[#allocation8 + %s1692]]
        %v1694 = vstv %s1693
        %v1695 = vsel %vm1657, %v1694, %v1530
        %v1696 = vmul.f32 %v1645, %v1694
        %v1697 = vadd.f32 %v1532, %v1696
        %s1698 = sadd.s32 %s396, 165
        %s1699 = sld [smem:[#allocation8 + %s1698]]
        %v1700 = vstv %s1699
        %v1701 = vsel %vm1657, %v1700, %v1536
        %v1702 = vmul.f32 %v1645, %v1700
        %v1703 = vadd.f32 %v1538, %v1702
        %s1704 = sadd.s32 %s396, 166
        %s1705 = sld [smem:[#allocation8 + %s1704]]
        %v1706 = vstv %s1705
        %v1707 = vsel %vm1657, %v1706, %v1542
        %v1708 = vmul.f32 %v1645, %v1706
        %v1709 = vadd.f32 %v1544, %v1708
        %s1710 = sadd.s32 %s396, 167
        %s1711 = sld [smem:[#allocation8 + %s1710]]
        %v1712 = vstv %s1711
        %v1713 = vsel %vm1657, %v1712, %v1548
        %v1714 = vmul.f32 %v1645, %v1712
        %v1715 = vadd.f32 %v1550, %v1714
        %vm1716 = vcmp.gt.f32.partialorder %v1659, 0.0
        %vm1717 = vcmp.ge.f32.partialorder %v1658, 0.1
        %v1718 = vmul.f32 %v1671, 2.0
        %v1719 = vmax.f32 %v1673, 0.0
        %v1720 = vmin.f32 %v1719, 1.0
        %v1721 = vsub.f32 %v1718, %v1720
        %v1722 = vld [vmem:[%s319] sm:$0x1]
        %v1723 = vmax.f32 %v1722, 0.0001
        %v1724 = vmin.f32 %v1723, 0.9999
        %vm1725 = vcmp.eq.f32.partialorder %v1721, 1.0
        %v1726 = vsub.f32 1.0, %v1724
        %v1727 = vsel %vm1725, %v1724, %v1726
        %v1728 = vsel %vm1725, 0.25, 0.75
        %v1729 = vsub.f32 1.0, %v1727
        %v1730 = vmul.f32 %v1728, %v1729
        %v1731 = vmul.f32 %v1730, %v1729
        %v1732 = vlog2.pop %v1727
        %v1733 = vmul.f32 %v1732, 0.6931472
        %v1734 = vsub.f32 0.0, %v1733
        %v1735 = vmul.f32 %v1731, %v1734
        %vm1736 = vcmp.ne.f32.partialorder %v1721, -1.0
        %v1737 = vsel %vm1736, %v1735, 0.0
        %v1738 = vadd.f32 %v1737, 0.0
        %v1739 = vmul.f32 %v1677, 2.0
        %v1740 = vmax.f32 %v1679, 0.0
        %v1741 = vmin.f32 %v1740, 1.0
        %v1742 = vsub.f32 %v1739, %v1741
        %s1743 = scalar_lea.vmem %s319, 1 [#allocation13]
        %v1744 = vld [vmem:[%s1743] sm:$0x1]
        %v1745 = vmax.f32 %v1744, 0.0001
        %v1746 = vmin.f32 %v1745, 0.9999
        %vm1747 = vcmp.eq.f32.partialorder %v1742, 1.0
        %v1748 = vsub.f32 1.0, %v1746
        %v1749 = vsel %vm1747, %v1746, %v1748
        %v1750 = vsel %vm1747, 0.25, 0.75
        %v1751 = vsub.f32 1.0, %v1749
        %v1752 = vmul.f32 %v1750, %v1751
        %v1753 = vmul.f32 %v1752, %v1751
        %v1754 = vlog2.pop %v1749
        %v1755 = vmul.f32 %v1754, 0.6931472
        %v1756 = vsub.f32 0.0, %v1755
        %v1757 = vmul.f32 %v1753, %v1756
        %vm1758 = vcmp.ne.f32.partialorder %v1742, -1.0
        %v1759 = vsel %vm1758, %v1757, 0.0
        %v1760 = vadd.f32 %v1738, %v1759
        %v1761 = vmul.f32 %v1683, 2.0
        %v1762 = vmax.f32 %v1685, 0.0
        %v1763 = vmin.f32 %v1762, 1.0
        %v1764 = vsub.f32 %v1761, %v1763
        %s1765 = scalar_lea.vmem %s319, 2 [#allocation13]
        %v1766 = vld [vmem:[%s1765] sm:$0x1]
        %v1767 = vmax.f32 %v1766, 0.0001
        %v1768 = vmin.f32 %v1767, 0.9999
        %vm1769 = vcmp.eq.f32.partialorder %v1764, 1.0
        %v1770 = vsub.f32 1.0, %v1768
        %v1771 = vsel %vm1769, %v1768, %v1770
        %v1772 = vsel %vm1769, 0.25, 0.75
        %v1773 = vsub.f32 1.0, %v1771
        %v1774 = vmul.f32 %v1772, %v1773
        %v1775 = vmul.f32 %v1774, %v1773
        %v1776 = vlog2.pop %v1771
        %v1777 = vmul.f32 %v1776, 0.6931472
        %v1778 = vsub.f32 0.0, %v1777
        %v1779 = vmul.f32 %v1775, %v1778
        %vm1780 = vcmp.ne.f32.partialorder %v1764, -1.0
        %v1781 = vsel %vm1780, %v1779, 0.0
        %v1782 = vadd.f32 %v1760, %v1781
        %v1783 = vmul.f32 %v1689, 2.0
        %v1784 = vmax.f32 %v1691, 0.0
        %v1785 = vmin.f32 %v1784, 1.0
        %v1786 = vsub.f32 %v1783, %v1785
        %s1787 = scalar_lea.vmem %s319, 3 [#allocation13]
        %v1788 = vld [vmem:[%s1787] sm:$0x1]
        %v1789 = vmax.f32 %v1788, 0.0001
        %v1790 = vmin.f32 %v1789, 0.9999
        %vm1791 = vcmp.eq.f32.partialorder %v1786, 1.0
        %v1792 = vsub.f32 1.0, %v1790
        %v1793 = vsel %vm1791, %v1790, %v1792
        %v1794 = vsel %vm1791, 0.25, 0.75
        %v1795 = vsub.f32 1.0, %v1793
        %v1796 = vmul.f32 %v1794, %v1795
        %v1797 = vmul.f32 %v1796, %v1795
        %v1798 = vlog2.pop %v1793
        %v1799 = vmul.f32 %v1798, 0.6931472
        %v1800 = vsub.f32 0.0, %v1799
        %v1801 = vmul.f32 %v1797, %v1800
        %vm1802 = vcmp.ne.f32.partialorder %v1786, -1.0
        %v1803 = vsel %vm1802, %v1801, 0.0
        %v1804 = vadd.f32 %v1782, %v1803
        %v1805 = vmul.f32 %v1695, 2.0
        %v1806 = vmax.f32 %v1697, 0.0
        %v1807 = vmin.f32 %v1806, 1.0
        %v1808 = vsub.f32 %v1805, %v1807
        %s1809 = scalar_lea.vmem %s319, 4 [#allocation13]
        %v1810 = vld [vmem:[%s1809] sm:$0x1]
        %v1811 = vmax.f32 %v1810, 0.0001
        %v1812 = vmin.f32 %v1811, 0.9999
        %vm1813 = vcmp.eq.f32.partialorder %v1808, 1.0
        %v1814 = vsub.f32 1.0, %v1812
        %v1815 = vsel %vm1813, %v1812, %v1814
        %v1816 = vsel %vm1813, 0.25, 0.75
        %v1817 = vsub.f32 1.0, %v1815
        %v1818 = vmul.f32 %v1816, %v1817
        %v1819 = vmul.f32 %v1818, %v1817
        %v1820 = vlog2.pop %v1815
        %v1821 = vmul.f32 %v1820, 0.6931472
        %v1822 = vsub.f32 0.0, %v1821
        %v1823 = vmul.f32 %v1819, %v1822
        %vm1824 = vcmp.ne.f32.partialorder %v1808, -1.0
        %v1825 = vsel %vm1824, %v1823, 0.0
        %v1826 = vadd.f32 %v1804, %v1825
        %v1827 = vmul.f32 %v1701, 2.0
        %v1828 = vmax.f32 %v1703, 0.0
        %v1829 = vmin.f32 %v1828, 1.0
        %v1830 = vsub.f32 %v1827, %v1829
        %s1831 = scalar_lea.vmem %s319, 5 [#allocation13]
        %v1832 = vld [vmem:[%s1831] sm:$0x1]
        %v1833 = vmax.f32 %v1832, 0.0001
        %v1834 = vmin.f32 %v1833, 0.9999
        %vm1835 = vcmp.eq.f32.partialorder %v1830, 1.0
        %v1836 = vsub.f32 1.0, %v1834
        %v1837 = vsel %vm1835, %v1834, %v1836
        %v1838 = vsel %vm1835, 0.25, 0.75
        %v1839 = vsub.f32 1.0, %v1837
        %v1840 = vmul.f32 %v1838, %v1839
        %v1841 = vmul.f32 %v1840, %v1839
        %v1842 = vlog2.pop %v1837
        %v1843 = vmul.f32 %v1842, 0.6931472
        %v1844 = vsub.f32 0.0, %v1843
        %v1845 = vmul.f32 %v1841, %v1844
        %vm1846 = vcmp.ne.f32.partialorder %v1830, -1.0
        %v1847 = vsel %vm1846, %v1845, 0.0
        %v1848 = vadd.f32 %v1826, %v1847
        %v1849 = vmul.f32 %v1707, 2.0
        %v1850 = vmax.f32 %v1709, 0.0
        %v1851 = vmin.f32 %v1850, 1.0
        %v1852 = vsub.f32 %v1849, %v1851
        %s1853 = scalar_lea.vmem %s319, 6 [#allocation13]
        %v1854 = vld [vmem:[%s1853] sm:$0x1]
        %v1855 = vmax.f32 %v1854, 0.0001
        %v1856 = vmin.f32 %v1855, 0.9999
        %vm1857 = vcmp.eq.f32.partialorder %v1852, 1.0
        %v1858 = vsub.f32 1.0, %v1856
        %v1859 = vsel %vm1857, %v1856, %v1858
        %v1860 = vsel %vm1857, 0.25, 0.75
        %v1861 = vsub.f32 1.0, %v1859
        %v1862 = vmul.f32 %v1860, %v1861
        %v1863 = vmul.f32 %v1862, %v1861
        %v1864 = vlog2.pop %v1859
        %v1865 = vmul.f32 %v1864, 0.6931472
        %v1866 = vsub.f32 0.0, %v1865
        %v1867 = vmul.f32 %v1863, %v1866
        %vm1868 = vcmp.ne.f32.partialorder %v1852, -1.0
        %v1869 = vsel %vm1868, %v1867, 0.0
        %v1870 = vadd.f32 %v1848, %v1869
        %v1871 = vmul.f32 %v1713, 2.0
        %v1872 = vmax.f32 %v1715, 0.0
        %v1873 = vmin.f32 %v1872, 1.0
        %v1874 = vsub.f32 %v1871, %v1873
        %s1875 = scalar_lea.vmem %s319, 7 [#allocation13]
        %v1876 = vld [vmem:[%s1875] sm:$0x1]
        %v1877 = vmax.f32 %v1876, 0.0001
        %v1878 = vmin.f32 %v1877, 0.9999
        %vm1879 = vcmp.eq.f32.partialorder %v1874, 1.0
        %v1880 = vsub.f32 1.0, %v1878
        %v1881 = vsel %vm1879, %v1878, %v1880
        %v1882 = vsel %vm1879, 0.25, 0.75
        %v1883 = vsub.f32 1.0, %v1881
        %v1884 = vmul.f32 %v1882, %v1883
        %v1885 = vmul.f32 %v1884, %v1883
        %v1886 = vlog2.pop %v1881
        %v1887 = vmul.f32 %v1886, 0.6931472
        %v1888 = vsub.f32 0.0, %v1887
        %v1889 = vmul.f32 %v1885, %v1888
        %vm1890 = vcmp.ne.f32.partialorder %v1874, -1.0
        %v1891 = vsel %vm1890, %v1889, 0.0
        %v1892 = vadd.f32 %v1870, %v1891
        %v1893 = vsel %vm1716, %v1892, 0.0
        %v1894 = vsub.f32 %v1662, %v1660
        %v1895 = vsub.f32 %v1663, %v1661
        %v1896 = vsub.f32 %v1666, %v1664
        %v1897 = vsub.f32 %v1667, %v1665
        %v1898 = vmul.f32 %v1894, 0.5
        %v1899 = vadd.f32 %v1660, %v1898
        %v1900 = vmul.f32 %v1895, 0.5
        %v1901 = vadd.f32 %v1661, %v1900
        %v1902 = vmul.f32 %v1896, 0.5
        %v1903 = vadd.f32 %v1664, %v1902
        %v1904 = vmul.f32 %v1897, 0.5
        %v1905 = vadd.f32 %v1665, %v1904
        %v1906 = vmax.f32 %v1894, 1.0
        %v1907 = vlog2.pop %v1906
        %v1908 = vmul.f32 %v1907, 0.6931472
        %v1909 = vmax.f32 %v1895, 1.0
        %v1910 = vlog2.pop %v1909
        %v1911 = vmul.f32 %v1910, 0.6931472
        %v1912 = vmax.f32 %v1896, 1.0
        %v1913 = vlog2.pop %v1912
        %v1914 = vmul.f32 %v1913, 0.6931472
        %v1915 = vmax.f32 %v1897, 1.0
        %v1916 = vlog2.pop %v1915
        %v1917 = vmul.f32 %v1916, 0.6931472
        %v1918 = vld [vmem:[%s328] sm:$0x1]
        %s1919 = scalar_lea.vmem %s328, 1 [#allocation15]
        %v1920 = vld [vmem:[%s1919] sm:$0x1]
        %s1921 = scalar_lea.vmem %s328, 2 [#allocation15]
        %v1922 = vld [vmem:[%s1921] sm:$0x1]
        %s1923 = scalar_lea.vmem %s328, 3 [#allocation15]
        %v1924 = vld [vmem:[%s1923] sm:$0x1]
        %v1925 = vld [vmem:[%s337] sm:$0x1]
        %s1926 = scalar_lea.vmem %s337, 1 [#allocation16]
        %v1927 = vld [vmem:[%s1926] sm:$0x1]
        %s1928 = scalar_lea.vmem %s337, 2 [#allocation16]
        %v1929 = vld [vmem:[%s1928] sm:$0x1]
        %s1930 = scalar_lea.vmem %s337, 3 [#allocation16]
        %v1931 = vld [vmem:[%s1930] sm:$0x1]
        %v1932 = vsub.f32 %v1901, %v386
        %v1933 = vmul.f32 %v1932, %v391
        %v1934 = vsub.f32 %v1933, %v1918
        %v1935 = vand.u32 2147483647, %v1934
        %vm1936 = vcmp.le.f32.partialorder %v1935, 0.11111111
        %v1937 = vmul.f32 %v1935, 4.5
        %v1938 = vmul.f32 %v1937, %v1935
        %v1939 = vsub.f32 %v1935, 0.055555556
        %v1940 = vsel %vm1936, %v1938, %v1939
        %v1941 = vsub.f32 %v1899, %v384
        %v1942 = vmul.f32 %v1941, %v389
        %v1943 = vsub.f32 %v1942, %v1920
        %v1944 = vand.u32 2147483647, %v1943
        %vm1945 = vcmp.le.f32.partialorder %v1944, 0.11111111
        %v1946 = vmul.f32 %v1944, 4.5
        %v1947 = vmul.f32 %v1946, %v1944
        %v1948 = vsub.f32 %v1944, 0.055555556
        %v1949 = vsel %vm1945, %v1947, %v1948
        %v1950 = vadd.f32 %v1940, %v1949
        %v1951 = vsub.f32 %v1911, %v395
        %v1952 = vsub.f32 %v1951, %v1922
        %v1953 = vand.u32 2147483647, %v1952
        %vm1954 = vcmp.le.f32.partialorder %v1953, 0.11111111
        %v1955 = vmul.f32 %v1953, 4.5
        %v1956 = vmul.f32 %v1955, %v1953
        %v1957 = vsub.f32 %v1953, 0.055555556
        %v1958 = vsel %vm1954, %v1956, %v1957
        %v1959 = vadd.f32 %v1950, %v1958
        %v1960 = vsub.f32 %v1908, %v393
        %v1961 = vsub.f32 %v1960, %v1924
        %v1962 = vand.u32 2147483647, %v1961
        %vm1963 = vcmp.le.f32.partialorder %v1962, 0.11111111
        %v1964 = vmul.f32 %v1962, 4.5
        %v1965 = vmul.f32 %v1964, %v1962
        %v1966 = vsub.f32 %v1962, 0.055555556
        %v1967 = vsel %vm1963, %v1965, %v1966
        %v1968 = vadd.f32 %v1959, %v1967
        %v1969 = vsub.f32 %v1905, %v386
        %v1970 = vmul.f32 %v1969, %v391
        %v1971 = vsub.f32 %v1970, %v1925
        %v1972 = vand.u32 2147483647, %v1971
        %vm1973 = vcmp.le.f32.partialorder %v1972, 0.11111111
        %v1974 = vmul.f32 %v1972, 4.5
        %v1975 = vmul.f32 %v1974, %v1972
        %v1976 = vsub.f32 %v1972, 0.055555556
        %v1977 = vsel %vm1973, %v1975, %v1976
        %v1978 = vsub.f32 %v1903, %v384
        %v1979 = vmul.f32 %v1978, %v389
        %v1980 = vsub.f32 %v1979, %v1927
        %v1981 = vand.u32 2147483647, %v1980
        %vm1982 = vcmp.le.f32.partialorder %v1981, 0.11111111
        %v1983 = vmul.f32 %v1981, 4.5
        %v1984 = vmul.f32 %v1983, %v1981
        %v1985 = vsub.f32 %v1981, 0.055555556
        %v1986 = vsel %vm1982, %v1984, %v1985
        %v1987 = vadd.f32 %v1977, %v1986
        %v1988 = vsub.f32 %v1917, %v395
        %v1989 = vsub.f32 %v1988, %v1929
        %v1990 = vand.u32 2147483647, %v1989
        %vm1991 = vcmp.le.f32.partialorder %v1990, 0.11111111
        %v1992 = vmul.f32 %v1990, 4.5
        %v1993 = vmul.f32 %v1992, %v1990
        %v1994 = vsub.f32 %v1990, 0.055555556
        %v1995 = vsel %vm1991, %v1993, %v1994
        %v1996 = vadd.f32 %v1987, %v1995
        %v1997 = vsub.f32 %v1914, %v393
        %v1998 = vsub.f32 %v1997, %v1931
        %v1999 = vand.u32 2147483647, %v1998
        %vm2000 = vcmp.le.f32.partialorder %v1999, 0.11111111
        %v2001 = vmul.f32 %v1999, 4.5
        %v2002 = vmul.f32 %v2001, %v1999
        %v2003 = vsub.f32 %v1999, 0.055555556
        %v2004 = vsel %vm2000, %v2002, %v2003
        %v2005 = vadd.f32 %v1996, %v2004
        %v2006 = vsub.f32 %v1905, %v1901
        %v2007 = vmul.f32 %v2006, %v391
        %v2008 = vsub.f32 %v1925, %v1918
        %v2009 = vsub.f32 %v2007, %v2008
        %v2010 = vand.u32 2147483647, %v2009
        %vm2011 = vcmp.le.f32.partialorder %v2010, 0.11111111
        %v2012 = vmul.f32 %v2010, 4.5
        %v2013 = vmul.f32 %v2012, %v2010
        %v2014 = vsub.f32 %v2010, 0.055555556
        %v2015 = vsel %vm2011, %v2013, %v2014
        %v2016 = vsub.f32 %v1903, %v1899
        %v2017 = vmul.f32 %v2016, %v389
        %v2018 = vsub.f32 %v1927, %v1920
        %v2019 = vsub.f32 %v2017, %v2018
        %v2020 = vand.u32 2147483647, %v2019
        %vm2021 = vcmp.le.f32.partialorder %v2020, 0.11111111
        %v2022 = vmul.f32 %v2020, 4.5
        %v2023 = vmul.f32 %v2022, %v2020
        %v2024 = vsub.f32 %v2020, 0.055555556
        %v2025 = vsel %vm2021, %v2023, %v2024
        %v2026 = vadd.f32 %v2015, %v2025
        %v2027 = vsub.f32 %v1917, %v1911
        %v2028 = vsub.f32 %v1929, %v1922
        %v2029 = vsub.f32 %v2027, %v2028
        %v2030 = vand.u32 2147483647, %v2029
        %vm2031 = vcmp.le.f32.partialorder %v2030, 0.11111111
        %v2032 = vmul.f32 %v2030, 4.5
        %v2033 = vmul.f32 %v2032, %v2030
        %v2034 = vsub.f32 %v2030, 0.055555556
        %v2035 = vsel %vm2031, %v2033, %v2034
        %v2036 = vadd.f32 %v2026, %v2035
        %v2037 = vsub.f32 %v1914, %v1908
        %v2038 = vsub.f32 %v1931, %v1924
        %v2039 = vsub.f32 %v2037, %v2038
        %v2040 = vand.u32 2147483647, %v2039
        %vm2041 = vcmp.le.f32.partialorder %v2040, 0.11111111
        %v2042 = vmul.f32 %v2040, 4.5
        %v2043 = vmul.f32 %v2042, %v2040
        %v2044 = vsub.f32 %v2040, 0.055555556
        %v2045 = vsel %vm2041, %v2043, %v2044
        %v2046 = vadd.f32 %v2036, %v2045
        %p2047 = scmp.eq.s32.totalorder %s32, 0
        // Predicated region
        $region61: #{tpu_custom_call.1} parent=39 // pred_check
          %p2048 = pneg %p2047
        $region62: #{tpu_custom_call.1} parent=39 // pred_check_branch
          %2050 = sbr.rel (%p2048) target = $region64
        $region63: #{tpu_custom_call.1} parent=39 // pred_region
          %2051 = vst [vmem:[#allocation2] sm:$0x1] 0.0
          %2052 = vst [vmem:[#allocation3] sm:$0x1] 0.0
          %2053 = vst [vmem:[#allocation4] sm:$0x1] 0.0
          %2054 = vst [vmem:[#allocation5] sm:$0x1] 0.0
          %2055 = vst [vmem:[#allocation6] sm:$0x1] 0.0
          %2056 = vst [vmem:[#allocation7] sm:$0x1] 0.0
        $region64: #{tpu_custom_call.1} parent=39 // pred_fallthru
          _
        %v2057 = vld [vmem:[#allocation2] sm:$0x1]
        %v2058 = vadd.f32 %v2057, %v1893
        %2059 = vst [vmem:[#allocation2] sm:$0x1] %v2058
        %v2060 = vld [vmem:[#allocation3] sm:$0x1]
        %v2061 = vsel %vm1716, 1, 0
        %v2062 = vcvt.s32.f32 %v2061
        %v2063 = vadd.f32 %v2060, %v2062
        %2064 = vst [vmem:[#allocation3] sm:$0x1] %v2063
        %v2065 = vld [vmem:[#allocation4] sm:$0x1]
        %v2066 = vsel %vm1717, 1, 0
        %v2067 = vcvt.s32.f32 %v2066
        %v2068 = vadd.f32 %v2065, %v2067
        %2069 = vst [vmem:[#allocation4] sm:$0x1] %v2068
        %v2070 = vld [vmem:[#allocation5] sm:$0x1]
        %v2071 = vsel %vm1717, %v1968, 0.0
        %v2072 = vadd.f32 %v2070, %v2071
        %2073 = vst [vmem:[#allocation5] sm:$0x1] %v2072
        %v2074 = vld [vmem:[#allocation6] sm:$0x1]
        %v2075 = vsel %vm1717, %v2005, 0.0
        %v2076 = vadd.f32 %v2074, %v2075
        %2077 = vst [vmem:[#allocation6] sm:$0x1] %v2076
        %v2078 = vld [vmem:[#allocation7] sm:$0x1]
        %v2079 = vsel %vm1717, %v2046, 0.0
        %v2080 = vadd.f32 %v2078, %v2079
        %2081 = vst [vmem:[#allocation7] sm:$0x1] %v2080
        // Predicated region
        $region65: #{tpu_custom_call.1} parent=39 // pred_check
          %p2082 = pneg %p2047
        $region66: #{tpu_custom_call.1} parent=39 // pred_check_branch
          %2084 = sbr.rel (%p2082) target = $region68
        $region67: #{tpu_custom_call.1} parent=39 // pred_region
          %v2085 = vld [vmem:[#allocation3] sm:$0x1]
          %vm2086 = vcmask 1040384
          %v2087 = vsel %vm2086, %v2085, 0.0
          %2088 = vadd.xlane.f32.xlu0 %v2087
          %v2089 = vpop.xlane.xlu0 %2088
          %v2090 = vadd.f32 %v2089, 0.0
          %v2091 = vld [vmem:[#allocation4] sm:$0x1]
          %v2092 = vsel %vm2086, %v2091, 0.0
          %2093 = vadd.xlane.f32.xlu0 %v2092
          %v2094 = vpop.xlane.xlu0 %2093
          %v2095 = vadd.f32 %v2094, 0.0
          %v2096 = vld [vmem:[#allocation2] sm:$0x1]
          %v2097 = vsel %vm2086, %v2096, 0.0
          %2098 = vadd.xlane.f32.xlu0 %v2097
          %v2099 = vpop.xlane.xlu0 %2098
          %v2100 = vadd.f32 %v2099, 0.0
          %v2101 = vmax.f32 %v2090, 1.0
          %v2102 = vrcp.pop %v2101
          %v2103 = vmul.f32 %v2100, %v2102
          %vm2104 = vcmp.gt.f32.partialorder %v2095, 0.0
          %v2105 = vmax.f32 %v2095, 1.0
          %v2106 = vmul.f32 %v2105, 4.0
          %v2107 = vld [vmem:[#allocation5] sm:$0x1]
          %v2108 = vsel %vm2086, %v2107, 0.0
          %2109 = vadd.xlane.f32.xlu0 %v2108
          %v2110 = vpop.xlane.xlu0 %2109
          %v2111 = vadd.f32 %v2110, 0.0
          %v2112 = vrcp.pop %v2106
          %v2113 = vmul.f32 %v2111, %v2112
          %v2114 = vsel %vm2104, %v2113, 0.0
          %v2115 = vld [vmem:[#allocation6] sm:$0x1]
          %v2116 = vsel %vm2086, %v2115, 0.0
          %2117 = vadd.xlane.f32.xlu0 %v2116
          %v2118 = vpop.xlane.xlu0 %2117
          %v2119 = vadd.f32 %v2118, 0.0
          %v2120 = vmul.f32 %v2119, %v2112
          %v2121 = vsel %vm2104, %v2120, 0.0
          %v2122 = vld [vmem:[#allocation7] sm:$0x1]
          %v2123 = vsel %vm2086, %v2122, 0.0
          %2124 = vadd.xlane.f32.xlu0 %v2123
          %v2125 = vpop.xlane.xlu0 %2124
          %v2126 = vadd.f32 %v2125, 0.0
          %v2127 = vmul.f32 %v2126, %v2112
          %v2128 = vsel %vm2104, %v2127, 0.0
          %v2129 = vlaneseq
          %v2130 = vand.u32 %v2129, 127
          %vm2131 = vcmp.eq.s32.totalorder %v2130, 0
          %vm2132 = vcmp.eq.s32.totalorder %v2130, 1
          %vm2133 = vcmp.eq.s32.totalorder %v2130, 2
          %v2134 = vsel %vm2133, %v2121, %v2128
          %v2135 = vsel %vm2132, %v2114, %v2134
          %v2136 = vsel %vm2131, %v2103, %v2135
          %vm2137 = vcmask 24576
          %2138 = vst.msk [vmem:[%s373] sm:$0x1] %vm2137, %v2136
        $region68: #{tpu_custom_call.1} parent=39 // pred_fallthru
          _
        %s2139 = sand.u32 %s178, 1
        %s2140 = scalar_lea.sflag [#allocation10], %s2139
        %s2141 = sand.u32 %s178, 1
        %s2142 = scalar_lea.vmem [#allocation18], %s2141
        // Predicated region
        $region69: #{tpu_custom_call.1} parent=39 // pred_check
          %p2143 = pneg %p188
        $region70: #{tpu_custom_call.1} parent=39 // pred_check_branch
          %2145 = sbr.rel (%p2143) target = $region72
        $region71: #{tpu_custom_call.1} parent=39 // pred_region
          %s2147 = ssub.s32 16, 16
          %2148 = vsyncadd %s2140, %s2147
          %s2149 = smul.addr %s31, 16
          %s2150 = scalar_lea.hbm %s5, %s2149
          %s2152 = sshll.u32 %s2142, 4
          %s2153 = int_to_ptr.vmem [resolvable:$true] %s2152
          %2155 = dma.vmem_to_hbm [thread:$0]  %s2153, 16, %s2150, %s2140
        $region72: #{tpu_custom_call.1} parent=39 // pred_fallthru
          _
      $region40: #{tpu_custom_call.1} parent=5 // pred_fallthru
        _
      %p2156 = scmp.le.s32.totalorder 2, %s22
      // Predicated region
      $region73: #{tpu_custom_call.1} parent=5 // pred_check
        %p2157 = pneg %p2156
      $region74: #{tpu_custom_call.1} parent=5 // pred_check_branch
        %2159 = sbr.rel (%p2157) target = $region76
      $region75: #{tpu_custom_call.1} parent=5 // pred_region
        %s2160 = ssub.s32 %s22, 2
        // Predicated region
        $region77: #{tpu_custom_call.1} parent=75 // pred_check
          %p2161 = pneg %p194
        $region78: #{tpu_custom_call.1} parent=75 // pred_check_branch
          %2163 = sbr.rel (%p2161) target = $region80
        $region79: #{tpu_custom_call.1} parent=75 // pred_region
          %s2164 = sand.u32 %s179, 1
          %s2165 = scalar_lea.sflag [#allocation10], %s2164
          %s2166 = sand.u32 %s179, 1
          %s2167 = scalar_lea.vmem [#allocation18], %s2166
          %2168 = dma.done %s2165, 16
        $region80: #{tpu_custom_call.1} parent=75 // pred_fallthru
          _
      $region76: #{tpu_custom_call.1} parent=5 // pred_fallthru
        _
    $region6: #{tpu_custom_call.1} parent=1 // loop_footer
      %s26 = sadd.s32 1, %s22
    $region7: #{tpu_custom_call.1} parent=1 // loop_footer_branch
      %21 = sbr.rel target = $region3
    $region8: #{tpu_custom_call.1} parent=1 // loop_exit
      _
    %2169 = vsyncpa [#allocation9], 1
    %s2170 = scalar_lea.sflag [#allocation9], 1
    %2171 = vsyncpa %s2170, 1
    %2172 = vsyncpa [#allocation14], 1
    %s2173 = scalar_lea.sflag [#allocation14], 1
    %2174 = vsyncpa %s2173, 1
    %2175 = vsyncpa [#allocation17], 1
    %s2176 = scalar_lea.sflag [#allocation17], 1
    %2177 = vsyncpa %s2176, 1
    %2178 = vsyncpa [#allocation10], 1
    %s2179 = scalar_lea.sflag [#allocation10], 1
    %2180 = vsyncpa %s2179, 1
    %2181 = vsyncpa [#allocation11], 1
    %s2182 = scalar_lea.sflag [#allocation11], 1
    %2183 = vsyncpa %s2182, 1

</llo_original>
